<compile_context>
chip_gen: v6e
topology: v6e:2x2x1
jax: 0.10.0
libtpu: 0.0.40
codegen_flags: <defaults>
</compile_context>

<pallas_src>
import functools

import jax
import jax.numpy as jnp
from jax import lax
from jax.experimental import pallas as pl
from jax.experimental.pallas import tpu as pltpu


def _round_up(x, m):
    return (x + m - 1) // m * m


def _cdiv(a, b):
    return -(-a // b)


# ---------------------------------------------------------------------------
# Pallas kernel: kh MXU dots over the kw-folded input + scale/bias + LeakyReLU
# ---------------------------------------------------------------------------
def _conv_fold_kernel(x_ref, w_ref, s_ref, b_ref, o_ref, acc_ref, *,
                      kh, wq_pad, tile_m, cout_store, apply_act):
    # x_ref:   (1, R_fold, K)       bf16  row-flattened, kw-folded padded input
    # w_ref:   (kh, K, cout_pad)    bf16  folded weights (un-scaled)
    # s_ref:   (1, cout_pad)        f32   BN scale (ones when no BN)
    # b_ref:   (1, cout_pad)        f32   (conv_bias - mean)*scale + beta
    # o_ref:   (1, tile_m, cout_store)
    # acc_ref: (tile_m, cout_pad)   f32   VMEM scratch accumulator
    j = pl.program_id(1)
    base = j * tile_m
    for di in range(kh):
        off = pl.multiple_of(base + di * wq_pad, 16)     # sublane-aligned start
        xm = x_ref[0, pl.ds(off, tile_m), :]             # (tile_m, K) bf16
        d = jnp.dot(xm, w_ref[di], preferred_element_type=jnp.float32)
        if di == 0:
            acc_ref[...] = d
        else:
            acc_ref[...] += d                            # MRB in-place on v7x
    out = acc_ref[...] * s_ref[...] + b_ref[...]         # f32 epilogue
    if apply_act:
        out = jnp.maximum(out, 0.2 * out)                # LeakyReLU(0.2)
    if cout_store != out.shape[-1]:
        out = out[:, :cout_store]                        # narrow (head) store
    o_ref[0] = out.astype(o_ref.dtype)


# ---------------------------------------------------------------------------
# Host-side glue (pure layout work)
# ---------------------------------------------------------------------------
def _space_to_depth2(x):
    # (N, H, W, C) -> (N, H//2, W//2, 4*C); channel index = (2*a + b)*C + c
    n, h, w, c = x.shape
    x = x.reshape(n, h // 2, 2, w // 2, 2, c)
    x = jnp.transpose(x, (0, 1, 3, 2, 4, 5))
    return x.reshape(n, h // 2, w // 2, 4 * c)


def conv2d_bn_lrelu(x_nhwc, weight, scale, bias, *, stride, apply_act, out_dtype):
    """4x4 conv (pad=1, stride 1/2) + BN affine + optional LeakyReLU(0.2).

    x_nhwc: (N,H,W,Cin); weight: (Cout,Cin,4,4) (PyTorch layout);
    scale/bias: (Cout,) f32, applied in the kernel's f32 epilogue.
    Returns (N,Hout,Wout,Cout).
    """
    N, H, W, cin = x_nhwc.shape
    cout = weight.shape[0]
    hout = (H + 2 - 4) // stride + 1
    wout = (W + 2 - 4) // stride + 1

    cout_pad = _round_up(cout, 128)                     # MXU / epilogue width
    cout_al = _round_up(cout, 8)
    # Narrow store only when the 128-pad inflates HBM writeback >= 4x.
    cout_store = cout_al if cout_pad >= 4 * cout_al else cout_pad

    # Channel padding chosen so the folded contraction K is a multiple of 128.
    cin_pad = _round_up(cin, 16) if stride == 2 else _round_up(cin, 32)

    # --- input: spatial pad, (stride2) space-to-depth, width pad, kw-fold ----
    xp = jnp.pad(x_nhwc.astype(jnp.bfloat16),
                 ((0, 0), (1, 1), (1, 1), (0, cin_pad - cin)))

    # Weight (Cout,Cin,4,4) -> (Ki,Kj,Cin,Cout), pad channels (no BN-scale fold).
    whw = jnp.transpose(weight, (2, 3, 1, 0))
    whw = jnp.pad(whw, ((0, 0), (0, 0), (0, cin_pad - cin), (0, cout_pad - cout)))

    if stride == 2:
        # stride-2 4x4 conv == stride-1 2x2 conv on the space-to-depth(2) input.
        hp, wp = xp.shape[1], xp.shape[2]
        xp = jnp.pad(xp, ((0, 0), (0, hp % 2), (0, wp % 2), (0, 0)))
        xq = _space_to_depth2(xp)                       # (N,Hq,Wq,4*cin_pad)
        w6 = whw.reshape(2, 2, 2, 2, cin_pad, cout_pad)   # (di,a,dj,b,c,o)
        w4 = jnp.transpose(w6, (0, 2, 1, 3, 4, 5))        # (di,dj,a,b,c,o)
        kh = kw = 2
        ceff = 4 * cin_pad
        wfold = w4.reshape(kh, kw * ceff, cout_pad)
    else:
        xq = xp
        kh = kw = 4
        ceff = cin_pad
        wfold = whw.reshape(kh, kw * ceff, cout_pad)

    hq, wq = xq.shape[1], xq.shape[2]
    wq_pad = _round_up(wq, 16)                          # aligned row pitch
    xq = jnp.pad(xq, ((0, 0), (0, 0), (0, wq_pad - wq), (0, 0)))

    # Output-row tiling (second, parallel grid axis).
    th = max(1, min(hout, max(1, 1024 // wq_pad)))      # output rows per tile
    if hout >= 2:
        th = min(th, _cdiv(hout, 2))                    # >=2 row tiles if possible
    n_row_tiles = _cdiv(hout, th)
    hout_pad = n_row_tiles * th
    tile_m = th * wq_pad                                # multiple of 16

    K = kw * ceff
    r_fold = (hout_pad + kh - 1) * wq_pad               # rows the kernel reads
    r_src = r_fold + (kw - 1)                           # rows the fold reads

    xflat = xq.reshape(N, hq * wq_pad, ceff)
    pad_rows = max(0, r_src - hq * wq_pad)
    if pad_rows:
        xflat = jnp.pad(xflat, ((0, 0), (0, pad_rows), (0, 0)))
    # Fold the kw horizontal taps into the contraction dim (shift + concat).
    # TODO(synk): writing the next layer's folded layout directly from the
    # kernel epilogue would remove this (XLA-fused) HBM re-layout pass.
    xfold = jnp.concatenate(
        [xflat[:, dj:dj + r_fold, :] for dj in range(kw)], axis=-1)

    wfold = wfold.astype(jnp.bfloat16)
    svec = jnp.pad(scale, (0, cout_pad - cout)).reshape(1, cout_pad).astype(jnp.float32)
    bvec = jnp.pad(bias, (0, cout_pad - cout)).reshape(1, cout_pad).astype(jnp.float32)

    out_itemsize = jnp.dtype(out_dtype).itemsize
    cost = pl.CostEstimate(
        flops=2 * N * n_row_tiles * tile_m * K * cout_pad * kh,
        transcendentals=0,
        bytes_accessed=(N * r_fold * K * 2 + kh * K * cout_pad * 2
                        + 2 * cout_pad * 4
                        + N * hout_pad * wq_pad * cout_store * out_itemsize))

    # VMEM budget from the actual (double-buffered) blocks + f32 scratch,
    # with headroom; never a flat 64 MiB request (v7x has only 64 MiB physical).
    block_bytes = (2 * r_fold * K * 2                     # x block (bf16)
                   + 2 * kh * K * cout_pad * 2            # weights (bf16)
                   + 2 * 2 * cout_pad * 4 * 2             # scale + bias (f32)
                   + 2 * tile_m * cout_store * out_itemsize
                   + tile_m * cout_pad * 4)               # accumulator scratch
    vmem_limit = int(min(100 * 2 ** 20, max(32 * 2 ** 20, block_bytes + (8 << 20))))

    out = pl.pallas_call(
        functools.partial(_conv_fold_kernel, kh=kh, wq_pad=wq_pad, tile_m=tile_m,
                          cout_store=cout_store, apply_act=apply_act),
        out_shape=jax.ShapeDtypeStruct((N, hout_pad * wq_pad, cout_store), out_dtype),
        grid_spec=pltpu.PrefetchScalarGridSpec(
            num_scalar_prefetch=0,
            grid=(N, n_row_tiles),
            in_specs=[
                # Whole folded image per batch element; constant over the
                # row-tile axis -> fetched once per n and kept resident.
                pl.BlockSpec((1, r_fold, K), lambda n, j: (n, 0, 0)),
                # Grid-invariant weight / scale / bias blocks.
                pl.BlockSpec((kh, K, cout_pad), lambda n, j: (0, 0, 0)),
                pl.BlockSpec((1, cout_pad), lambda n, j: (0, 0)),
                pl.BlockSpec((1, cout_pad), lambda n, j: (0, 0)),
            ],
            out_specs=pl.BlockSpec((1, tile_m, cout_store), lambda n, j: (n, j, 0)),
            scratch_shapes=[pltpu.VMEM((tile_m, cout_pad), jnp.float32)],
        ),
        compiler_params=pltpu.CompilerParams(
            dimension_semantics=("parallel", "parallel"),
            vmem_limit_bytes=vmem_limit,
        ),
        cost_estimate=cost,
    )(xfold, wfold, svec, bvec)

    # Drop garbage rows/columns and channel padding (tiny host-side slice).
    out = out.reshape(N, hout_pad, wq_pad, cout_store)[:, :hout, :wout, :cout]
    return out


# ---------------------------------------------------------------------------
# Model definition (mirrors PatchDiscriminator.__init__)
# ---------------------------------------------------------------------------
def build_layer_cfgs(input_channels, n_down, num_filters):
    cfgs = [dict(cin=input_channels, cout=num_filters, stride=2, bn=False, act=True)]
    nf_mult = 1
    for n in range(1, n_down):
        nf_mult_prev = nf_mult
        nf_mult = min(2 ** n, 8)
        cfgs.append(dict(cin=num_filters * nf_mult_prev, cout=num_filters * nf_mult,
                         stride=2, bn=True, act=True))
    nf_mult_prev = nf_mult
    nf_mult = min(2 ** n_down, 8)
    cfgs.append(dict(cin=num_filters * nf_mult_prev, cout=num_filters * nf_mult,
                     stride=1, bn=True, act=True))
    cfgs.append(dict(cin=num_filters * nf_mult, cout=1, stride=1, bn=False, act=False))
    return cfgs


def init_params(key, cfgs):
    params = []
    for cfg in cfgs:
        key, kw_, kb, kg, kbe, km, kv = jax.random.split(key, 7)
        cin, cout = cfg["cin"], cfg["cout"]
        p = dict(
            # PyTorch conv weight layout (Cout, Cin, kh, kw)
            weight=0.02 * jax.random.normal(kw_, (cout, cin, 4, 4), jnp.float32),
            bias=0.01 * jax.random.normal(kb, (cout,), jnp.float32),
        )
        if cfg["bn"]:
            p["gamma"] = 1.0 + 0.1 * jax.random.normal(kg, (cout,), jnp.float32)
            p["beta"] = 0.1 * jax.random.normal(kbe, (cout,), jnp.float32)
            p["running_mean"] = 0.05 * jax.random.normal(km, (cout,), jnp.float32)
            p["running_var"] = 1.0 + 0.1 * jax.nn.softplus(
                jax.random.normal(kv, (cout,), jnp.float32))
        params.append(p)
    return params


def patch_discriminator_forward(x_nchw, cfgs, params, eps=1e-5):
    """Eval-mode forward: Dropout == identity, BatchNorm uses running stats."""
    # TODO(synk): training-mode dropout / batch-statistics BN not reproduced
    # (stochastic / mode-dependent); this matches model.eval() semantics.
    x = jnp.transpose(x_nchw, (0, 2, 3, 1))   # NCHW -> NHWC
    for idx, (cfg, p) in enumerate(zip(cfgs, params)):
        if cfg["bn"]:
            scale = p["gamma"] / jnp.sqrt(p["running_var"] + eps)
            bias = (p["bias"] - p["running_mean"]) * scale + p["beta"]
        else:
            scale = jnp.ones((cfg["cout"],), jnp.float32)
            bias = p["bias"]
        out_dtype = jnp.float32 if idx == len(cfgs) - 1 else jnp.bfloat16
        x = conv2d_bn_lrelu(x, p["weight"], scale, bias,
                            stride=cfg["stride"], apply_act=cfg["act"],
                            out_dtype=out_dtype)
    return jnp.transpose(x, (0, 3, 1, 2))     # NHWC -> NCHW


# ---------------------------------------------------------------------------
# Plain-JAX reference (for numerical sanity check only)
# ---------------------------------------------------------------------------
def reference_forward(x_nchw, cfgs, params, eps=1e-5):
    x = x_nchw
    for cfg, p in zip(cfgs, params):
        x = lax.conv_general_dilated(
            x, p["weight"], window_strides=(cfg["stride"], cfg["stride"]),
            padding=((1, 1), (1, 1)),
            dimension_numbers=("NCHW", "OIHW", "NCHW"))
        x = x + p["bias"][None, :, None, None]
        if cfg["bn"]:
            inv = p["gamma"] / jnp.sqrt(p["running_var"] + eps)
            x = (x - p["running_mean"][None, :, None, None]) * inv[None, :, None, None] \
                + p["beta"][None, :, None, None]
        if cfg["act"]:
            x = jnp.where(x > 0, x, 0.2 * x)
    return x


# ---------------------------------------------------------------------------
if __name__ == "__main__":
    # Small, module-consistent config: input_channels=6 (module default),
    # n_down=3, num_filters=8, batch=2, spatial=32x32.
    input_channels, n_down, num_filters = 6, 3, 8
    cfgs = build_layer_cfgs(input_channels, n_down, num_filters)

    key = jax.random.PRNGKey(0)
    key, kx = jax.random.split(key)
    x = jax.random.normal(kx, (2, input_channels, 32, 32), jnp.float32)  # NCHW
    params = init_params(key, cfgs)

    fwd = jax.jit(lambda xx: patch_discriminator_forward(xx, cfgs, params))
    y = fwd(x)
    jax.block_until_ready(y)

    # Spatial: 32 -> 16 -> 8 -> 4 -> 3 -> 2 ; final channels = 1.
    assert y.shape == (2, 1, 2, 2), y.shape
    assert bool(jnp.all(jnp.isfinite(y)))

    # Numerical sanity check vs. a plain-JAX reference (bf16-MXU tolerance).
    y_ref = reference_forward(x, cfgs, params)
    assert float(jnp.max(jnp.abs(y - y_ref))) < 3e-2

    print("KERNEL_OK")
</pallas_src>

<mosaic_0001>
module attributes {stable_mosaic.version = 11 : i64} {
  func.func @_conv_fold_kernel(%arg0: i32, %arg1: i32, %arg2: memref<1x544x128xbf16, #tpu.memory_space<vmem>>, %arg3: memref<2x128x128xbf16, #tpu.memory_space<vmem>>, %arg4: memref<1x128xf32, #tpu.memory_space<vmem>>, %arg5: memref<1x128xf32, #tpu.memory_space<vmem>>, %arg6: memref<1x256x8xbf16, #tpu.memory_space<vmem>>, %arg7: memref<256x128xf32, #tpu.memory_space<vmem>>) attributes {dimension_semantics = [#tpu.dimension_semantics<parallel>, #tpu.dimension_semantics<parallel>], iteration_bounds = array<i64: 2, 2>, scalar_prefetch = 0 : i64, scratch_operands = 1 : i64, tpu.core_type = #tpu.core_type<tc>, window_params = [{transform_indices = @transform_0, window_bounds = array<i64: 1, 544, 128>}, {pipeline_mode = #tpu.pipeline_mode<synchronous>, transform_indices = @transform_1, window_bounds = array<i64: 2, 128, 128>}, {pipeline_mode = #tpu.pipeline_mode<synchronous>, transform_indices = @transform_2, window_bounds = array<i64: 1, 128>}, {pipeline_mode = #tpu.pipeline_mode<synchronous>, transform_indices = @transform_3, window_bounds = array<i64: 1, 128>}, {transform_indices = @transform_4, window_bounds = array<i64: 1, 256, 8>}]} {
    %c256_i32 = arith.constant 256 : i32
    %0 = arith.muli %arg1, %c256_i32 : i32
    %c0_i32 = arith.constant 0 : i32
    %1 = arith.addi %0, %c0_i32 : i32
    %2 = tpu.assume_multiple %1, 16 : i32
    %c0 = arith.constant 0 : index
    %3 = arith.index_cast %2 : i32 to index
    %c0_0 = arith.constant 0 : index
    %4 = vector.load %arg2[%c0, %3, %c0_0] : memref<1x544x128xbf16, #tpu.memory_space<vmem>>, vector<1x256x128xbf16>
    %5 = vector.shape_cast %4 : vector<1x256x128xbf16> to vector<256x128xbf16>
    %c0_1 = arith.constant 0 : index
    %c0_2 = arith.constant 0 : index
    %c0_3 = arith.constant 0 : index
    %6 = vector.load %arg3[%c0_1, %c0_2, %c0_3] : memref<2x128x128xbf16, #tpu.memory_space<vmem>>, vector<1x128x128xbf16>
    %7 = vector.shape_cast %6 : vector<1x128x128xbf16> to vector<128x128xbf16>
    %cst = arith.constant dense<0.000000e+00> : vector<256x128xf32>
    %8 = tpu.matmul %5, %7, %cst {dimension_numbers = #tpu.dot_dimension_numbers<[1], [0], [0], [1], [0, 0, 1, 1], [], []>} : vector<256x128xbf16>, vector<128x128xbf16>, vector<256x128xf32> -> vector<256x128xf32>
    %c0_4 = arith.constant 0 : index
    %c0_5 = arith.constant 0 : index
    %9 = vector.load %arg7[%c0_4, %c0_5] : memref<256x128xf32, #tpu.memory_space<vmem>>, vector<256x128xf32>
    tpu.vector_store %arg7[%c0_4, %c0_5], %8 {strides = array<i32>} : memref<256x128xf32, #tpu.memory_space<vmem>>, vector<256x128xf32>,
    %c32_i32 = arith.constant 32 : i32
    %10 = arith.addi %0, %c32_i32 : i32
    %11 = tpu.assume_multiple %10, 16 : i32
    %c0_6 = arith.constant 0 : index
    %12 = arith.index_cast %11 : i32 to index
    %c0_7 = arith.constant 0 : index
    %13 = vector.load %arg2[%c0_6, %12, %c0_7] : memref<1x544x128xbf16, #tpu.memory_space<vmem>>, vector<1x256x128xbf16>
    %14 = vector.shape_cast %13 : vector<1x256x128xbf16> to vector<256x128xbf16>
    %c1 = arith.constant 1 : index
    %c0_8 = arith.constant 0 : index
    %c0_9 = arith.constant 0 : index
    %15 = vector.load %arg3[%c1, %c0_8, %c0_9] : memref<2x128x128xbf16, #tpu.memory_space<vmem>>, vector<1x128x128xbf16>
    %16 = vector.shape_cast %15 : vector<1x128x128xbf16> to vector<128x128xbf16>
    %cst_10 = arith.constant dense<0.000000e+00> : vector<256x128xf32>
    %17 = tpu.matmul %14, %16, %cst_10 {dimension_numbers = #tpu.dot_dimension_numbers<[1], [0], [0], [1], [0, 0, 1, 1], [], []>} : vector<256x128xbf16>, vector<128x128xbf16>, vector<256x128xf32> -> vector<256x128xf32>
    %c0_11 = arith.constant 0 : index
    %c0_12 = arith.constant 0 : index
    %18 = vector.load %arg7[%c0_11, %c0_12] : memref<256x128xf32, #tpu.memory_space<vmem>>, vector<256x128xf32>
    %19 = arith.addf %18, %17 : vector<256x128xf32>
    %c0_13 = arith.constant 0 : index
    %c0_14 = arith.constant 0 : index
    %20 = vector.load %arg7[%c0_13, %c0_14] : memref<256x128xf32, #tpu.memory_space<vmem>>, vector<256x128xf32>
    tpu.vector_store %arg7[%c0_13, %c0_14], %19 {strides = array<i32>} : memref<256x128xf32, #tpu.memory_space<vmem>>, vector<256x128xf32>,
    %c0_15 = arith.constant 0 : index
    %c0_16 = arith.constant 0 : index
    %21 = vector.load %arg7[%c0_15, %c0_16] : memref<256x128xf32, #tpu.memory_space<vmem>>, vector<256x128xf32>
    %c0_17 = arith.constant 0 : index
    %c0_18 = arith.constant 0 : index
    %22 = vector.load %arg4[%c0_17, %c0_18] : memref<1x128xf32, #tpu.memory_space<vmem>>, vector<1x128xf32>
    %23 = vector.broadcast %22 : vector<1x128xf32> to vector<256x128xf32>
    %24 = arith.mulf %21, %23 : vector<256x128xf32>
    %c0_19 = arith.constant 0 : index
    %c0_20 = arith.constant 0 : index
    %25 = vector.load %arg5[%c0_19, %c0_20] : memref<1x128xf32, #tpu.memory_space<vmem>>, vector<1x128xf32>
    %26 = vector.broadcast %25 : vector<1x128xf32> to vector<256x128xf32>
    %27 = arith.addf %24, %26 : vector<256x128xf32>
    %cst_21 = arith.constant 2.000000e-01 : f32
    %28 = vector.broadcast %cst_21 : f32 to vector<256x128xf32>
    %29 = arith.mulf %28, %27 : vector<256x128xf32>
    %30 = arith.maximumf %27, %29 : vector<256x128xf32>
    %31 = vector.extract_strided_slice %30 {offsets = [0, 0], sizes = [256, 8], strides = [1, 1]} : vector<256x128xf32> to vector<256x8xf32>
    %32 = arith.truncf %31 : vector<256x8xf32> to vector<256x8xbf16>
    %c0_22 = arith.constant 0 : index
    %c0_23 = arith.constant 0 : index
    %c0_24 = arith.constant 0 : index
    %33 = vector.load %arg6[%c0_22, %c0_23, %c0_24] : memref<1x256x8xbf16, #tpu.memory_space<vmem>>, vector<1x256x8xbf16>
    %34 = vector.shape_cast %33 : vector<1x256x8xbf16> to vector<256x8xbf16>
    %35 = vector.shape_cast %32 : vector<256x8xbf16> to vector<1x256x8xbf16>
    tpu.vector_store %arg6[%c0_22, %c0_23, %c0_24], %35 {strides = array<i32>} : memref<1x256x8xbf16, #tpu.memory_space<vmem>>, vector<1x256x8xbf16>,
    return
  }
  func.func @transform_0(%arg0: i32, %arg1: i32) -> (i32, i32, i32) {
    %c0_i32 = arith.constant 0 : i32
    %c0_i32_0 = arith.constant 0 : i32
    %c0_i32_1 = arith.constant 0 : i32
    return %arg0, %c0_i32, %c0_i32_0 : i32, i32, i32
  }
  func.func @transform_1(%arg0: i32, %arg1: i32) -> (i32, i32, i32) {
    %c0_i32 = arith.constant 0 : i32
    %c0_i32_0 = arith.constant 0 : i32
    %c0_i32_1 = arith.constant 0 : i32
    %c0_i32_2 = arith.constant 0 : i32
    return %c0_i32, %c0_i32_0, %c0_i32_1 : i32, i32, i32
  }
  func.func @transform_2(%arg0: i32, %arg1: i32) -> (i32, i32) {
    %c0_i32 = arith.constant 0 : i32
    %c0_i32_0 = arith.constant 0 : i32
    %c0_i32_1 = arith.constant 0 : i32
    return %c0_i32, %c0_i32_0 : i32, i32
  }
  func.func @transform_3(%arg0: i32, %arg1: i32) -> (i32, i32) {
    %c0_i32 = arith.constant 0 : i32
    %c0_i32_0 = arith.constant 0 : i32
    %c0_i32_1 = arith.constant 0 : i32
    return %c0_i32, %c0_i32_0 : i32, i32
  }
  func.func @transform_4(%arg0: i32, %arg1: i32) -> (i32, i32, i32) {
    %c0_i32 = arith.constant 0 : i32
    %c0_i32_0 = arith.constant 0 : i32
    return %arg0, %arg1, %c0_i32 : i32, i32, i32
  }
}

module attributes {stable_mosaic.version = 11 : i64} {
  func.func @_conv_fold_kernel(%arg0: i32, %arg1: i32, %arg2: memref<1x144x128xbf16, #tpu.memory_space<vmem>>, %arg3: memref<2x128x128xbf16, #tpu.memory_space<vmem>>, %arg4: memref<1x128xf32, #tpu.memory_space<vmem>>, %arg5: memref<1x128xf32, #tpu.memory_space<vmem>>, %arg6: memref<1x64x16xbf16, #tpu.memory_space<vmem>>, %arg7: memref<64x128xf32, #tpu.memory_space<vmem>>) attributes {dimension_semantics = [#tpu.dimension_semantics<parallel>, #tpu.dimension_semantics<parallel>], iteration_bounds = array<i64: 2, 2>, scalar_prefetch = 0 : i64, scratch_operands = 1 : i64, tpu.core_type = #tpu.core_type<tc>, window_params = [{transform_indices = @transform_0, window_bounds = array<i64: 1, 144, 128>}, {pipeline_mode = #tpu.pipeline_mode<synchronous>, transform_indices = @transform_1, window_bounds = array<i64: 2, 128, 128>}, {pipeline_mode = #tpu.pipeline_mode<synchronous>, transform_indices = @transform_2, window_bounds = array<i64: 1, 128>}, {pipeline_mode = #tpu.pipeline_mode<synchronous>, transform_indices = @transform_3, window_bounds = array<i64: 1, 128>}, {transform_indices = @transform_4, window_bounds = array<i64: 1, 64, 16>}]} {
    %c64_i32 = arith.constant 64 : i32
    %0 = arith.muli %arg1, %c64_i32 : i32
    %c0_i32 = arith.constant 0 : i32
    %1 = arith.addi %0, %c0_i32 : i32
    %2 = tpu.assume_multiple %1, 16 : i32
    %c0 = arith.constant 0 : index
    %3 = arith.index_cast %2 : i32 to index
    %c0_0 = arith.constant 0 : index
    %4 = vector.load %arg2[%c0, %3, %c0_0] : memref<1x144x128xbf16, #tpu.memory_space<vmem>>, vector<1x64x128xbf16>
    %5 = vector.shape_cast %4 : vector<1x64x128xbf16> to vector<64x128xbf16>
    %c0_1 = arith.constant 0 : index
    %c0_2 = arith.constant 0 : index
    %c0_3 = arith.constant 0 : index
    %6 = vector.load %arg3[%c0_1, %c0_2, %c0_3] : memref<2x128x128xbf16, #tpu.memory_space<vmem>>, vector<1x128x128xbf16>
    %7 = vector.shape_cast %6 : vector<1x128x128xbf16> to vector<128x128xbf16>
    %cst = arith.constant dense<0.000000e+00> : vector<64x128xf32>
    %8 = tpu.matmul %5, %7, %cst {dimension_numbers = #tpu.dot_dimension_numbers<[1], [0], [0], [1], [0, 0, 1, 1], [], []>} : vector<64x128xbf16>, vector<128x128xbf16>, vector<64x128xf32> -> vector<64x128xf32>
    %c0_4 = arith.constant 0 : index
    %c0_5 = arith.constant 0 : index
    %9 = vector.load %arg7[%c0_4, %c0_5] : memref<64x128xf32, #tpu.memory_space<vmem>>, vector<64x128xf32>
    tpu.vector_store %arg7[%c0_4, %c0_5], %8 {strides = array<i32>} : memref<64x128xf32, #tpu.memory_space<vmem>>, vector<64x128xf32>,
    %c16_i32 = arith.constant 16 : i32
    %10 = arith.addi %0, %c16_i32 : i32
    %11 = tpu.assume_multiple %10, 16 : i32
    %c0_6 = arith.constant 0 : index
    %12 = arith.index_cast %11 : i32 to index
    %c0_7 = arith.constant 0 : index
    %13 = vector.load %arg2[%c0_6, %12, %c0_7] : memref<1x144x128xbf16, #tpu.memory_space<vmem>>, vector<1x64x128xbf16>
    %14 = vector.shape_cast %13 : vector<1x64x128xbf16> to vector<64x128xbf16>
    %c1 = arith.constant 1 : index
    %c0_8 = arith.constant 0 : index
    %c0_9 = arith.constant 0 : index
    %15 = vector.load %arg3[%c1, %c0_8, %c0_9] : memref<2x128x128xbf16, #tpu.memory_space<vmem>>, vector<1x128x128xbf16>
    %16 = vector.shape_cast %15 : vector<1x128x128xbf16> to vector<128x128xbf16>
    %cst_10 = arith.constant dense<0.000000e+00> : vector<64x128xf32>
    %17 = tpu.matmul %14, %16, %cst_10 {dimension_numbers = #tpu.dot_dimension_numbers<[1], [0], [0], [1], [0, 0, 1, 1], [], []>} : vector<64x128xbf16>, vector<128x128xbf16>, vector<64x128xf32> -> vector<64x128xf32>
    %c0_11 = arith.constant 0 : index
    %c0_12 = arith.constant 0 : index
    %18 = vector.load %arg7[%c0_11, %c0_12] : memref<64x128xf32, #tpu.memory_space<vmem>>, vector<64x128xf32>
    %19 = arith.addf %18, %17 : vector<64x128xf32>
    %c0_13 = arith.constant 0 : index
    %c0_14 = arith.constant 0 : index
    %20 = vector.load %arg7[%c0_13, %c0_14] : memref<64x128xf32, #tpu.memory_space<vmem>>, vector<64x128xf32>
    tpu.vector_store %arg7[%c0_13, %c0_14], %19 {strides = array<i32>} : memref<64x128xf32, #tpu.memory_space<vmem>>, vector<64x128xf32>,
    %c0_15 = arith.constant 0 : index
    %c0_16 = arith.constant 0 : index
    %21 = vector.load %arg7[%c0_15, %c0_16] : memref<64x128xf32, #tpu.memory_space<vmem>>, vector<64x128xf32>
    %c0_17 = arith.constant 0 : index
    %c0_18 = arith.constant 0 : index
    %22 = vector.load %arg4[%c0_17, %c0_18] : memref<1x128xf32, #tpu.memory_space<vmem>>, vector<1x128xf32>
    %23 = vector.broadcast %22 : vector<1x128xf32> to vector<64x128xf32>
    %24 = arith.mulf %21, %23 : vector<64x128xf32>
    %c0_19 = arith.constant 0 : index
    %c0_20 = arith.constant 0 : index
    %25 = vector.load %arg5[%c0_19, %c0_20] : memref<1x128xf32, #tpu.memory_space<vmem>>, vector<1x128xf32>
    %26 = vector.broadcast %25 : vector<1x128xf32> to vector<64x128xf32>
    %27 = arith.addf %24, %26 : vector<64x128xf32>
    %cst_21 = arith.constant 2.000000e-01 : f32
    %28 = vector.broadcast %cst_21 : f32 to vector<64x128xf32>
    %29 = arith.mulf %28, %27 : vector<64x128xf32>
    %30 = arith.maximumf %27, %29 : vector<64x128xf32>
    %31 = vector.extract_strided_slice %30 {offsets = [0, 0], sizes = [64, 16], strides = [1, 1]} : vector<64x128xf32> to vector<64x16xf32>
    %32 = arith.truncf %31 : vector<64x16xf32> to vector<64x16xbf16>
    %c0_22 = arith.constant 0 : index
    %c0_23 = arith.constant 0 : index
    %c0_24 = arith.constant 0 : index
    %33 = vector.load %arg6[%c0_22, %c0_23, %c0_24] : memref<1x64x16xbf16, #tpu.memory_space<vmem>>, vector<1x64x16xbf16>
    %34 = vector.shape_cast %33 : vector<1x64x16xbf16> to vector<64x16xbf16>
    %35 = vector.shape_cast %32 : vector<64x16xbf16> to vector<1x64x16xbf16>
    tpu.vector_store %arg6[%c0_22, %c0_23, %c0_24], %35 {strides = array<i32>} : memref<1x64x16xbf16, #tpu.memory_space<vmem>>, vector<1x64x16xbf16>,
    return
  }
  func.func @transform_0(%arg0: i32, %arg1: i32) -> (i32, i32, i32) {
    %c0_i32 = arith.constant 0 : i32
    %c0_i32_0 = arith.constant 0 : i32
    %c0_i32_1 = arith.constant 0 : i32
    return %arg0, %c0_i32, %c0_i32_0 : i32, i32, i32
  }
  func.func @transform_1(%arg0: i32, %arg1: i32) -> (i32, i32, i32) {
    %c0_i32 = arith.constant 0 : i32
    %c0_i32_0 = arith.constant 0 : i32
    %c0_i32_1 = arith.constant 0 : i32
    %c0_i32_2 = arith.constant 0 : i32
    return %c0_i32, %c0_i32_0, %c0_i32_1 : i32, i32, i32
  }
  func.func @transform_2(%arg0: i32, %arg1: i32) -> (i32, i32) {
    %c0_i32 = arith.constant 0 : i32
    %c0_i32_0 = arith.constant 0 : i32
    %c0_i32_1 = arith.constant 0 : i32
    return %c0_i32, %c0_i32_0 : i32, i32
  }
  func.func @transform_3(%arg0: i32, %arg1: i32) -> (i32, i32) {
    %c0_i32 = arith.constant 0 : i32
    %c0_i32_0 = arith.constant 0 : i32
    %c0_i32_1 = arith.constant 0 : i32
    return %c0_i32, %c0_i32_0 : i32, i32
  }
  func.func @transform_4(%arg0: i32, %arg1: i32) -> (i32, i32, i32) {
    %c0_i32 = arith.constant 0 : i32
    %c0_i32_0 = arith.constant 0 : i32
    return %arg0, %arg1, %c0_i32 : i32, i32, i32
  }
}

module attributes {stable_mosaic.version = 11 : i64} {
  func.func @_conv_fold_kernel(%arg0: i32, %arg1: i32, %arg2: memref<1x80x128xbf16, #tpu.memory_space<vmem>>, %arg3: memref<2x128x128xbf16, #tpu.memory_space<vmem>>, %arg4: memref<1x128xf32, #tpu.memory_space<vmem>>, %arg5: memref<1x128xf32, #tpu.memory_space<vmem>>, %arg6: memref<1x32x32xbf16, #tpu.memory_space<vmem>>, %arg7: memref<32x128xf32, #tpu.memory_space<vmem>>) attributes {dimension_semantics = [#tpu.dimension_semantics<parallel>, #tpu.dimension_semantics<parallel>], iteration_bounds = array<i64: 2, 2>, scalar_prefetch = 0 : i64, scratch_operands = 1 : i64, tpu.core_type = #tpu.core_type<tc>, window_params = [{transform_indices = @transform_0, window_bounds = array<i64: 1, 80, 128>}, {pipeline_mode = #tpu.pipeline_mode<synchronous>, transform_indices = @transform_1, window_bounds = array<i64: 2, 128, 128>}, {pipeline_mode = #tpu.pipeline_mode<synchronous>, transform_indices = @transform_2, window_bounds = array<i64: 1, 128>}, {pipeline_mode = #tpu.pipeline_mode<synchronous>, transform_indices = @transform_3, window_bounds = array<i64: 1, 128>}, {transform_indices = @transform_4, window_bounds = array<i64: 1, 32, 32>}]} {
    %c32_i32 = arith.constant 32 : i32
    %0 = arith.muli %arg1, %c32_i32 : i32
    %c0_i32 = arith.constant 0 : i32
    %1 = arith.addi %0, %c0_i32 : i32
    %2 = tpu.assume_multiple %1, 16 : i32
    %c0 = arith.constant 0 : index
    %3 = arith.index_cast %2 : i32 to index
    %c0_0 = arith.constant 0 : index
    %4 = vector.load %arg2[%c0, %3, %c0_0] : memref<1x80x128xbf16, #tpu.memory_space<vmem>>, vector<1x32x128xbf16>
    %5 = vector.shape_cast %4 : vector<1x32x128xbf16> to vector<32x128xbf16>
    %c0_1 = arith.constant 0 : index
    %c0_2 = arith.constant 0 : index
    %c0_3 = arith.constant 0 : index
    %6 = vector.load %arg3[%c0_1, %c0_2, %c0_3] : memref<2x128x128xbf16, #tpu.memory_space<vmem>>, vector<1x128x128xbf16>
    %7 = vector.shape_cast %6 : vector<1x128x128xbf16> to vector<128x128xbf16>
    %cst = arith.constant dense<0.000000e+00> : vector<32x128xf32>
    %8 = tpu.matmul %5, %7, %cst {dimension_numbers = #tpu.dot_dimension_numbers<[1], [0], [0], [1], [0, 0, 1, 1], [], []>} : vector<32x128xbf16>, vector<128x128xbf16>, vector<32x128xf32> -> vector<32x128xf32>
    %c0_4 = arith.constant 0 : index
    %c0_5 = arith.constant 0 : index
    %9 = vector.load %arg7[%c0_4, %c0_5] : memref<32x128xf32, #tpu.memory_space<vmem>>, vector<32x128xf32>
    tpu.vector_store %arg7[%c0_4, %c0_5], %8 {strides = array<i32>} : memref<32x128xf32, #tpu.memory_space<vmem>>, vector<32x128xf32>,
    %c16_i32 = arith.constant 16 : i32
    %10 = arith.addi %0, %c16_i32 : i32
    %11 = tpu.assume_multiple %10, 16 : i32
    %c0_6 = arith.constant 0 : index
    %12 = arith.index_cast %11 : i32 to index
    %c0_7 = arith.constant 0 : index
    %13 = vector.load %arg2[%c0_6, %12, %c0_7] : memref<1x80x128xbf16, #tpu.memory_space<vmem>>, vector<1x32x128xbf16>
    %14 = vector.shape_cast %13 : vector<1x32x128xbf16> to vector<32x128xbf16>
    %c1 = arith.constant 1 : index
    %c0_8 = arith.constant 0 : index
    %c0_9 = arith.constant 0 : index
    %15 = vector.load %arg3[%c1, %c0_8, %c0_9] : memref<2x128x128xbf16, #tpu.memory_space<vmem>>, vector<1x128x128xbf16>
    %16 = vector.shape_cast %15 : vector<1x128x128xbf16> to vector<128x128xbf16>
    %cst_10 = arith.constant dense<0.000000e+00> : vector<32x128xf32>
    %17 = tpu.matmul %14, %16, %cst_10 {dimension_numbers = #tpu.dot_dimension_numbers<[1], [0], [0], [1], [0, 0, 1, 1], [], []>} : vector<32x128xbf16>, vector<128x128xbf16>, vector<32x128xf32> -> vector<32x128xf32>
    %c0_11 = arith.constant 0 : index
    %c0_12 = arith.constant 0 : index
    %18 = vector.load %arg7[%c0_11, %c0_12] : memref<32x128xf32, #tpu.memory_space<vmem>>, vector<32x128xf32>
    %19 = arith.addf %18, %17 : vector<32x128xf32>
    %c0_13 = arith.constant 0 : index
    %c0_14 = arith.constant 0 : index
    %20 = vector.load %arg7[%c0_13, %c0_14] : memref<32x128xf32, #tpu.memory_space<vmem>>, vector<32x128xf32>
    tpu.vector_store %arg7[%c0_13, %c0_14], %19 {strides = array<i32>} : memref<32x128xf32, #tpu.memory_space<vmem>>, vector<32x128xf32>,
    %c0_15 = arith.constant 0 : index
    %c0_16 = arith.constant 0 : index
    %21 = vector.load %arg7[%c0_15, %c0_16] : memref<32x128xf32, #tpu.memory_space<vmem>>, vector<32x128xf32>
    %c0_17 = arith.constant 0 : index
    %c0_18 = arith.constant 0 : index
    %22 = vector.load %arg4[%c0_17, %c0_18] : memref<1x128xf32, #tpu.memory_space<vmem>>, vector<1x128xf32>
    %23 = vector.broadcast %22 : vector<1x128xf32> to vector<32x128xf32>
    %24 = arith.mulf %21, %23 : vector<32x128xf32>
    %c0_19 = arith.constant 0 : index
    %c0_20 = arith.constant 0 : index
    %25 = vector.load %arg5[%c0_19, %c0_20] : memref<1x128xf32, #tpu.memory_space<vmem>>, vector<1x128xf32>
    %26 = vector.broadcast %25 : vector<1x128xf32> to vector<32x128xf32>
    %27 = arith.addf %24, %26 : vector<32x128xf32>
    %cst_21 = arith.constant 2.000000e-01 : f32
    %28 = vector.broadcast %cst_21 : f32 to vector<32x128xf32>
    %29 = arith.mulf %28, %27 : vector<32x128xf32>
    %30 = arith.maximumf %27, %29 : vector<32x128xf32>
    %31 = vector.extract_strided_slice %30 {offsets = [0, 0], sizes = [32, 32], strides = [1, 1]} : vector<32x128xf32> to vector<32x32xf32>
    %32 = arith.truncf %31 : vector<32x32xf32> to vector<32x32xbf16>
    %c0_22 = arith.constant 0 : index
    %c0_23 = arith.constant 0 : index
    %c0_24 = arith.constant 0 : index
    %33 = vector.load %arg6[%c0_22, %c0_23, %c0_24] : memref<1x32x32xbf16, #tpu.memory_space<vmem>>, vector<1x32x32xbf16>
    %34 = vector.shape_cast %33 : vector<1x32x32xbf16> to vector<32x32xbf16>
    %35 = vector.shape_cast %32 : vector<32x32xbf16> to vector<1x32x32xbf16>
    tpu.vector_store %arg6[%c0_22, %c0_23, %c0_24], %35 {strides = array<i32>} : memref<1x32x32xbf16, #tpu.memory_space<vmem>>, vector<1x32x32xbf16>,
    return
  }
  func.func @transform_0(%arg0: i32, %arg1: i32) -> (i32, i32, i32) {
    %c0_i32 = arith.constant 0 : i32
    %c0_i32_0 = arith.constant 0 : i32
    %c0_i32_1 = arith.constant 0 : i32
    return %arg0, %c0_i32, %c0_i32_0 : i32, i32, i32
  }
  func.func @transform_1(%arg0: i32, %arg1: i32) -> (i32, i32, i32) {
    %c0_i32 = arith.constant 0 : i32
    %c0_i32_0 = arith.constant 0 : i32
    %c0_i32_1 = arith.constant 0 : i32
    %c0_i32_2 = arith.constant 0 : i32
    return %c0_i32, %c0_i32_0, %c0_i32_1 : i32, i32, i32
  }
  func.func @transform_2(%arg0: i32, %arg1: i32) -> (i32, i32) {
    %c0_i32 = arith.constant 0 : i32
    %c0_i32_0 = arith.constant 0 : i32
    %c0_i32_1 = arith.constant 0 : i32
    return %c0_i32, %c0_i32_0 : i32, i32
  }
  func.func @transform_3(%arg0: i32, %arg1: i32) -> (i32, i32) {
    %c0_i32 = arith.constant 0 : i32
    %c0_i32_0 = arith.constant 0 : i32
    %c0_i32_1 = arith.constant 0 : i32
    return %c0_i32, %c0_i32_0 : i32, i32
  }
  func.func @transform_4(%arg0: i32, %arg1: i32) -> (i32, i32, i32) {
    %c0_i32 = arith.constant 0 : i32
    %c0_i32_0 = arith.constant 0 : i32
    return %arg0, %arg1, %c0_i32 : i32, i32, i32
  }
}

module attributes {stable_mosaic.version = 11 : i64} {
  func.func @_conv_fold_kernel(%arg0: i32, %arg1: i32, %arg2: memref<1x112x128xbf16, #tpu.memory_space<vmem>>, %arg3: memref<4x128x128xbf16, #tpu.memory_space<vmem>>, %arg4: memref<1x128xf32, #tpu.memory_space<vmem>>, %arg5: memref<1x128xf32, #tpu.memory_space<vmem>>, %arg6: memref<1x32x128xbf16, #tpu.memory_space<vmem>>, %arg7: memref<32x128xf32, #tpu.memory_space<vmem>>) attributes {dimension_semantics = [#tpu.dimension_semantics<parallel>, #tpu.dimension_semantics<parallel>], iteration_bounds = array<i64: 2, 2>, scalar_prefetch = 0 : i64, scratch_operands = 1 : i64, tpu.core_type = #tpu.core_type<tc>, window_params = [{transform_indices = @transform_0, window_bounds = array<i64: 1, 112, 128>}, {pipeline_mode = #tpu.pipeline_mode<synchronous>, transform_indices = @transform_1, window_bounds = array<i64: 4, 128, 128>}, {pipeline_mode = #tpu.pipeline_mode<synchronous>, transform_indices = @transform_2, window_bounds = array<i64: 1, 128>}, {pipeline_mode = #tpu.pipeline_mode<synchronous>, transform_indices = @transform_3, window_bounds = array<i64: 1, 128>}, {transform_indices = @transform_4, window_bounds = array<i64: 1, 32, 128>}]} {
    %c32_i32 = arith.constant 32 : i32
    %0 = arith.muli %arg1, %c32_i32 : i32
    %c0_i32 = arith.constant 0 : i32
    %1 = arith.addi %0, %c0_i32 : i32
    %2 = tpu.assume_multiple %1, 16 : i32
    %c0 = arith.constant 0 : index
    %3 = arith.index_cast %2 : i32 to index
    %c0_0 = arith.constant 0 : index
    %4 = vector.load %arg2[%c0, %3, %c0_0] : memref<1x112x128xbf16, #tpu.memory_space<vmem>>, vector<1x32x128xbf16>
    %5 = vector.shape_cast %4 : vector<1x32x128xbf16> to vector<32x128xbf16>
    %c0_1 = arith.constant 0 : index
    %c0_2 = arith.constant 0 : index
    %c0_3 = arith.constant 0 : index
    %6 = vector.load %arg3[%c0_1, %c0_2, %c0_3] : memref<4x128x128xbf16, #tpu.memory_space<vmem>>, vector<1x128x128xbf16>
    %7 = vector.shape_cast %6 : vector<1x128x128xbf16> to vector<128x128xbf16>
    %cst = arith.constant dense<0.000000e+00> : vector<32x128xf32>
    %8 = tpu.matmul %5, %7, %cst {dimension_numbers = #tpu.dot_dimension_numbers<[1], [0], [0], [1], [0, 0, 1, 1], [], []>} : vector<32x128xbf16>, vector<128x128xbf16>, vector<32x128xf32> -> vector<32x128xf32>
    %c0_4 = arith.constant 0 : index
    %c0_5 = arith.constant 0 : index
    %9 = vector.load %arg7[%c0_4, %c0_5] : memref<32x128xf32, #tpu.memory_space<vmem>>, vector<32x128xf32>
    tpu.vector_store %arg7[%c0_4, %c0_5], %8 {strides = array<i32>} : memref<32x128xf32, #tpu.memory_space<vmem>>, vector<32x128xf32>,
    %c16_i32 = arith.constant 16 : i32
    %10 = arith.addi %0, %c16_i32 : i32
    %11 = tpu.assume_multiple %10, 16 : i32
    %c0_6 = arith.constant 0 : index
    %12 = arith.index_cast %11 : i32 to index
    %c0_7 = arith.constant 0 : index
    %13 = vector.load %arg2[%c0_6, %12, %c0_7] : memref<1x112x128xbf16, #tpu.memory_space<vmem>>, vector<1x32x128xbf16>
    %14 = vector.shape_cast %13 : vector<1x32x128xbf16> to vector<32x128xbf16>
    %c1 = arith.constant 1 : index
    %c0_8 = arith.constant 0 : index
    %c0_9 = arith.constant 0 : index
    %15 = vector.load %arg3[%c1, %c0_8, %c0_9] : memref<4x128x128xbf16, #tpu.memory_space<vmem>>, vector<1x128x128xbf16>
    %16 = vector.shape_cast %15 : vector<1x128x128xbf16> to vector<128x128xbf16>
    %cst_10 = arith.constant dense<0.000000e+00> : vector<32x128xf32>
    %17 = tpu.matmul %14, %16, %cst_10 {dimension_numbers = #tpu.dot_dimension_numbers<[1], [0], [0], [1], [0, 0, 1, 1], [], []>} : vector<32x128xbf16>, vector<128x128xbf16>, vector<32x128xf32> -> vector<32x128xf32>
    %c0_11 = arith.constant 0 : index
    %c0_12 = arith.constant 0 : index
    %18 = vector.load %arg7[%c0_11, %c0_12] : memref<32x128xf32, #tpu.memory_space<vmem>>, vector<32x128xf32>
    %19 = arith.addf %18, %17 : vector<32x128xf32>
    %c0_13 = arith.constant 0 : index
    %c0_14 = arith.constant 0 : index
    %20 = vector.load %arg7[%c0_13, %c0_14] : memref<32x128xf32, #tpu.memory_space<vmem>>, vector<32x128xf32>
    tpu.vector_store %arg7[%c0_13, %c0_14], %19 {strides = array<i32>} : memref<32x128xf32, #tpu.memory_space<vmem>>, vector<32x128xf32>,
    %c32_i32_15 = arith.constant 32 : i32
    %21 = arith.addi %0, %c32_i32_15 : i32
    %22 = tpu.assume_multiple %21, 16 : i32
    %c0_16 = arith.constant 0 : index
    %23 = arith.index_cast %22 : i32 to index
    %c0_17 = arith.constant 0 : index
    %24 = vector.load %arg2[%c0_16, %23, %c0_17] : memref<1x112x128xbf16, #tpu.memory_space<vmem>>, vector<1x32x128xbf16>
    %25 = vector.shape_cast %24 : vector<1x32x128xbf16> to vector<32x128xbf16>
    %c2 = arith.constant 2 : index
    %c0_18 = arith.constant 0 : index
    %c0_19 = arith.constant 0 : index
    %26 = vector.load %arg3[%c2, %c0_18, %c0_19] : memref<4x128x128xbf16, #tpu.memory_space<vmem>>, vector<1x128x128xbf16>
    %27 = vector.shape_cast %26 : vector<1x128x128xbf16> to vector<128x128xbf16>
    %cst_20 = arith.constant dense<0.000000e+00> : vector<32x128xf32>
    %28 = tpu.matmul %25, %27, %cst_20 {dimension_numbers = #tpu.dot_dimension_numbers<[1], [0], [0], [1], [0, 0, 1, 1], [], []>} : vector<32x128xbf16>, vector<128x128xbf16>, vector<32x128xf32> -> vector<32x128xf32>
    %c0_21 = arith.constant 0 : index
    %c0_22 = arith.constant 0 : index
    %29 = vector.load %arg7[%c0_21, %c0_22] : memref<32x128xf32, #tpu.memory_space<vmem>>, vector<32x128xf32>
    %30 = arith.addf %29, %28 : vector<32x128xf32>
    %c0_23 = arith.constant 0 : index
    %c0_24 = arith.constant 0 : index
    %31 = vector.load %arg7[%c0_23, %c0_24] : memref<32x128xf32, #tpu.memory_space<vmem>>, vector<32x128xf32>
    tpu.vector_store %arg7[%c0_23, %c0_24], %30 {strides = array<i32>} : memref<32x128xf32, #tpu.memory_space<vmem>>, vector<32x128xf32>,
    %c48_i32 = arith.constant 48 : i32
    %32 = arith.addi %0, %c48_i32 : i32
    %33 = tpu.assume_multiple %32, 16 : i32
    %c0_25 = arith.constant 0 : index
    %34 = arith.index_cast %33 : i32 to index
    %c0_26 = arith.constant 0 : index
    %35 = vector.load %arg2[%c0_25, %34, %c0_26] : memref<1x112x128xbf16, #tpu.memory_space<vmem>>, vector<1x32x128xbf16>
    %36 = vector.shape_cast %35 : vector<1x32x128xbf16> to vector<32x128xbf16>
    %c3 = arith.constant 3 : index
    %c0_27 = arith.constant 0 : index
    %c0_28 = arith.constant 0 : index
    %37 = vector.load %arg3[%c3, %c0_27, %c0_28] : memref<4x128x128xbf16, #tpu.memory_space<vmem>>, vector<1x128x128xbf16>
    %38 = vector.shape_cast %37 : vector<1x128x128xbf16> to vector<128x128xbf16>
    %cst_29 = arith.constant dense<0.000000e+00> : vector<32x128xf32>
    %39 = tpu.matmul %36, %38, %cst_29 {dimension_numbers = #tpu.dot_dimension_numbers<[1], [0], [0], [1], [0, 0, 1, 1], [], []>} : vector<32x128xbf16>, vector<128x128xbf16>, vector<32x128xf32> -> vector<32x128xf32>
    %c0_30 = arith.constant 0 : index
    %c0_31 = arith.constant 0 : index
    %40 = vector.load %arg7[%c0_30, %c0_31] : memref<32x128xf32, #tpu.memory_space<vmem>>, vector<32x128xf32>
    %41 = arith.addf %40, %39 : vector<32x128xf32>
    %c0_32 = arith.constant 0 : index
    %c0_33 = arith.constant 0 : index
    %42 = vector.load %arg7[%c0_32, %c0_33] : memref<32x128xf32, #tpu.memory_space<vmem>>, vector<32x128xf32>
    tpu.vector_store %arg7[%c0_32, %c0_33], %41 {strides = array<i32>} : memref<32x128xf32, #tpu.memory_space<vmem>>, vector<32x128xf32>,
    %c0_34 = arith.constant 0 : index
    %c0_35 = arith.constant 0 : index
    %43 = vector.load %arg7[%c0_34, %c0_35] : memref<32x128xf32, #tpu.memory_space<vmem>>, vector<32x128xf32>
    %c0_36 = arith.constant 0 : index
    %c0_37 = arith.constant 0 : index
    %44 = vector.load %arg4[%c0_36, %c0_37] : memref<1x128xf32, #tpu.memory_space<vmem>>, vector<1x128xf32>
    %45 = vector.broadcast %44 : vector<1x128xf32> to vector<32x128xf32>
    %46 = arith.mulf %43, %45 : vector<32x128xf32>
    %c0_38 = arith.constant 0 : index
    %c0_39 = arith.constant 0 : index
    %47 = vector.load %arg5[%c0_38, %c0_39] : memref<1x128xf32, #tpu.memory_space<vmem>>, vector<1x128xf32>
    %48 = vector.broadcast %47 : vector<1x128xf32> to vector<32x128xf32>
    %49 = arith.addf %46, %48 : vector<32x128xf32>
    %cst_40 = arith.constant 2.000000e-01 : f32
    %50 = vector.broadcast %cst_40 : f32 to vector<32x128xf32>
    %51 = arith.mulf %50, %49 : vector<32x128xf32>
    %52 = arith.maximumf %49, %51 : vector<32x128xf32>
    %53 = arith.truncf %52 : vector<32x128xf32> to vector<32x128xbf16>
    %c0_41 = arith.constant 0 : index
    %c0_42 = arith.constant 0 : index
    %c0_43 = arith.constant 0 : index
    %54 = vector.load %arg6[%c0_41, %c0_42, %c0_43] : memref<1x32x128xbf16, #tpu.memory_space<vmem>>, vector<1x32x128xbf16>
    %55 = vector.shape_cast %54 : vector<1x32x128xbf16> to vector<32x128xbf16>
    %56 = vector.shape_cast %53 : vector<32x128xbf16> to vector<1x32x128xbf16>
    tpu.vector_store %arg6[%c0_41, %c0_42, %c0_43], %56 {strides = array<i32>} : memref<1x32x128xbf16, #tpu.memory_space<vmem>>, vector<1x32x128xbf16>,
    return
  }
  func.func @transform_0(%arg0: i32, %arg1: i32) -> (i32, i32, i32) {
    %c0_i32 = arith.constant 0 : i32
    %c0_i32_0 = arith.constant 0 : i32
    %c0_i32_1 = arith.constant 0 : i32
    return %arg0, %c0_i32, %c0_i32_0 : i32, i32, i32
  }
  func.func @transform_1(%arg0: i32, %arg1: i32) -> (i32, i32, i32) {
    %c0_i32 = arith.constant 0 : i32
    %c0_i32_0 = arith.constant 0 : i32
    %c0_i32_1 = arith.constant 0 : i32
    %c0_i32_2 = arith.constant 0 : i32
    return %c0_i32, %c0_i32_0, %c0_i32_1 : i32, i32, i32
  }
  func.func @transform_2(%arg0: i32, %arg1: i32) -> (i32, i32) {
    %c0_i32 = arith.constant 0 : i32
    %c0_i32_0 = arith.constant 0 : i32
    %c0_i32_1 = arith.constant 0 : i32
    return %c0_i32, %c0_i32_0 : i32, i32
  }
  func.func @transform_3(%arg0: i32, %arg1: i32) -> (i32, i32) {
    %c0_i32 = arith.constant 0 : i32
    %c0_i32_0 = arith.constant 0 : i32
    %c0_i32_1 = arith.constant 0 : i32
    return %c0_i32, %c0_i32_0 : i32, i32
  }
  func.func @transform_4(%arg0: i32, %arg1: i32) -> (i32, i32, i32) {
    %c0_i32 = arith.constant 0 : i32
    %c0_i32_0 = arith.constant 0 : i32
    return %arg0, %arg1, %c0_i32 : i32, i32, i32
  }
}

module attributes {stable_mosaic.version = 11 : i64} {
  func.func @_conv_fold_kernel(%arg0: i32, %arg1: i32, %arg2: memref<1x80x256xbf16, #tpu.memory_space<vmem>>, %arg3: memref<4x256x128xbf16, #tpu.memory_space<vmem>>, %arg4: memref<1x128xf32, #tpu.memory_space<vmem>>, %arg5: memref<1x128xf32, #tpu.memory_space<vmem>>, %arg6: memref<1x16x8xf32, #tpu.memory_space<vmem>>, %arg7: memref<16x128xf32, #tpu.memory_space<vmem>>) attributes {dimension_semantics = [#tpu.dimension_semantics<parallel>, #tpu.dimension_semantics<parallel>], iteration_bounds = array<i64: 2, 2>, scalar_prefetch = 0 : i64, scratch_operands = 1 : i64, tpu.core_type = #tpu.core_type<tc>, window_params = [{transform_indices = @transform_0, window_bounds = array<i64: 1, 80, 256>}, {pipeline_mode = #tpu.pipeline_mode<synchronous>, transform_indices = @transform_1, window_bounds = array<i64: 4, 256, 128>}, {pipeline_mode = #tpu.pipeline_mode<synchronous>, transform_indices = @transform_2, window_bounds = array<i64: 1, 128>}, {pipeline_mode = #tpu.pipeline_mode<synchronous>, transform_indices = @transform_3, window_bounds = array<i64: 1, 128>}, {transform_indices = @transform_4, window_bounds = array<i64: 1, 16, 8>}]} {
    %c16_i32 = arith.constant 16 : i32
    %0 = arith.muli %arg1, %c16_i32 : i32
    %c0_i32 = arith.constant 0 : i32
    %1 = arith.addi %0, %c0_i32 : i32
    %2 = tpu.assume_multiple %1, 16 : i32
    %c0 = arith.constant 0 : index
    %3 = arith.index_cast %2 : i32 to index
    %c0_0 = arith.constant 0 : index
    %4 = vector.load %arg2[%c0, %3, %c0_0] : memref<1x80x256xbf16, #tpu.memory_space<vmem>>, vector<1x16x256xbf16>
    %5 = vector.shape_cast %4 : vector<1x16x256xbf16> to vector<16x256xbf16>
    %c0_1 = arith.constant 0 : index
    %c0_2 = arith.constant 0 : index
    %c0_3 = arith.constant 0 : index
    %6 = vector.load %arg3[%c0_1, %c0_2, %c0_3] : memref<4x256x128xbf16, #tpu.memory_space<vmem>>, vector<1x256x128xbf16>
    %7 = vector.shape_cast %6 : vector<1x256x128xbf16> to vector<256x128xbf16>
    %cst = arith.constant dense<0.000000e+00> : vector<16x128xf32>
    %8 = tpu.matmul %5, %7, %cst {dimension_numbers = #tpu.dot_dimension_numbers<[1], [0], [0], [1], [0, 0, 1, 1], [], []>} : vector<16x256xbf16>, vector<256x128xbf16>, vector<16x128xf32> -> vector<16x128xf32>
    %c0_4 = arith.constant 0 : index
    %c0_5 = arith.constant 0 : index
    %9 = vector.load %arg7[%c0_4, %c0_5] : memref<16x128xf32, #tpu.memory_space<vmem>>, vector<16x128xf32>
    tpu.vector_store %arg7[%c0_4, %c0_5], %8 {strides = array<i32>} : memref<16x128xf32, #tpu.memory_space<vmem>>, vector<16x128xf32>,
    %c16_i32_6 = arith.constant 16 : i32
    %10 = arith.addi %0, %c16_i32_6 : i32
    %11 = tpu.assume_multiple %10, 16 : i32
    %c0_7 = arith.constant 0 : index
    %12 = arith.index_cast %11 : i32 to index
    %c0_8 = arith.constant 0 : index
    %13 = vector.load %arg2[%c0_7, %12, %c0_8] : memref<1x80x256xbf16, #tpu.memory_space<vmem>>, vector<1x16x256xbf16>
    %14 = vector.shape_cast %13 : vector<1x16x256xbf16> to vector<16x256xbf16>
    %c1 = arith.constant 1 : index
    %c0_9 = arith.constant 0 : index
    %c0_10 = arith.constant 0 : index
    %15 = vector.load %arg3[%c1, %c0_9, %c0_10] : memref<4x256x128xbf16, #tpu.memory_space<vmem>>, vector<1x256x128xbf16>
    %16 = vector.shape_cast %15 : vector<1x256x128xbf16> to vector<256x128xbf16>
    %cst_11 = arith.constant dense<0.000000e+00> : vector<16x128xf32>
    %17 = tpu.matmul %14, %16, %cst_11 {dimension_numbers = #tpu.dot_dimension_numbers<[1], [0], [0], [1], [0, 0, 1, 1], [], []>} : vector<16x256xbf16>, vector<256x128xbf16>, vector<16x128xf32> -> vector<16x128xf32>
    %c0_12 = arith.constant 0 : index
    %c0_13 = arith.constant 0 : index
    %18 = vector.load %arg7[%c0_12, %c0_13] : memref<16x128xf32, #tpu.memory_space<vmem>>, vector<16x128xf32>
    %19 = arith.addf %18, %17 : vector<16x128xf32>
    %c0_14 = arith.constant 0 : index
    %c0_15 = arith.constant 0 : index
    %20 = vector.load %arg7[%c0_14, %c0_15] : memref<16x128xf32, #tpu.memory_space<vmem>>, vector<16x128xf32>
    tpu.vector_store %arg7[%c0_14, %c0_15], %19 {strides = array<i32>} : memref<16x128xf32, #tpu.memory_space<vmem>>, vector<16x128xf32>,
    %c32_i32 = arith.constant 32 : i32
    %21 = arith.addi %0, %c32_i32 : i32
    %22 = tpu.assume_multiple %21, 16 : i32
    %c0_16 = arith.constant 0 : index
    %23 = arith.index_cast %22 : i32 to index
    %c0_17 = arith.constant 0 : index
    %24 = vector.load %arg2[%c0_16, %23, %c0_17] : memref<1x80x256xbf16, #tpu.memory_space<vmem>>, vector<1x16x256xbf16>
    %25 = vector.shape_cast %24 : vector<1x16x256xbf16> to vector<16x256xbf16>
    %c2 = arith.constant 2 : index
    %c0_18 = arith.constant 0 : index
    %c0_19 = arith.constant 0 : index
    %26 = vector.load %arg3[%c2, %c0_18, %c0_19] : memref<4x256x128xbf16, #tpu.memory_space<vmem>>, vector<1x256x128xbf16>
    %27 = vector.shape_cast %26 : vector<1x256x128xbf16> to vector<256x128xbf16>
    %cst_20 = arith.constant dense<0.000000e+00> : vector<16x128xf32>
    %28 = tpu.matmul %25, %27, %cst_20 {dimension_numbers = #tpu.dot_dimension_numbers<[1], [0], [0], [1], [0, 0, 1, 1], [], []>} : vector<16x256xbf16>, vector<256x128xbf16>, vector<16x128xf32> -> vector<16x128xf32>
    %c0_21 = arith.constant 0 : index
    %c0_22 = arith.constant 0 : index
    %29 = vector.load %arg7[%c0_21, %c0_22] : memref<16x128xf32, #tpu.memory_space<vmem>>, vector<16x128xf32>
    %30 = arith.addf %29, %28 : vector<16x128xf32>
    %c0_23 = arith.constant 0 : index
    %c0_24 = arith.constant 0 : index
    %31 = vector.load %arg7[%c0_23, %c0_24] : memref<16x128xf32, #tpu.memory_space<vmem>>, vector<16x128xf32>
    tpu.vector_store %arg7[%c0_23, %c0_24], %30 {strides = array<i32>} : memref<16x128xf32, #tpu.memory_space<vmem>>, vector<16x128xf32>,
    %c48_i32 = arith.constant 48 : i32
    %32 = arith.addi %0, %c48_i32 : i32
    %33 = tpu.assume_multiple %32, 16 : i32
    %c0_25 = arith.constant 0 : index
    %34 = arith.index_cast %33 : i32 to index
    %c0_26 = arith.constant 0 : index
    %35 = vector.load %arg2[%c0_25, %34, %c0_26] : memref<1x80x256xbf16, #tpu.memory_space<vmem>>, vector<1x16x256xbf16>
    %36 = vector.shape_cast %35 : vector<1x16x256xbf16> to vector<16x256xbf16>
    %c3 = arith.constant 3 : index
    %c0_27 = arith.constant 0 : index
    %c0_28 = arith.constant 0 : index
    %37 = vector.load %arg3[%c3, %c0_27, %c0_28] : memref<4x256x128xbf16, #tpu.memory_space<vmem>>, vector<1x256x128xbf16>
    %38 = vector.shape_cast %37 : vector<1x256x128xbf16> to vector<256x128xbf16>
    %cst_29 = arith.constant dense<0.000000e+00> : vector<16x128xf32>
    %39 = tpu.matmul %36, %38, %cst_29 {dimension_numbers = #tpu.dot_dimension_numbers<[1], [0], [0], [1], [0, 0, 1, 1], [], []>} : vector<16x256xbf16>, vector<256x128xbf16>, vector<16x128xf32> -> vector<16x128xf32>
    %c0_30 = arith.constant 0 : index
    %c0_31 = arith.constant 0 : index
    %40 = vector.load %arg7[%c0_30, %c0_31] : memref<16x128xf32, #tpu.memory_space<vmem>>, vector<16x128xf32>
    %41 = arith.addf %40, %39 : vector<16x128xf32>
    %c0_32 = arith.constant 0 : index
    %c0_33 = arith.constant 0 : index
    %42 = vector.load %arg7[%c0_32, %c0_33] : memref<16x128xf32, #tpu.memory_space<vmem>>, vector<16x128xf32>
    tpu.vector_store %arg7[%c0_32, %c0_33], %41 {strides = array<i32>} : memref<16x128xf32, #tpu.memory_space<vmem>>, vector<16x128xf32>,
    %c0_34 = arith.constant 0 : index
    %c0_35 = arith.constant 0 : index
    %43 = vector.load %arg7[%c0_34, %c0_35] : memref<16x128xf32, #tpu.memory_space<vmem>>, vector<16x128xf32>
    %c0_36 = arith.constant 0 : index
    %c0_37 = arith.constant 0 : index
    %44 = vector.load %arg4[%c0_36, %c0_37] : memref<1x128xf32, #tpu.memory_space<vmem>>, vector<1x128xf32>
    %45 = vector.broadcast %44 : vector<1x128xf32> to vector<16x128xf32>
    %46 = arith.mulf %43, %45 : vector<16x128xf32>
    %c0_38 = arith.constant 0 : index
    %c0_39 = arith.constant 0 : index
    %47 = vector.load %arg5[%c0_38, %c0_39] : memref<1x128xf32, #tpu.memory_space<vmem>>, vector<1x128xf32>
    %48 = vector.broadcast %47 : vector<1x128xf32> to vector<16x128xf32>
    %49 = arith.addf %46, %48 : vector<16x128xf32>
    %50 = vector.extract_strided_slice %49 {offsets = [0, 0], sizes = [16, 8], strides = [1, 1]} : vector<16x128xf32> to vector<16x8xf32>
    %c0_40 = arith.constant 0 : index
    %c0_41 = arith.constant 0 : index
    %c0_42 = arith.constant 0 : index
    %51 = vector.load %arg6[%c0_40, %c0_41, %c0_42] : memref<1x16x8xf32, #tpu.memory_space<vmem>>, vector<1x16x8xf32>
    %52 = vector.shape_cast %51 : vector<1x16x8xf32> to vector<16x8xf32>
    %53 = vector.shape_cast %50 : vector<16x8xf32> to vector<1x16x8xf32>
    tpu.vector_store %arg6[%c0_40, %c0_41, %c0_42], %53 {strides = array<i32>} : memref<1x16x8xf32, #tpu.memory_space<vmem>>, vector<1x16x8xf32>,
    return
  }
  func.func @transform_0(%arg0: i32, %arg1: i32) -> (i32, i32, i32) {
    %c0_i32 = arith.constant 0 : i32
    %c0_i32_0 = arith.constant 0 : i32
    %c0_i32_1 = arith.constant 0 : i32
    return %arg0, %c0_i32, %c0_i32_0 : i32, i32, i32
  }
  func.func @transform_1(%arg0: i32, %arg1: i32) -> (i32, i32, i32) {
    %c0_i32 = arith.constant 0 : i32
    %c0_i32_0 = arith.constant 0 : i32
    %c0_i32_1 = arith.constant 0 : i32
    %c0_i32_2 = arith.constant 0 : i32
    return %c0_i32, %c0_i32_0, %c0_i32_1 : i32, i32, i32
  }
  func.func @transform_2(%arg0: i32, %arg1: i32) -> (i32, i32) {
    %c0_i32 = arith.constant 0 : i32
    %c0_i32_0 = arith.constant 0 : i32
    %c0_i32_1 = arith.constant 0 : i32
    return %c0_i32, %c0_i32_0 : i32, i32
  }
  func.func @transform_3(%arg0: i32, %arg1: i32) -> (i32, i32) {
    %c0_i32 = arith.constant 0 : i32
    %c0_i32_0 = arith.constant 0 : i32
    %c0_i32_1 = arith.constant 0 : i32
    return %c0_i32, %c0_i32_0 : i32, i32
  }
  func.func @transform_4(%arg0: i32, %arg1: i32) -> (i32, i32, i32) {
    %c0_i32 = arith.constant 0 : i32
    %c0_i32_0 = arith.constant 0 : i32
    return %arg0, %arg1, %c0_i32 : i32, i32, i32
  }
}

</mosaic_0001>

<llo_original>
// kernel: _lambda_.5
$region0: #{_lambda_.5}
  #allocation0 [shape = 'u32[]', space=smem, size = 0x4, offset = 0x4, fixed_abs, tag = 'smem constant byte address 0x4 - core index']
  #allocation1 [shape = 'u32[144,128]{1,0:T(1,128)}', space=vmem, size = 0x12000, scoped, tag = 'internal scratch']
  #allocation2 [shape = 'f32[256,128]{1,0:T(8,128)}', space=vmem, size = 0x20000, scoped, tag = 'scratch operand']
  %s0 = inlined_call_operand.vmem [shape: bf16[2,544,128], index: 0, kind: input, shape index: {}]
  %s1 = inlined_call_operand.vmem [shape: bf16[2,128,128], index: 1, kind: input, shape index: {}]
  %s2 = inlined_call_operand.vmem [shape: f32[1,128], index: 2, kind: input, shape index: {}]
  %s3 = inlined_call_operand.vmem [shape: f32[1,128], index: 3, kind: input, shape index: {}]
  %s4 = inlined_call_operand.vmem [shape: bf16[2,512,8], index: 4, kind: output, shape index: {}]
  %s5 = sld [smem:[#allocation0]]
  $region49: #{_lambda_.5} parent=0
    _
  %s7 = ssub.s32 1, %s5
  %s8 = scalar_select 0, %s7, %s5
  loop: start=0, step=1, limit=6
  $region2: #{_lambda_.5} parent=0 // loop_pre_header
    _
  $region3: #{_lambda_.5} parent=0 // loop_header
    %s10 = sphi 0, %s14
    %p11 = scmp.ge.s32.totalorder %s10, 6
    %s17 = sphi 0, %s29
    %s18 = sphi 0, %s25
    %s19 = sphi 0, %s17
    %s20 = sphi 0, %s18
    %s21 = sphi 0, %s19
    %s22 = sphi 0, %s20
    %s32 = sphi 0, %s34
    %s35 = sphi 0, %s32
    %s36 = sphi 0, %s35
    %s52 = sphi 0, %s36
    %s56 = sphi 0, %s56
    %s58 = sphi 0, %s56
    %s59 = sphi 0, %s58
    %s73 = sphi 0, %s59
    %s77 = sphi 0, %s77
    %s79 = sphi 0, %s77
    %s80 = sphi 0, %s79
    %s94 = sphi 0, %s80
    %s98 = sphi 0, %s98
    %s100 = sphi 0, %s98
    %s101 = sphi 0, %s100
    %s115 = sphi 0, %s101
    %s123 = sphi 0, %s125
    %s126 = sphi 0, %s123
    %s127 = sphi 0, %s126
    %s143 = sphi 0, %s127
  $region4: #{_lambda_.5} parent=0 // loop_header_branch
    %13 = sbr.rel (%p11) target = $region8
  $region5: #{_lambda_.5} parent=0 // loop_body
    %s15 = ssub.s32 %s10, 1
    %s16 = ssub.s32 %s10, 2
    %s23 = sadd.s32 1, %s18
    %p24 = scmp.ge.s32.totalorder %s23, 2
    %s25 = scalar_select %p24, 0, %s23
    %s26 = sadd.s32 1, %s17
    %s27 = scalar_select %p24, %s26, %s17
    %p28 = scmp.ge.s32.totalorder %s27, 2
    %s29 = scalar_select %p28, 0, %s27
    %s30 = ssub.s32 %s17, %s29
    %p31 = scmp.eq.s32.totalorder %s30, 0
    %s33 = sadd.s32 %s32, 1
    %s34 = scalar_select %p31, %s32, %s33
    %p37 = pneg %p31
    %p38 = scmp.eq.s32.totalorder %s10, 3
    %p39 = por %p37, %p38
    %p40 = scmp.ne.s32.totalorder %s32, %s35
    %p41 = scmp.eq.s32.totalorder %s10, 0
    %p42 = por %p40, %p41
    %p43 = scmp.ne.s32.totalorder %s32, %s35
    %p44 = scmp.eq.s32.totalorder %s15, 3
    %p45 = por %p43, %p44
    %p46 = scmp.ne.s32.totalorder %s35, %s36
    %p47 = scmp.eq.s32.totalorder %s15, 0
    %p48 = por %p46, %p47
    %p49 = scmp.ne.s32.totalorder %s35, %s36
    %p50 = scmp.eq.s32.totalorder %s16, 3
    %p51 = por %p49, %p50
    %p53 = scmp.ne.s32.totalorder %s36, %s52
    %p54 = scmp.eq.s32.totalorder %s16, 0
    %p55 = por %p53, %p54
    %s57 = sadd.s32 %s56, 1
    %p60 = scmp.eq.s32.totalorder %s10, 3
    %p61 = scmp.ne.s32.totalorder %s56, %s58
    %p62 = scmp.eq.s32.totalorder %s10, 0
    %p63 = por %p61, %p62
    %p64 = scmp.ne.s32.totalorder %s56, %s58
    %p65 = scmp.eq.s32.totalorder %s15, 3
    %p66 = por %p64, %p65
    %p67 = scmp.ne.s32.totalorder %s58, %s59
    %p68 = scmp.eq.s32.totalorder %s15, 0
    %p69 = por %p67, %p68
    %p70 = scmp.ne.s32.totalorder %s58, %s59
    %p71 = scmp.eq.s32.totalorder %s16, 3
    %p72 = por %p70, %p71
    %p74 = scmp.ne.s32.totalorder %s59, %s73
    %p75 = scmp.eq.s32.totalorder %s16, 0
    %p76 = por %p74, %p75
    %s78 = sadd.s32 %s77, 1
    %p81 = scmp.eq.s32.totalorder %s10, 3
    %p82 = scmp.ne.s32.totalorder %s77, %s79
    %p83 = scmp.eq.s32.totalorder %s10, 0
    %p84 = por %p82, %p83
    %p85 = scmp.ne.s32.totalorder %s77, %s79
    %p86 = scmp.eq.s32.totalorder %s15, 3
    %p87 = por %p85, %p86
    %p88 = scmp.ne.s32.totalorder %s79, %s80
    %p89 = scmp.eq.s32.totalorder %s15, 0
    %p90 = por %p88, %p89
    %p91 = scmp.ne.s32.totalorder %s79, %s80
    %p92 = scmp.eq.s32.totalorder %s16, 3
    %p93 = por %p91, %p92
    %p95 = scmp.ne.s32.totalorder %s80, %s94
    %p96 = scmp.eq.s32.totalorder %s16, 0
    %p97 = por %p95, %p96
    %s99 = sadd.s32 %s98, 1
    %p102 = scmp.eq.s32.totalorder %s10, 3
    %p103 = scmp.ne.s32.totalorder %s98, %s100
    %p104 = scmp.eq.s32.totalorder %s10, 0
    %p105 = por %p103, %p104
    %p106 = scmp.ne.s32.totalorder %s98, %s100
    %p107 = scmp.eq.s32.totalorder %s15, 3
    %p108 = por %p106, %p107
    %p109 = scmp.ne.s32.totalorder %s100, %s101
    %p110 = scmp.eq.s32.totalorder %s15, 0
    %p111 = por %p109, %p110
    %p112 = scmp.ne.s32.totalorder %s100, %s101
    %p113 = scmp.eq.s32.totalorder %s16, 3
    %p114 = por %p112, %p113
    %p116 = scmp.ne.s32.totalorder %s101, %s115
    %p117 = scmp.eq.s32.totalorder %s16, 0
    %p118 = por %p116, %p117
    %s119 = ssub.s32 %s17, %s29
    %s120 = ssub.s32 %s18, %s25
    %s121 = sor.u32 %s119, %s120
    %p122 = scmp.eq.s32.totalorder %s121, 0
    %s124 = sadd.s32 %s123, 1
    %s125 = scalar_select %p122, %s123, %s124
    %p128 = pneg %p122
    %p129 = scmp.eq.s32.totalorder %s10, 3
    %p130 = por %p128, %p129
    %p131 = scmp.ne.s32.totalorder %s123, %s126
    %p132 = scmp.eq.s32.totalorder %s10, 0
    %p133 = por %p131, %p132
    %p134 = scmp.ne.s32.totalorder %s123, %s126
    %p135 = scmp.eq.s32.totalorder %s15, 3
    %p136 = por %p134, %p135
    %p137 = scmp.ne.s32.totalorder %s126, %s127
    %p138 = scmp.eq.s32.totalorder %s15, 0
    %p139 = por %p137, %p138
    %p140 = scmp.ne.s32.totalorder %s126, %s127
    %p141 = scmp.eq.s32.totalorder %s16, 3
    %p142 = por %p140, %p141
    %p144 = scmp.ne.s32.totalorder %s127, %s143
    %p145 = scmp.eq.s32.totalorder %s16, 0
    %p146 = por %p144, %p145
    %p147 = scmp.le.s32.totalorder 1, %s10
    %p148 = scmp.lt.s32.totalorder %s10, 5
    %p149 = pnand %p147, %p148
    %p150 = pneg %p149
    // Predicated region
    $region9: #{_lambda_.5} parent=5 // pred_check
      _
    $region10: #{_lambda_.5} parent=5 // pred_check_branch
      %152 = sbr.rel (%p149) target = $region12
    $region11: #{_lambda_.5} parent=5 // pred_region
      %s153 = ssub.s32 %s10, 1
      // Predicated region
      $region13: #{_lambda_.5} parent=11 // pred_check
        %p154 = pneg %p69
      $region14: #{_lambda_.5} parent=11 // pred_check_branch
        %156 = sbr.rel (%p154) target = $region16
      $region15: #{_lambda_.5} parent=11 // pred_region
        _
      $region16: #{_lambda_.5} parent=11 // pred_fallthru
        _
      // Predicated region
      $region17: #{_lambda_.5} parent=11 // pred_check
        %p157 = pneg %p90
      $region18: #{_lambda_.5} parent=11 // pred_check_branch
        %159 = sbr.rel (%p157) target = $region20
      $region19: #{_lambda_.5} parent=11 // pred_region
        _
      $region20: #{_lambda_.5} parent=11 // pred_fallthru
        _
      // Predicated region
      $region21: #{_lambda_.5} parent=11 // pred_check
        %p160 = pneg %p111
      $region22: #{_lambda_.5} parent=11 // pred_check_branch
        %162 = sbr.rel (%p160) target = $region24
      $region23: #{_lambda_.5} parent=11 // pred_region
        _
      $region24: #{_lambda_.5} parent=11 // pred_fallthru
        _
    $region12: #{_lambda_.5} parent=5 // pred_fallthru
      _
    %p163 = scmp.lt.s32.totalorder %s10, 4
    // Predicated region
    $region25: #{_lambda_.5} parent=5 // pred_check
      %p164 = pneg %p163
    $region26: #{_lambda_.5} parent=5 // pred_check_branch
      %166 = sbr.rel (%p164) target = $region28
    $region27: #{_lambda_.5} parent=5 // pred_region
      // Predicated region
      $region29: #{_lambda_.5} parent=27 // pred_check
        %p167 = pneg %p42
      $region30: #{_lambda_.5} parent=27 // pred_check_branch
        %169 = sbr.rel (%p167) target = $region32
      $region31: #{_lambda_.5} parent=27 // pred_region
        %p170 = scmp.lt.s32.totalorder %s17, 1
        %s171 = scalar_select %p170, %s17, 1
        %s172 = smul.addr %s171, 68
        %s173 = smul.addr %s172, 4
        %s174 = scalar_lea.vmem %s0, %s173
      $region32: #{_lambda_.5} parent=27 // pred_fallthru
        _
    $region28: #{_lambda_.5} parent=5 // pred_fallthru
      _
    %p175 = scmp.le.s32.totalorder 1, %s10
    %p176 = scmp.lt.s32.totalorder %s10, 5
    %p177 = pnand %p175, %p176
    %p178 = pneg %p177
    // Predicated region
    $region33: #{_lambda_.5} parent=5 // pred_check
      _
    $region34: #{_lambda_.5} parent=5 // pred_check_branch
      %180 = sbr.rel (%p177) target = $region36
    $region35: #{_lambda_.5} parent=5 // pred_region
      %s181 = ssub.s32 %s10, 1
      %p182 = scmp.lt.s32.totalorder %s19, 1
      %s183 = scalar_select %p182, %s19, 1
      %s184 = smul.addr %s183, 68
      %s185 = smul.addr %s184, 4
      %s186 = scalar_lea.vmem %s0, %s185
      %p187 = pneg %p48
      %p188 = pneg %p45
      %p189 = pneg %p69
      %p190 = pneg %p66
      %p191 = pneg %p90
      %p192 = pneg %p87
      %p193 = pneg %p111
      %p194 = pneg %p108
      %p195 = pneg %p139
      %p196 = pneg %p136
      %s197 = smul.u32 32, %s20
      %p198 = scmp.lt.s32.totalorder %s19, 1
      %s199 = scalar_select %p198, %s19, 1
      %p200 = scmp.lt.s32.totalorder %s197, 63
      %s201 = scalar_select %p200, %s197, 63
      %s202 = smul.addr %s199, 64
      %s203 = sadd.s32 %s201, %s202
      %s204 = smul.addr %s203, 4
      %s205 = scalar_lea.vmem %s4, %s204
      %p206 = scmp.lt.s32.totalorder %s19, 1
      %s207 = scalar_select %p206, %s19, 1
      %s208 = smul.addr %s207, 68
      %s209 = smul.addr %s208, 4
      %s210 = scalar_lea.vmem %s0, %s209
      %s211 = smul.u32 32, %s20
      %p212 = scmp.lt.s32.totalorder %s19, 1
      %s213 = scalar_select %p212, %s19, 1
      %p214 = scmp.lt.s32.totalorder %s211, 63
      %s215 = scalar_select %p214, %s211, 63
      %s216 = smul.addr %s213, 64
      %s217 = sadd.s32 %s215, %s216
      %s218 = smul.addr %s217, 4
      %s219 = scalar_lea.vmem %s4, %s218
      %s220 = smul.u32 32, %s20
      %s222 = smul.u32 %s20, 256
      %s223 = sshra.s32 %s222, 3
      %s224 = sand.u32 %s222, 7
      %s225 = smul.addr %s223, 4
      %s226 = scalar_lea.vmem %s210, %s225
      %v227 = vld [vmem:[%s226] sm:$0xf]
      %v228 = vld [vmem:[%s226 + $0x4] sm:$0xf]
      %v229 = vld [vmem:[%s226 + $0x8] sm:$0xf]
      %v230 = vld [vmem:[%s226 + $0xc] sm:$0xf]
      %v231 = vld [vmem:[%s226 + $0x10] sm:$0xf]
      %v232 = vld [vmem:[%s226 + $0x14] sm:$0xf]
      %v233 = vld [vmem:[%s226 + $0x18] sm:$0xf]
      %v234 = vld [vmem:[%s226 + $0x1c] sm:$0xf]
      %v235 = vld [vmem:[%s226 + $0x20] sm:$0xf]
      %v236 = vld [vmem:[%s226 + $0x24] sm:$0xf]
      %v237 = vld [vmem:[%s226 + $0x28] sm:$0xf]
      %v238 = vld [vmem:[%s226 + $0x2c] sm:$0xf]
      %v239 = vld [vmem:[%s226 + $0x30] sm:$0xf]
      %v240 = vld [vmem:[%s226 + $0x34] sm:$0xf]
      %v241 = vld [vmem:[%s226 + $0x38] sm:$0xf]
      %v242 = vld [vmem:[%s226 + $0x3c] sm:$0xf]
      %v243 = vld [vmem:[%s226 + $0x40] sm:$0xf]
      %v244 = vld [vmem:[%s226 + $0x44] sm:$0xf]
      %v245 = vld [vmem:[%s226 + $0x48] sm:$0xf]
      %v246 = vld [vmem:[%s226 + $0x4c] sm:$0xf]
      %v247 = vld [vmem:[%s226 + $0x50] sm:$0xf]
      %v248 = vld [vmem:[%s226 + $0x54] sm:$0xf]
      %v249 = vld [vmem:[%s226 + $0x58] sm:$0xf]
      %v250 = vld [vmem:[%s226 + $0x5c] sm:$0xf]
      %v251 = vld [vmem:[%s226 + $0x60] sm:$0xf]
      %v252 = vld [vmem:[%s226 + $0x64] sm:$0xf]
      %v253 = vld [vmem:[%s226 + $0x68] sm:$0xf]
      %v254 = vld [vmem:[%s226 + $0x6c] sm:$0xf]
      %v255 = vld [vmem:[%s226 + $0x70] sm:$0xf]
      %v256 = vld [vmem:[%s226 + $0x74] sm:$0xf]
      %v257 = vld [vmem:[%s226 + $0x78] sm:$0xf]
      %v258 = vld [vmem:[%s226 + $0x7c] sm:$0xf]
      %v259 = vld [vmem:[%s1] sm:$0xf]
      %v260 = vld [vmem:[%s1 + $0x4] sm:$0xf]
      %v261 = vld [vmem:[%s1 + $0x8] sm:$0xf]
      %v262 = vld [vmem:[%s1 + $0xc] sm:$0xf]
      %v263 = vld [vmem:[%s1 + $0x10] sm:$0xf]
      %v264 = vld [vmem:[%s1 + $0x14] sm:$0xf]
      %v265 = vld [vmem:[%s1 + $0x18] sm:$0xf]
      %v266 = vld [vmem:[%s1 + $0x1c] sm:$0xf]
      %v267 = vld [vmem:[%s1 + $0x20] sm:$0xf]
      %v268 = vld [vmem:[%s1 + $0x24] sm:$0xf]
      %v269 = vld [vmem:[%s1 + $0x28] sm:$0xf]
      %v270 = vld [vmem:[%s1 + $0x2c] sm:$0xf]
      %v271 = vld [vmem:[%s1 + $0x30] sm:$0xf]
      %v272 = vld [vmem:[%s1 + $0x34] sm:$0xf]
      %v273 = vld [vmem:[%s1 + $0x38] sm:$0xf]
      %v274 = vld [vmem:[%s1 + $0x3c] sm:$0xf]
      %v307 = vunpack.c.l.b16 %v227
      %v308 = vunpack.c.l.b16 %v228
      %v309 = vunpack.c.l.b16 %v229
      %v310 = vunpack.c.l.b16 %v230
      %v311 = vunpack.c.l.b16 %v231
      %v312 = vunpack.c.l.b16 %v232
      %v313 = vunpack.c.l.b16 %v233
      %v314 = vunpack.c.l.b16 %v234
      %v315 = vunpack.c.l.b16 %v235
      %v316 = vunpack.c.l.b16 %v236
      %v317 = vunpack.c.l.b16 %v237
      %v318 = vunpack.c.l.b16 %v238
      %v319 = vunpack.c.l.b16 %v239
      %v320 = vunpack.c.l.b16 %v240
      %v321 = vunpack.c.l.b16 %v241
      %v322 = vunpack.c.l.b16 %v242
      %v323 = vunpack.c.l.b16 %v243
      %v324 = vunpack.c.l.b16 %v244
      %v325 = vunpack.c.l.b16 %v245
      %v326 = vunpack.c.l.b16 %v246
      %v327 = vunpack.c.l.b16 %v247
      %v328 = vunpack.c.l.b16 %v248
      %v329 = vunpack.c.l.b16 %v249
      %v330 = vunpack.c.l.b16 %v250
      %v331 = vunpack.c.l.b16 %v251
      %v332 = vunpack.c.l.b16 %v252
      %v333 = vunpack.c.l.b16 %v253
      %v334 = vunpack.c.l.b16 %v254
      %v335 = vunpack.c.l.b16 %v255
      %v336 = vunpack.c.l.b16 %v256
      %v337 = vunpack.c.l.b16 %v257
      %v338 = vunpack.c.l.b16 %v258
      %v339 = vpack.c.b16 %v308, %v307
      %v340 = vpack.c.b16 %v310, %v309
      %v341 = vpack.c.b16 %v312, %v311
      %v342 = vpack.c.b16 %v314, %v313
      %v343 = vpack.c.b16 %v316, %v315
      %v344 = vpack.c.b16 %v318, %v317
      %v345 = vpack.c.b16 %v320, %v319
      %v346 = vpack.c.b16 %v322, %v321
      %v347 = vpack.c.b16 %v324, %v323
      %v348 = vpack.c.b16 %v326, %v325
      %v349 = vpack.c.b16 %v328, %v327
      %v350 = vpack.c.b16 %v330, %v329
      %v351 = vpack.c.b16 %v332, %v331
      %v352 = vpack.c.b16 %v334, %v333
      %v353 = vpack.c.b16 %v336, %v335
      %v354 = vpack.c.b16 %v338, %v337
      %v387 = vunpack.c.l.b16 %v259
      %v388 = vunpack.c.l.b16 %v260
      %v389 = vunpack.c.l.b16 %v261
      %v390 = vunpack.c.l.b16 %v262
      %v391 = vunpack.c.l.b16 %v263
      %v392 = vunpack.c.l.b16 %v264
      %v393 = vunpack.c.l.b16 %v265
      %v394 = vunpack.c.l.b16 %v266
      %v395 = vunpack.c.l.b16 %v267
      %v396 = vunpack.c.l.b16 %v268
      %v397 = vunpack.c.l.b16 %v269
      %v398 = vunpack.c.l.b16 %v270
      %v399 = vunpack.c.l.b16 %v271
      %v400 = vunpack.c.l.b16 %v272
      %v401 = vunpack.c.l.b16 %v273
      %v402 = vunpack.c.l.b16 %v274
      %v403 = vpack.c.b16 %v388, %v387
      %v404 = vpack.c.b16 %v390, %v389
      %v405 = vpack.c.b16 %v392, %v391
      %v406 = vpack.c.b16 %v394, %v393
      %v407 = vpack.c.b16 %v396, %v395
      %v408 = vpack.c.b16 %v398, %v397
      %v409 = vpack.c.b16 %v400, %v399
      %v410 = vpack.c.b16 %v402, %v401
      %419 = vmatprep.subr.bf16.mxu0 0
      %420 = vmatpush1.bf16.msra.mxu0 %v410
      %421 = vmatprep.subr.bf16.mxu0 0
      %422 = vmatpush1.bf16.msra.mxu0 %v409
      %423 = vmatprep.subr.bf16.mxu0 0
      %424 = vmatpush1.bf16.msra.mxu0 %v408
      %425 = vmatprep.subr.bf16.mxu0 0
      %426 = vmatpush1.bf16.msra.mxu0 %v407
      %427 = vmatprep.subr.bf16.mxu0 0
      %428 = vmatpush1.bf16.msra.mxu0 %v406
      %429 = vmatprep.subr.bf16.mxu0 0
      %430 = vmatpush1.bf16.msra.mxu0 %v405
      %431 = vmatprep.subr.bf16.mxu0 0
      %432 = vmatpush1.bf16.msra.mxu0 %v404
      %433 = vmatprep.subr.bf16.mxu0 0
      %434 = vmatpush1.bf16.msra.mxu0 %v403
      %435 = vmatprep.subr.bf16.mxu0 0
      %436 = vmatpush2.bf16.msra.mxu0 0
      %437 = vmatprep.subr.bf16.mxu0 0
      %438 = vmatpush2.bf16.msra.mxu0 0
      %439 = vmatprep.subr.bf16.mxu0 0
      %440 = vmatpush2.bf16.msra.mxu0 0
      %441 = vmatprep.subr.bf16.mxu0 0
      %442 = vmatpush2.bf16.msra.mxu0 0
      %443 = vmatprep.subr.bf16.mxu0 0
      %444 = vmatpush2.bf16.msra.mxu0 0
      %445 = vmatprep.subr.bf16.mxu0 0
      %446 = vmatpush2.bf16.msra.mxu0 0
      %447 = vmatprep.subr.bf16.mxu0 0
      %448 = vmatpush2.bf16.msra.mxu0 0
      %449 = vmatprep.subr.bf16.mxu0 0
      %450 = vmatpush2.bf16.msra.mxu0 0
      %451 = vmatprep.mubr.bf16.mxu0 0
      %452 = vmatmul.mubr.bf16.gmra.mxu0 %v339
      %v453 = vpop.f32.mrf.mxu0
      %v454 = vadd.f32 0.0, %v453
      %v455 = vpop.f32.mrf.mxu0
      %v456 = vpop.f32.mrf.mxu0
      %v457 = vadd.f32 0.0, %v456
      %v458 = vpop.f32.mrf.mxu0
      %459 = vmatprep.mubr.bf16.mxu0 0
      %460 = vmatmul.mubr.bf16.gmra.mxu0 %v340
      %v461 = vpop.f32.mrf.mxu0
      %v462 = vadd.f32 0.0, %v461
      %v463 = vpop.f32.mrf.mxu0
      %v464 = vpop.f32.mrf.mxu0
      %v465 = vadd.f32 0.0, %v464
      %v466 = vpop.f32.mrf.mxu0
      %467 = vmatprep.mubr.bf16.mxu0 0
      %468 = vmatmul.mubr.bf16.gmra.mxu0 %v341
      %v469 = vpop.f32.mrf.mxu0
      %v470 = vadd.f32 0.0, %v469
      %v471 = vpop.f32.mrf.mxu0
      %v472 = vpop.f32.mrf.mxu0
      %v473 = vadd.f32 0.0, %v472
      %v474 = vpop.f32.mrf.mxu0
      %475 = vmatprep.mubr.bf16.mxu0 0
      %476 = vmatmul.mubr.bf16.gmra.mxu0 %v342
      %v477 = vpop.f32.mrf.mxu0
      %v478 = vadd.f32 0.0, %v477
      %v479 = vpop.f32.mrf.mxu0
      %v480 = vpop.f32.mrf.mxu0
      %v481 = vadd.f32 0.0, %v480
      %v482 = vpop.f32.mrf.mxu0
      %483 = vmatprep.mubr.bf16.mxu0 0
      %484 = vmatmul.mubr.bf16.gmra.mxu0 %v343
      %v485 = vpop.f32.mrf.mxu0
      %v486 = vadd.f32 0.0, %v485
      %v487 = vpop.f32.mrf.mxu0
      %v488 = vpop.f32.mrf.mxu0
      %v489 = vadd.f32 0.0, %v488
      %v490 = vpop.f32.mrf.mxu0
      %491 = vmatprep.mubr.bf16.mxu0 0
      %492 = vmatmul.mubr.bf16.gmra.mxu0 %v344
      %v493 = vpop.f32.mrf.mxu0
      %v494 = vadd.f32 0.0, %v493
      %v495 = vpop.f32.mrf.mxu0
      %v496 = vpop.f32.mrf.mxu0
      %v497 = vadd.f32 0.0, %v496
      %v498 = vpop.f32.mrf.mxu0
      %499 = vmatprep.mubr.bf16.mxu0 0
      %500 = vmatmul.mubr.bf16.gmra.mxu0 %v345
      %v501 = vpop.f32.mrf.mxu0
      %v502 = vadd.f32 0.0, %v501
      %v503 = vpop.f32.mrf.mxu0
      %v504 = vpop.f32.mrf.mxu0
      %v505 = vadd.f32 0.0, %v504
      %v506 = vpop.f32.mrf.mxu0
      %507 = vmatprep.mubr.bf16.mxu0 0
      %508 = vmatmul.mubr.bf16.gmra.mxu0 %v346
      %v509 = vpop.f32.mrf.mxu0
      %v510 = vadd.f32 0.0, %v509
      %v511 = vpop.f32.mrf.mxu0
      %v512 = vpop.f32.mrf.mxu0
      %v513 = vadd.f32 0.0, %v512
      %v514 = vpop.f32.mrf.mxu0
      %515 = vmatprep.mubr.bf16.mxu0 0
      %516 = vmatmul.mubr.bf16.gmra.mxu0 %v347
      %v517 = vpop.f32.mrf.mxu0
      %v518 = vadd.f32 0.0, %v517
      %v519 = vpop.f32.mrf.mxu0
      %v520 = vpop.f32.mrf.mxu0
      %v521 = vadd.f32 0.0, %v520
      %v522 = vpop.f32.mrf.mxu0
      %523 = vmatprep.mubr.bf16.mxu0 0
      %524 = vmatmul.mubr.bf16.gmra.mxu0 %v348
      %v525 = vpop.f32.mrf.mxu0
      %v526 = vadd.f32 0.0, %v525
      %v527 = vpop.f32.mrf.mxu0
      %v528 = vpop.f32.mrf.mxu0
      %v529 = vadd.f32 0.0, %v528
      %v530 = vpop.f32.mrf.mxu0
      %531 = vmatprep.mubr.bf16.mxu0 0
      %532 = vmatmul.mubr.bf16.gmra.mxu0 %v349
      %v533 = vpop.f32.mrf.mxu0
      %v534 = vadd.f32 0.0, %v533
      %v535 = vpop.f32.mrf.mxu0
      %v536 = vpop.f32.mrf.mxu0
      %v537 = vadd.f32 0.0, %v536
      %v538 = vpop.f32.mrf.mxu0
      %539 = vmatprep.mubr.bf16.mxu0 0
      %540 = vmatmul.mubr.bf16.gmra.mxu0 %v350
      %v541 = vpop.f32.mrf.mxu0
      %v542 = vadd.f32 0.0, %v541
      %v543 = vpop.f32.mrf.mxu0
      %v544 = vpop.f32.mrf.mxu0
      %v545 = vadd.f32 0.0, %v544
      %v546 = vpop.f32.mrf.mxu0
      %547 = vmatprep.mubr.bf16.mxu0 0
      %548 = vmatmul.mubr.bf16.gmra.mxu0 %v351
      %v549 = vpop.f32.mrf.mxu0
      %v550 = vadd.f32 0.0, %v549
      %v551 = vpop.f32.mrf.mxu0
      %v552 = vpop.f32.mrf.mxu0
      %v553 = vadd.f32 0.0, %v552
      %v554 = vpop.f32.mrf.mxu0
      %555 = vmatprep.mubr.bf16.mxu0 0
      %556 = vmatmul.mubr.bf16.gmra.mxu0 %v352
      %v557 = vpop.f32.mrf.mxu0
      %v558 = vadd.f32 0.0, %v557
      %v559 = vpop.f32.mrf.mxu0
      %v560 = vpop.f32.mrf.mxu0
      %v561 = vadd.f32 0.0, %v560
      %v562 = vpop.f32.mrf.mxu0
      %563 = vmatprep.mubr.bf16.mxu0 0
      %564 = vmatmul.mubr.bf16.gmra.mxu0 %v353
      %v565 = vpop.f32.mrf.mxu0
      %v566 = vadd.f32 0.0, %v565
      %v567 = vpop.f32.mrf.mxu0
      %v568 = vpop.f32.mrf.mxu0
      %v569 = vadd.f32 0.0, %v568
      %v570 = vpop.f32.mrf.mxu0
      %571 = vmatprep.mubr.bf16.mxu0 0
      %572 = vmatmul.mubr.bf16.gmra.mxu0 %v354
      %v573 = vpop.f32.mrf.mxu0
      %v574 = vadd.f32 0.0, %v573
      %v575 = vpop.f32.mrf.mxu0
      %v576 = vpop.f32.mrf.mxu0
      %v577 = vadd.f32 0.0, %v576
      %v578 = vpop.f32.mrf.mxu0
      %579 = vdwg.mxu0
      %580 = vst [vmem:[#allocation2] sm:$0xff] %v454
      %581 = vst [vmem:[#allocation2 + $0x8] sm:$0xff] %v457
      %582 = vst [vmem:[#allocation2 + $0x10] sm:$0xff] %v462
      %583 = vst [vmem:[#allocation2 + $0x18] sm:$0xff] %v465
      %584 = vst [vmem:[#allocation2 + $0x20] sm:$0xff] %v470
      %585 = vst [vmem:[#allocation2 + $0x28] sm:$0xff] %v473
      %586 = vst [vmem:[#allocation2 + $0x30] sm:$0xff] %v478
      %587 = vst [vmem:[#allocation2 + $0x38] sm:$0xff] %v481
      %588 = vst [vmem:[#allocation2 + $0x40] sm:$0xff] %v486
      %589 = vst [vmem:[#allocation2 + $0x48] sm:$0xff] %v489
      %590 = vst [vmem:[#allocation2 + $0x50] sm:$0xff] %v494
      %591 = vst [vmem:[#allocation2 + $0x58] sm:$0xff] %v497
      %592 = vst [vmem:[#allocation2 + $0x60] sm:$0xff] %v502
      %593 = vst [vmem:[#allocation2 + $0x68] sm:$0xff] %v505
      %594 = vst [vmem:[#allocation2 + $0x70] sm:$0xff] %v510
      %595 = vst [vmem:[#allocation2 + $0x78] sm:$0xff] %v513
      %596 = vst [vmem:[#allocation2 + $0x80] sm:$0xff] %v518
      %597 = vst [vmem:[#allocation2 + $0x88] sm:$0xff] %v521
      %598 = vst [vmem:[#allocation2 + $0x90] sm:$0xff] %v526
      %599 = vst [vmem:[#allocation2 + $0x98] sm:$0xff] %v529
      %600 = vst [vmem:[#allocation2 + $0xa0] sm:$0xff] %v534
      %601 = vst [vmem:[#allocation2 + $0xa8] sm:$0xff] %v537
      %602 = vst [vmem:[#allocation2 + $0xb0] sm:$0xff] %v542
      %603 = vst [vmem:[#allocation2 + $0xb8] sm:$0xff] %v545
      %604 = vst [vmem:[#allocation2 + $0xc0] sm:$0xff] %v550
      %605 = vst [vmem:[#allocation2 + $0xc8] sm:$0xff] %v553
      %606 = vst [vmem:[#allocation2 + $0xd0] sm:$0xff] %v558
      %607 = vst [vmem:[#allocation2 + $0xd8] sm:$0xff] %v561
      %608 = vst [vmem:[#allocation2 + $0xe0] sm:$0xff] %v566
      %609 = vst [vmem:[#allocation2 + $0xe8] sm:$0xff] %v569
      %610 = vst [vmem:[#allocation2 + $0xf0] sm:$0xff] %v574
      %611 = vst [vmem:[#allocation2 + $0xf8] sm:$0xff] %v577
      %s612 = sadd.s32 %s222, 32
      %s613 = sshra.s32 %s612, 3
      %s614 = sand.u32 %s612, 7
      %s615 = smul.addr %s613, 4
      %s616 = scalar_lea.vmem %s210, %s615
      %v617 = vld [vmem:[%s616] sm:$0xf]
      %v618 = vld [vmem:[%s616 + $0x4] sm:$0xf]
      %v619 = vld [vmem:[%s616 + $0x8] sm:$0xf]
      %v620 = vld [vmem:[%s616 + $0xc] sm:$0xf]
      %v621 = vld [vmem:[%s616 + $0x10] sm:$0xf]
      %v622 = vld [vmem:[%s616 + $0x14] sm:$0xf]
      %v623 = vld [vmem:[%s616 + $0x18] sm:$0xf]
      %v624 = vld [vmem:[%s616 + $0x1c] sm:$0xf]
      %v625 = vld [vmem:[%s616 + $0x20] sm:$0xf]
      %v626 = vld [vmem:[%s616 + $0x24] sm:$0xf]
      %v627 = vld [vmem:[%s616 + $0x28] sm:$0xf]
      %v628 = vld [vmem:[%s616 + $0x2c] sm:$0xf]
      %v629 = vld [vmem:[%s616 + $0x30] sm:$0xf]
      %v630 = vld [vmem:[%s616 + $0x34] sm:$0xf]
      %v631 = vld [vmem:[%s616 + $0x38] sm:$0xf]
      %v632 = vld [vmem:[%s616 + $0x3c] sm:$0xf]
      %v633 = vld [vmem:[%s616 + $0x40] sm:$0xf]
      %v634 = vld [vmem:[%s616 + $0x44] sm:$0xf]
      %v635 = vld [vmem:[%s616 + $0x48] sm:$0xf]
      %v636 = vld [vmem:[%s616 + $0x4c] sm:$0xf]
      %v637 = vld [vmem:[%s616 + $0x50] sm:$0xf]
      %v638 = vld [vmem:[%s616 + $0x54] sm:$0xf]
      %v639 = vld [vmem:[%s616 + $0x58] sm:$0xf]
      %v640 = vld [vmem:[%s616 + $0x5c] sm:$0xf]
      %v641 = vld [vmem:[%s616 + $0x60] sm:$0xf]
      %v642 = vld [vmem:[%s616 + $0x64] sm:$0xf]
      %v643 = vld [vmem:[%s616 + $0x68] sm:$0xf]
      %v644 = vld [vmem:[%s616 + $0x6c] sm:$0xf]
      %v645 = vld [vmem:[%s616 + $0x70] sm:$0xf]
      %v646 = vld [vmem:[%s616 + $0x74] sm:$0xf]
      %v647 = vld [vmem:[%s616 + $0x78] sm:$0xf]
      %v648 = vld [vmem:[%s616 + $0x7c] sm:$0xf]
      %s649 = scalar_lea.vmem %s1, 64
      %v650 = vld [vmem:[%s649] sm:$0xf]
      %v651 = vld [vmem:[%s649 + $0x4] sm:$0xf]
      %v652 = vld [vmem:[%s649 + $0x8] sm:$0xf]
      %v653 = vld [vmem:[%s649 + $0xc] sm:$0xf]
      %v654 = vld [vmem:[%s649 + $0x10] sm:$0xf]
      %v655 = vld [vmem:[%s649 + $0x14] sm:$0xf]
      %v656 = vld [vmem:[%s649 + $0x18] sm:$0xf]
      %v657 = vld [vmem:[%s649 + $0x1c] sm:$0xf]
      %v658 = vld [vmem:[%s649 + $0x20] sm:$0xf]
      %v659 = vld [vmem:[%s649 + $0x24] sm:$0xf]
      %v660 = vld [vmem:[%s649 + $0x28] sm:$0xf]
      %v661 = vld [vmem:[%s649 + $0x2c] sm:$0xf]
      %v662 = vld [vmem:[%s649 + $0x30] sm:$0xf]
      %v663 = vld [vmem:[%s649 + $0x34] sm:$0xf]
      %v664 = vld [vmem:[%s649 + $0x38] sm:$0xf]
      %v665 = vld [vmem:[%s649 + $0x3c] sm:$0xf]
      %v698 = vunpack.c.l.b16 %v617
      %v699 = vunpack.c.l.b16 %v618
      %v700 = vunpack.c.l.b16 %v619
      %v701 = vunpack.c.l.b16 %v620
      %v702 = vunpack.c.l.b16 %v621
      %v703 = vunpack.c.l.b16 %v622
      %v704 = vunpack.c.l.b16 %v623
      %v705 = vunpack.c.l.b16 %v624
      %v706 = vunpack.c.l.b16 %v625
      %v707 = vunpack.c.l.b16 %v626
      %v708 = vunpack.c.l.b16 %v627
      %v709 = vunpack.c.l.b16 %v628
      %v710 = vunpack.c.l.b16 %v629
      %v711 = vunpack.c.l.b16 %v630
      %v712 = vunpack.c.l.b16 %v631
      %v713 = vunpack.c.l.b16 %v632
      %v714 = vunpack.c.l.b16 %v633
      %v715 = vunpack.c.l.b16 %v634
      %v716 = vunpack.c.l.b16 %v635
      %v717 = vunpack.c.l.b16 %v636
      %v718 = vunpack.c.l.b16 %v637
      %v719 = vunpack.c.l.b16 %v638
      %v720 = vunpack.c.l.b16 %v639
      %v721 = vunpack.c.l.b16 %v640
      %v722 = vunpack.c.l.b16 %v641
      %v723 = vunpack.c.l.b16 %v642
      %v724 = vunpack.c.l.b16 %v643
      %v725 = vunpack.c.l.b16 %v644
      %v726 = vunpack.c.l.b16 %v645
      %v727 = vunpack.c.l.b16 %v646
      %v728 = vunpack.c.l.b16 %v647
      %v729 = vunpack.c.l.b16 %v648
      %v730 = vpack.c.b16 %v699, %v698
      %v731 = vpack.c.b16 %v701, %v700
      %v732 = vpack.c.b16 %v703, %v702
      %v733 = vpack.c.b16 %v705, %v704
      %v734 = vpack.c.b16 %v707, %v706
      %v735 = vpack.c.b16 %v709, %v708
      %v736 = vpack.c.b16 %v711, %v710
      %v737 = vpack.c.b16 %v713, %v712
      %v738 = vpack.c.b16 %v715, %v714
      %v739 = vpack.c.b16 %v717, %v716
      %v740 = vpack.c.b16 %v719, %v718
      %v741 = vpack.c.b16 %v721, %v720
      %v742 = vpack.c.b16 %v723, %v722
      %v743 = vpack.c.b16 %v725, %v724
      %v744 = vpack.c.b16 %v727, %v726
      %v745 = vpack.c.b16 %v729, %v728
      %v778 = vunpack.c.l.b16 %v650
      %v779 = vunpack.c.l.b16 %v651
      %v780 = vunpack.c.l.b16 %v652
      %v781 = vunpack.c.l.b16 %v653
      %v782 = vunpack.c.l.b16 %v654
      %v783 = vunpack.c.l.b16 %v655
      %v784 = vunpack.c.l.b16 %v656
      %v785 = vunpack.c.l.b16 %v657
      %v786 = vunpack.c.l.b16 %v658
      %v787 = vunpack.c.l.b16 %v659
      %v788 = vunpack.c.l.b16 %v660
      %v789 = vunpack.c.l.b16 %v661
      %v790 = vunpack.c.l.b16 %v662
      %v791 = vunpack.c.l.b16 %v663
      %v792 = vunpack.c.l.b16 %v664
      %v793 = vunpack.c.l.b16 %v665
      %v794 = vpack.c.b16 %v779, %v778
      %v795 = vpack.c.b16 %v781, %v780
      %v796 = vpack.c.b16 %v783, %v782
      %v797 = vpack.c.b16 %v785, %v784
      %v798 = vpack.c.b16 %v787, %v786
      %v799 = vpack.c.b16 %v789, %v788
      %v800 = vpack.c.b16 %v791, %v790
      %v801 = vpack.c.b16 %v793, %v792
      %810 = vmatprep.subr.bf16.mxu0 0
      %811 = vmatpush1.bf16.msra.mxu0 %v801
      %812 = vmatprep.subr.bf16.mxu0 0
      %813 = vmatpush1.bf16.msra.mxu0 %v800
      %814 = vmatprep.subr.bf16.mxu0 0
      %815 = vmatpush1.bf16.msra.mxu0 %v799
      %816 = vmatprep.subr.bf16.mxu0 0
      %817 = vmatpush1.bf16.msra.mxu0 %v798
      %818 = vmatprep.subr.bf16.mxu0 0
      %819 = vmatpush1.bf16.msra.mxu0 %v797
      %820 = vmatprep.subr.bf16.mxu0 0
      %821 = vmatpush1.bf16.msra.mxu0 %v796
      %822 = vmatprep.subr.bf16.mxu0 0
      %823 = vmatpush1.bf16.msra.mxu0 %v795
      %824 = vmatprep.subr.bf16.mxu0 0
      %825 = vmatpush1.bf16.msra.mxu0 %v794
      %826 = vmatprep.subr.bf16.mxu0 0
      %827 = vmatpush2.bf16.msra.mxu0 0
      %828 = vmatprep.subr.bf16.mxu0 0
      %829 = vmatpush2.bf16.msra.mxu0 0
      %830 = vmatprep.subr.bf16.mxu0 0
      %831 = vmatpush2.bf16.msra.mxu0 0
      %832 = vmatprep.subr.bf16.mxu0 0
      %833 = vmatpush2.bf16.msra.mxu0 0
      %834 = vmatprep.subr.bf16.mxu0 0
      %835 = vmatpush2.bf16.msra.mxu0 0
      %836 = vmatprep.subr.bf16.mxu0 0
      %837 = vmatpush2.bf16.msra.mxu0 0
      %838 = vmatprep.subr.bf16.mxu0 0
      %839 = vmatpush2.bf16.msra.mxu0 0
      %840 = vmatprep.subr.bf16.mxu0 0
      %841 = vmatpush2.bf16.msra.mxu0 0
      %842 = vmatprep.mubr.bf16.mxu0 0
      %843 = vmatmul.mubr.bf16.gmra.mxu0 %v730
      %v844 = vpop.f32.mrf.mxu0
      %v845 = vadd.f32 0.0, %v844
      %v846 = vpop.f32.mrf.mxu0
      %v847 = vpop.f32.mrf.mxu0
      %v848 = vadd.f32 0.0, %v847
      %v849 = vpop.f32.mrf.mxu0
      %850 = vmatprep.mubr.bf16.mxu0 0
      %851 = vmatmul.mubr.bf16.gmra.mxu0 %v731
      %v852 = vpop.f32.mrf.mxu0
      %v853 = vadd.f32 0.0, %v852
      %v854 = vpop.f32.mrf.mxu0
      %v855 = vpop.f32.mrf.mxu0
      %v856 = vadd.f32 0.0, %v855
      %v857 = vpop.f32.mrf.mxu0
      %858 = vmatprep.mubr.bf16.mxu0 0
      %859 = vmatmul.mubr.bf16.gmra.mxu0 %v732
      %v860 = vpop.f32.mrf.mxu0
      %v861 = vadd.f32 0.0, %v860
      %v862 = vpop.f32.mrf.mxu0
      %v863 = vpop.f32.mrf.mxu0
      %v864 = vadd.f32 0.0, %v863
      %v865 = vpop.f32.mrf.mxu0
      %866 = vmatprep.mubr.bf16.mxu0 0
      %867 = vmatmul.mubr.bf16.gmra.mxu0 %v733
      %v868 = vpop.f32.mrf.mxu0
      %v869 = vadd.f32 0.0, %v868
      %v870 = vpop.f32.mrf.mxu0
      %v871 = vpop.f32.mrf.mxu0
      %v872 = vadd.f32 0.0, %v871
      %v873 = vpop.f32.mrf.mxu0
      %874 = vmatprep.mubr.bf16.mxu0 0
      %875 = vmatmul.mubr.bf16.gmra.mxu0 %v734
      %v876 = vpop.f32.mrf.mxu0
      %v877 = vadd.f32 0.0, %v876
      %v878 = vpop.f32.mrf.mxu0
      %v879 = vpop.f32.mrf.mxu0
      %v880 = vadd.f32 0.0, %v879
      %v881 = vpop.f32.mrf.mxu0
      %882 = vmatprep.mubr.bf16.mxu0 0
      %883 = vmatmul.mubr.bf16.gmra.mxu0 %v735
      %v884 = vpop.f32.mrf.mxu0
      %v885 = vadd.f32 0.0, %v884
      %v886 = vpop.f32.mrf.mxu0
      %v887 = vpop.f32.mrf.mxu0
      %v888 = vadd.f32 0.0, %v887
      %v889 = vpop.f32.mrf.mxu0
      %890 = vmatprep.mubr.bf16.mxu0 0
      %891 = vmatmul.mubr.bf16.gmra.mxu0 %v736
      %v892 = vpop.f32.mrf.mxu0
      %v893 = vadd.f32 0.0, %v892
      %v894 = vpop.f32.mrf.mxu0
      %v895 = vpop.f32.mrf.mxu0
      %v896 = vadd.f32 0.0, %v895
      %v897 = vpop.f32.mrf.mxu0
      %898 = vmatprep.mubr.bf16.mxu0 0
      %899 = vmatmul.mubr.bf16.gmra.mxu0 %v737
      %v900 = vpop.f32.mrf.mxu0
      %v901 = vadd.f32 0.0, %v900
      %v902 = vpop.f32.mrf.mxu0
      %v903 = vpop.f32.mrf.mxu0
      %v904 = vadd.f32 0.0, %v903
      %v905 = vpop.f32.mrf.mxu0
      %906 = vmatprep.mubr.bf16.mxu0 0
      %907 = vmatmul.mubr.bf16.gmra.mxu0 %v738
      %v908 = vpop.f32.mrf.mxu0
      %v909 = vadd.f32 0.0, %v908
      %v910 = vpop.f32.mrf.mxu0
      %v911 = vpop.f32.mrf.mxu0
      %v912 = vadd.f32 0.0, %v911
      %v913 = vpop.f32.mrf.mxu0
      %914 = vmatprep.mubr.bf16.mxu0 0
      %915 = vmatmul.mubr.bf16.gmra.mxu0 %v739
      %v916 = vpop.f32.mrf.mxu0
      %v917 = vadd.f32 0.0, %v916
      %v918 = vpop.f32.mrf.mxu0
      %v919 = vpop.f32.mrf.mxu0
      %v920 = vadd.f32 0.0, %v919
      %v921 = vpop.f32.mrf.mxu0
      %922 = vmatprep.mubr.bf16.mxu0 0
      %923 = vmatmul.mubr.bf16.gmra.mxu0 %v740
      %v924 = vpop.f32.mrf.mxu0
      %v925 = vadd.f32 0.0, %v924
      %v926 = vpop.f32.mrf.mxu0
      %v927 = vpop.f32.mrf.mxu0
      %v928 = vadd.f32 0.0, %v927
      %v929 = vpop.f32.mrf.mxu0
      %930 = vmatprep.mubr.bf16.mxu0 0
      %931 = vmatmul.mubr.bf16.gmra.mxu0 %v741
      %v932 = vpop.f32.mrf.mxu0
      %v933 = vadd.f32 0.0, %v932
      %v934 = vpop.f32.mrf.mxu0
      %v935 = vpop.f32.mrf.mxu0
      %v936 = vadd.f32 0.0, %v935
      %v937 = vpop.f32.mrf.mxu0
      %938 = vmatprep.mubr.bf16.mxu0 0
      %939 = vmatmul.mubr.bf16.gmra.mxu0 %v742
      %v940 = vpop.f32.mrf.mxu0
      %v941 = vadd.f32 0.0, %v940
      %v942 = vpop.f32.mrf.mxu0
      %v943 = vpop.f32.mrf.mxu0
      %v944 = vadd.f32 0.0, %v943
      %v945 = vpop.f32.mrf.mxu0
      %946 = vmatprep.mubr.bf16.mxu0 0
      %947 = vmatmul.mubr.bf16.gmra.mxu0 %v743
      %v948 = vpop.f32.mrf.mxu0
      %v949 = vadd.f32 0.0, %v948
      %v950 = vpop.f32.mrf.mxu0
      %v951 = vpop.f32.mrf.mxu0
      %v952 = vadd.f32 0.0, %v951
      %v953 = vpop.f32.mrf.mxu0
      %954 = vmatprep.mubr.bf16.mxu0 0
      %955 = vmatmul.mubr.bf16.gmra.mxu0 %v744
      %v956 = vpop.f32.mrf.mxu0
      %v957 = vadd.f32 0.0, %v956
      %v958 = vpop.f32.mrf.mxu0
      %v959 = vpop.f32.mrf.mxu0
      %v960 = vadd.f32 0.0, %v959
      %v961 = vpop.f32.mrf.mxu0
      %962 = vmatprep.mubr.bf16.mxu0 0
      %963 = vmatmul.mubr.bf16.gmra.mxu0 %v745
      %v964 = vpop.f32.mrf.mxu0
      %v965 = vadd.f32 0.0, %v964
      %v966 = vpop.f32.mrf.mxu0
      %v967 = vpop.f32.mrf.mxu0
      %v968 = vadd.f32 0.0, %v967
      %v969 = vpop.f32.mrf.mxu0
      %970 = vdwg.mxu0
      %v971 = vld [vmem:[#allocation2] sm:$0xff]
      %v972 = vld [vmem:[#allocation2 + $0x8] sm:$0xff]
      %v973 = vld [vmem:[#allocation2 + $0x10] sm:$0xff]
      %v974 = vld [vmem:[#allocation2 + $0x18] sm:$0xff]
      %v975 = vld [vmem:[#allocation2 + $0x20] sm:$0xff]
      %v976 = vld [vmem:[#allocation2 + $0x28] sm:$0xff]
      %v977 = vld [vmem:[#allocation2 + $0x30] sm:$0xff]
      %v978 = vld [vmem:[#allocation2 + $0x38] sm:$0xff]
      %v979 = vld [vmem:[#allocation2 + $0x40] sm:$0xff]
      %v980 = vld [vmem:[#allocation2 + $0x48] sm:$0xff]
      %v981 = vld [vmem:[#allocation2 + $0x50] sm:$0xff]
      %v982 = vld [vmem:[#allocation2 + $0x58] sm:$0xff]
      %v983 = vld [vmem:[#allocation2 + $0x60] sm:$0xff]
      %v984 = vld [vmem:[#allocation2 + $0x68] sm:$0xff]
      %v985 = vld [vmem:[#allocation2 + $0x70] sm:$0xff]
      %v986 = vld [vmem:[#allocation2 + $0x78] sm:$0xff]
      %v987 = vld [vmem:[#allocation2 + $0x80] sm:$0xff]
      %v988 = vld [vmem:[#allocation2 + $0x88] sm:$0xff]
      %v989 = vld [vmem:[#allocation2 + $0x90] sm:$0xff]
      %v990 = vld [vmem:[#allocation2 + $0x98] sm:$0xff]
      %v991 = vld [vmem:[#allocation2 + $0xa0] sm:$0xff]
      %v992 = vld [vmem:[#allocation2 + $0xa8] sm:$0xff]
      %v993 = vld [vmem:[#allocation2 + $0xb0] sm:$0xff]
      %v994 = vld [vmem:[#allocation2 + $0xb8] sm:$0xff]
      %v995 = vld [vmem:[#allocation2 + $0xc0] sm:$0xff]
      %v996 = vld [vmem:[#allocation2 + $0xc8] sm:$0xff]
      %v997 = vld [vmem:[#allocation2 + $0xd0] sm:$0xff]
      %v998 = vld [vmem:[#allocation2 + $0xd8] sm:$0xff]
      %v999 = vld [vmem:[#allocation2 + $0xe0] sm:$0xff]
      %v1000 = vld [vmem:[#allocation2 + $0xe8] sm:$0xff]
      %v1001 = vld [vmem:[#allocation2 + $0xf0] sm:$0xff]
      %v1002 = vld [vmem:[#allocation2 + $0xf8] sm:$0xff]
      %v1003 = vadd.f32 %v971, %v845
      %v1004 = vadd.f32 %v972, %v848
      %v1005 = vadd.f32 %v973, %v853
      %v1006 = vadd.f32 %v974, %v856
      %v1007 = vadd.f32 %v975, %v861
      %v1008 = vadd.f32 %v976, %v864
      %v1009 = vadd.f32 %v977, %v869
      %v1010 = vadd.f32 %v978, %v872
      %v1011 = vadd.f32 %v979, %v877
      %v1012 = vadd.f32 %v980, %v880
      %v1013 = vadd.f32 %v981, %v885
      %v1014 = vadd.f32 %v982, %v888
      %v1015 = vadd.f32 %v983, %v893
      %v1016 = vadd.f32 %v984, %v896
      %v1017 = vadd.f32 %v985, %v901
      %v1018 = vadd.f32 %v986, %v904
      %v1019 = vadd.f32 %v987, %v909
      %v1020 = vadd.f32 %v988, %v912
      %v1021 = vadd.f32 %v989, %v917
      %v1022 = vadd.f32 %v990, %v920
      %v1023 = vadd.f32 %v991, %v925
      %v1024 = vadd.f32 %v992, %v928
      %v1025 = vadd.f32 %v993, %v933
      %v1026 = vadd.f32 %v994, %v936
      %v1027 = vadd.f32 %v995, %v941
      %v1028 = vadd.f32 %v996, %v944
      %v1029 = vadd.f32 %v997, %v949
      %v1030 = vadd.f32 %v998, %v952
      %v1031 = vadd.f32 %v999, %v957
      %v1032 = vadd.f32 %v1000, %v960
      %v1033 = vadd.f32 %v1001, %v965
      %v1034 = vadd.f32 %v1002, %v968
      %1035 = vst [vmem:[#allocation2] sm:$0xff] %v1003
      %1036 = vst [vmem:[#allocation2 + $0x8] sm:$0xff] %v1004
      %1037 = vst [vmem:[#allocation2 + $0x10] sm:$0xff] %v1005
      %1038 = vst [vmem:[#allocation2 + $0x18] sm:$0xff] %v1006
      %1039 = vst [vmem:[#allocation2 + $0x20] sm:$0xff] %v1007
      %1040 = vst [vmem:[#allocation2 + $0x28] sm:$0xff] %v1008
      %1041 = vst [vmem:[#allocation2 + $0x30] sm:$0xff] %v1009
      %1042 = vst [vmem:[#allocation2 + $0x38] sm:$0xff] %v1010
      %1043 = vst [vmem:[#allocation2 + $0x40] sm:$0xff] %v1011
      %1044 = vst [vmem:[#allocation2 + $0x48] sm:$0xff] %v1012
      %1045 = vst [vmem:[#allocation2 + $0x50] sm:$0xff] %v1013
      %1046 = vst [vmem:[#allocation2 + $0x58] sm:$0xff] %v1014
      %1047 = vst [vmem:[#allocation2 + $0x60] sm:$0xff] %v1015
      %1048 = vst [vmem:[#allocation2 + $0x68] sm:$0xff] %v1016
      %1049 = vst [vmem:[#allocation2 + $0x70] sm:$0xff] %v1017
      %1050 = vst [vmem:[#allocation2 + $0x78] sm:$0xff] %v1018
      %1051 = vst [vmem:[#allocation2 + $0x80] sm:$0xff] %v1019
      %1052 = vst [vmem:[#allocation2 + $0x88] sm:$0xff] %v1020
      %1053 = vst [vmem:[#allocation2 + $0x90] sm:$0xff] %v1021
      %1054 = vst [vmem:[#allocation2 + $0x98] sm:$0xff] %v1022
      %1055 = vst [vmem:[#allocation2 + $0xa0] sm:$0xff] %v1023
      %1056 = vst [vmem:[#allocation2 + $0xa8] sm:$0xff] %v1024
      %1057 = vst [vmem:[#allocation2 + $0xb0] sm:$0xff] %v1025
      %1058 = vst [vmem:[#allocation2 + $0xb8] sm:$0xff] %v1026
      %1059 = vst [vmem:[#allocation2 + $0xc0] sm:$0xff] %v1027
      %1060 = vst [vmem:[#allocation2 + $0xc8] sm:$0xff] %v1028
      %1061 = vst [vmem:[#allocation2 + $0xd0] sm:$0xff] %v1029
      %1062 = vst [vmem:[#allocation2 + $0xd8] sm:$0xff] %v1030
      %1063 = vst [vmem:[#allocation2 + $0xe0] sm:$0xff] %v1031
      %1064 = vst [vmem:[#allocation2 + $0xe8] sm:$0xff] %v1032
      %1065 = vst [vmem:[#allocation2 + $0xf0] sm:$0xff] %v1033
      %1066 = vst [vmem:[#allocation2 + $0xf8] sm:$0xff] %v1034
      %v1067 = vld [vmem:[#allocation2] sm:$0xff]
      %v1068 = vld [vmem:[#allocation2 + $0x8] sm:$0xff]
      %v1069 = vld [vmem:[#allocation2 + $0x10] sm:$0xff]
      %v1070 = vld [vmem:[#allocation2 + $0x18] sm:$0xff]
      %v1071 = vld [vmem:[#allocation2 + $0x20] sm:$0xff]
      %v1072 = vld [vmem:[#allocation2 + $0x28] sm:$0xff]
      %v1073 = vld [vmem:[#allocation2 + $0x30] sm:$0xff]
      %v1074 = vld [vmem:[#allocation2 + $0x38] sm:$0xff]
      %v1075 = vld [vmem:[#allocation2 + $0x40] sm:$0xff]
      %v1076 = vld [vmem:[#allocation2 + $0x48] sm:$0xff]
      %v1077 = vld [vmem:[#allocation2 + $0x50] sm:$0xff]
      %v1078 = vld [vmem:[#allocation2 + $0x58] sm:$0xff]
      %v1079 = vld [vmem:[#allocation2 + $0x60] sm:$0xff]
      %v1080 = vld [vmem:[#allocation2 + $0x68] sm:$0xff]
      %v1081 = vld [vmem:[#allocation2 + $0x70] sm:$0xff]
      %v1082 = vld [vmem:[#allocation2 + $0x78] sm:$0xff]
      %v1083 = vld [vmem:[#allocation2 + $0x80] sm:$0xff]
      %v1084 = vld [vmem:[#allocation2 + $0x88] sm:$0xff]
      %v1085 = vld [vmem:[#allocation2 + $0x90] sm:$0xff]
      %v1086 = vld [vmem:[#allocation2 + $0x98] sm:$0xff]
      %v1087 = vld [vmem:[#allocation2 + $0xa0] sm:$0xff]
      %v1088 = vld [vmem:[#allocation2 + $0xa8] sm:$0xff]
      %v1089 = vld [vmem:[#allocation2 + $0xb0] sm:$0xff]
      %v1090 = vld [vmem:[#allocation2 + $0xb8] sm:$0xff]
      %v1091 = vld [vmem:[#allocation2 + $0xc0] sm:$0xff]
      %v1092 = vld [vmem:[#allocation2 + $0xc8] sm:$0xff]
      %v1093 = vld [vmem:[#allocation2 + $0xd0] sm:$0xff]
      %v1094 = vld [vmem:[#allocation2 + $0xd8] sm:$0xff]
      %v1095 = vld [vmem:[#allocation2 + $0xe0] sm:$0xff]
      %v1096 = vld [vmem:[#allocation2 + $0xe8] sm:$0xff]
      %v1097 = vld [vmem:[#allocation2 + $0xf0] sm:$0xff]
      %v1098 = vld [vmem:[#allocation2 + $0xf8] sm:$0xff]
      %v1099 = vld [vmem:[%s2] sm:$0x1]
      %v1101 = vlaneseq
      %v1102 = vshrl.u32 %v1101, 7
      %v1103 = vsub.s32 0, %v1102
      %v1104 = vrot.slane %v1099, %v1103
      %v1106 = vmul.f32 %v1067, %v1104
      %v1107 = vmul.f32 %v1068, %v1104
      %v1108 = vmul.f32 %v1069, %v1104
      %v1109 = vmul.f32 %v1070, %v1104
      %v1110 = vmul.f32 %v1071, %v1104
      %v1111 = vmul.f32 %v1072, %v1104
      %v1112 = vmul.f32 %v1073, %v1104
      %v1113 = vmul.f32 %v1074, %v1104
      %v1114 = vmul.f32 %v1075, %v1104
      %v1115 = vmul.f32 %v1076, %v1104
      %v1116 = vmul.f32 %v1077, %v1104
      %v1117 = vmul.f32 %v1078, %v1104
      %v1118 = vmul.f32 %v1079, %v1104
      %v1119 = vmul.f32 %v1080, %v1104
      %v1120 = vmul.f32 %v1081, %v1104
      %v1121 = vmul.f32 %v1082, %v1104
      %v1122 = vmul.f32 %v1083, %v1104
      %v1123 = vmul.f32 %v1084, %v1104
      %v1124 = vmul.f32 %v1085, %v1104
      %v1125 = vmul.f32 %v1086, %v1104
      %v1126 = vmul.f32 %v1087, %v1104
      %v1127 = vmul.f32 %v1088, %v1104
      %v1128 = vmul.f32 %v1089, %v1104
      %v1129 = vmul.f32 %v1090, %v1104
      %v1130 = vmul.f32 %v1091, %v1104
      %v1131 = vmul.f32 %v1092, %v1104
      %v1132 = vmul.f32 %v1093, %v1104
      %v1133 = vmul.f32 %v1094, %v1104
      %v1134 = vmul.f32 %v1095, %v1104
      %v1135 = vmul.f32 %v1096, %v1104
      %v1136 = vmul.f32 %v1097, %v1104
      %v1137 = vmul.f32 %v1098, %v1104
      %v1138 = vld [vmem:[%s3] sm:$0x1]
      %v1140 = vlaneseq
      %v1141 = vshrl.u32 %v1140, 7
      %v1142 = vsub.s32 0, %v1141
      %v1143 = vrot.slane %v1138, %v1142
      %v1145 = vadd.f32 %v1106, %v1143
      %v1146 = vadd.f32 %v1107, %v1143
      %v1147 = vadd.f32 %v1108, %v1143
      %v1148 = vadd.f32 %v1109, %v1143
      %v1149 = vadd.f32 %v1110, %v1143
      %v1150 = vadd.f32 %v1111, %v1143
      %v1151 = vadd.f32 %v1112, %v1143
      %v1152 = vadd.f32 %v1113, %v1143
      %v1153 = vadd.f32 %v1114, %v1143
      %v1154 = vadd.f32 %v1115, %v1143
      %v1155 = vadd.f32 %v1116, %v1143
      %v1156 = vadd.f32 %v1117, %v1143
      %v1157 = vadd.f32 %v1118, %v1143
      %v1158 = vadd.f32 %v1119, %v1143
      %v1159 = vadd.f32 %v1120, %v1143
      %v1160 = vadd.f32 %v1121, %v1143
      %v1161 = vadd.f32 %v1122, %v1143
      %v1162 = vadd.f32 %v1123, %v1143
      %v1163 = vadd.f32 %v1124, %v1143
      %v1164 = vadd.f32 %v1125, %v1143
      %v1165 = vadd.f32 %v1126, %v1143
      %v1166 = vadd.f32 %v1127, %v1143
      %v1167 = vadd.f32 %v1128, %v1143
      %v1168 = vadd.f32 %v1129, %v1143
      %v1169 = vadd.f32 %v1130, %v1143
      %v1170 = vadd.f32 %v1131, %v1143
      %v1171 = vadd.f32 %v1132, %v1143
      %v1172 = vadd.f32 %v1133, %v1143
      %v1173 = vadd.f32 %v1134, %v1143
      %v1174 = vadd.f32 %v1135, %v1143
      %v1175 = vadd.f32 %v1136, %v1143
      %v1176 = vadd.f32 %v1137, %v1143
      %v1177 = vmul.f32 %v1145, 0.2
      %v1178 = vmul.f32 %v1146, 0.2
      %v1179 = vmul.f32 %v1147, 0.2
      %v1180 = vmul.f32 %v1148, 0.2
      %v1181 = vmul.f32 %v1149, 0.2
      %v1182 = vmul.f32 %v1150, 0.2
      %v1183 = vmul.f32 %v1151, 0.2
      %v1184 = vmul.f32 %v1152, 0.2
      %v1185 = vmul.f32 %v1153, 0.2
      %v1186 = vmul.f32 %v1154, 0.2
      %v1187 = vmul.f32 %v1155, 0.2
      %v1188 = vmul.f32 %v1156, 0.2
      %v1189 = vmul.f32 %v1157, 0.2
      %v1190 = vmul.f32 %v1158, 0.2
      %v1191 = vmul.f32 %v1159, 0.2
      %v1192 = vmul.f32 %v1160, 0.2
      %v1193 = vmul.f32 %v1161, 0.2
      %v1194 = vmul.f32 %v1162, 0.2
      %v1195 = vmul.f32 %v1163, 0.2
      %v1196 = vmul.f32 %v1164, 0.2
      %v1197 = vmul.f32 %v1165, 0.2
      %v1198 = vmul.f32 %v1166, 0.2
      %v1199 = vmul.f32 %v1167, 0.2
      %v1200 = vmul.f32 %v1168, 0.2
      %v1201 = vmul.f32 %v1169, 0.2
      %v1202 = vmul.f32 %v1170, 0.2
      %v1203 = vmul.f32 %v1171, 0.2
      %v1204 = vmul.f32 %v1172, 0.2
      %v1205 = vmul.f32 %v1173, 0.2
      %v1206 = vmul.f32 %v1174, 0.2
      %v1207 = vmul.f32 %v1175, 0.2
      %v1208 = vmul.f32 %v1176, 0.2
      %v1209 = vmax.f32 %v1145, %v1177
      %v1210 = vmax.f32 %v1146, %v1178
      %v1211 = vmax.f32 %v1147, %v1179
      %v1212 = vmax.f32 %v1148, %v1180
      %v1213 = vmax.f32 %v1149, %v1181
      %v1214 = vmax.f32 %v1150, %v1182
      %v1215 = vmax.f32 %v1151, %v1183
      %v1216 = vmax.f32 %v1152, %v1184
      %v1217 = vmax.f32 %v1153, %v1185
      %v1218 = vmax.f32 %v1154, %v1186
      %v1219 = vmax.f32 %v1155, %v1187
      %v1220 = vmax.f32 %v1156, %v1188
      %v1221 = vmax.f32 %v1157, %v1189
      %v1222 = vmax.f32 %v1158, %v1190
      %v1223 = vmax.f32 %v1159, %v1191
      %v1224 = vmax.f32 %v1160, %v1192
      %v1225 = vmax.f32 %v1161, %v1193
      %v1226 = vmax.f32 %v1162, %v1194
      %v1227 = vmax.f32 %v1163, %v1195
      %v1228 = vmax.f32 %v1164, %v1196
      %v1229 = vmax.f32 %v1165, %v1197
      %v1230 = vmax.f32 %v1166, %v1198
      %v1231 = vmax.f32 %v1167, %v1199
      %v1232 = vmax.f32 %v1168, %v1200
      %v1233 = vmax.f32 %v1169, %v1201
      %v1234 = vmax.f32 %v1170, %v1202
      %v1235 = vmax.f32 %v1171, %v1203
      %v1236 = vmax.f32 %v1172, %v1204
      %v1237 = vmax.f32 %v1173, %v1205
      %v1238 = vmax.f32 %v1174, %v1206
      %v1239 = vmax.f32 %v1175, %v1207
      %v1240 = vmax.f32 %v1176, %v1208
      %v1241 = vpack.c.bf16 %v1210, %v1209
      %v1242 = vpack.c.bf16 %v1212, %v1211
      %v1243 = vpack.c.bf16 %v1214, %v1213
      %v1244 = vpack.c.bf16 %v1216, %v1215
      %v1245 = vpack.c.bf16 %v1218, %v1217
      %v1246 = vpack.c.bf16 %v1220, %v1219
      %v1247 = vpack.c.bf16 %v1222, %v1221
      %v1248 = vpack.c.bf16 %v1224, %v1223
      %v1249 = vpack.c.bf16 %v1226, %v1225
      %v1250 = vpack.c.bf16 %v1228, %v1227
      %v1251 = vpack.c.bf16 %v1230, %v1229
      %v1252 = vpack.c.bf16 %v1232, %v1231
      %v1253 = vpack.c.bf16 %v1234, %v1233
      %v1254 = vpack.c.bf16 %v1236, %v1235
      %v1255 = vpack.c.bf16 %v1238, %v1237
      %v1256 = vpack.c.bf16 %v1240, %v1239
      %v1273 = vunpack.c.l.b16 %v1241
      %v1274 = vunpack.c.h.b16 %v1241
      %v1275 = vunpack.c.l.b16 %v1242
      %v1276 = vunpack.c.h.b16 %v1242
      %v1277 = vunpack.c.l.b16 %v1243
      %v1278 = vunpack.c.h.b16 %v1243
      %v1279 = vunpack.c.l.b16 %v1244
      %v1280 = vunpack.c.h.b16 %v1244
      %v1281 = vunpack.c.l.b16 %v1245
      %v1282 = vunpack.c.h.b16 %v1245
      %v1283 = vunpack.c.l.b16 %v1246
      %v1284 = vunpack.c.h.b16 %v1246
      %v1285 = vunpack.c.l.b16 %v1247
      %v1286 = vunpack.c.h.b16 %v1247
      %v1287 = vunpack.c.l.b16 %v1248
      %v1288 = vunpack.c.h.b16 %v1248
      %v1289 = vunpack.c.l.b16 %v1249
      %v1290 = vunpack.c.h.b16 %v1249
      %v1291 = vunpack.c.l.b16 %v1250
      %v1292 = vunpack.c.h.b16 %v1250
      %v1293 = vunpack.c.l.b16 %v1251
      %v1294 = vunpack.c.h.b16 %v1251
      %v1295 = vunpack.c.l.b16 %v1252
      %v1296 = vunpack.c.h.b16 %v1252
      %v1297 = vunpack.c.l.b16 %v1253
      %v1298 = vunpack.c.h.b16 %v1253
      %v1299 = vunpack.c.l.b16 %v1254
      %v1300 = vunpack.c.h.b16 %v1254
      %v1301 = vunpack.c.l.b16 %v1255
      %v1302 = vunpack.c.h.b16 %v1255
      %v1303 = vunpack.c.l.b16 %v1256
      %v1304 = vunpack.c.h.b16 %v1256
      %v1305 = vpack.c.b16 %v1273, %v1273
      %v1306 = vpack.c.b16 %v1274, %v1274
      %v1307 = vpack.c.b16 %v1275, %v1275
      %v1308 = vpack.c.b16 %v1276, %v1276
      %v1309 = vpack.c.b16 %v1277, %v1277
      %v1310 = vpack.c.b16 %v1278, %v1278
      %v1311 = vpack.c.b16 %v1279, %v1279
      %v1312 = vpack.c.b16 %v1280, %v1280
      %v1313 = vpack.c.b16 %v1281, %v1281
      %v1314 = vpack.c.b16 %v1282, %v1282
      %v1315 = vpack.c.b16 %v1283, %v1283
      %v1316 = vpack.c.b16 %v1284, %v1284
      %v1317 = vpack.c.b16 %v1285, %v1285
      %v1318 = vpack.c.b16 %v1286, %v1286
      %v1319 = vpack.c.b16 %v1287, %v1287
      %v1320 = vpack.c.b16 %v1288, %v1288
      %v1321 = vpack.c.b16 %v1289, %v1289
      %v1322 = vpack.c.b16 %v1290, %v1290
      %v1323 = vpack.c.b16 %v1291, %v1291
      %v1324 = vpack.c.b16 %v1292, %v1292
      %v1325 = vpack.c.b16 %v1293, %v1293
      %v1326 = vpack.c.b16 %v1294, %v1294
      %v1327 = vpack.c.b16 %v1295, %v1295
      %v1328 = vpack.c.b16 %v1296, %v1296
      %v1329 = vpack.c.b16 %v1297, %v1297
      %v1330 = vpack.c.b16 %v1298, %v1298
      %v1331 = vpack.c.b16 %v1299, %v1299
      %v1332 = vpack.c.b16 %v1300, %v1300
      %v1333 = vpack.c.b16 %v1301, %v1301
      %v1334 = vpack.c.b16 %v1302, %v1302
      %v1335 = vpack.c.b16 %v1303, %v1303
      %v1336 = vpack.c.b16 %v1304, %v1304
      %vm1369 = vcmask 60416
      %1370 = vst.msk [vmem:[%s219] sm:$0xf] %vm1369, %v1305
      %1371 = vst.msk [vmem:[%s219 + $0x4] sm:$0xf] %vm1369, %v1306
      %1372 = vst.msk [vmem:[%s219 + $0x8] sm:$0xf] %vm1369, %v1307
      %1373 = vst.msk [vmem:[%s219 + $0xc] sm:$0xf] %vm1369, %v1308
      %1374 = vst.msk [vmem:[%s219 + $0x10] sm:$0xf] %vm1369, %v1309
      %1375 = vst.msk [vmem:[%s219 + $0x14] sm:$0xf] %vm1369, %v1310
      %1376 = vst.msk [vmem:[%s219 + $0x18] sm:$0xf] %vm1369, %v1311
      %1377 = vst.msk [vmem:[%s219 + $0x1c] sm:$0xf] %vm1369, %v1312
      %1378 = vst.msk [vmem:[%s219 + $0x20] sm:$0xf] %vm1369, %v1313
      %1379 = vst.msk [vmem:[%s219 + $0x24] sm:$0xf] %vm1369, %v1314
      %1380 = vst.msk [vmem:[%s219 + $0x28] sm:$0xf] %vm1369, %v1315
      %1381 = vst.msk [vmem:[%s219 + $0x2c] sm:$0xf] %vm1369, %v1316
      %1382 = vst.msk [vmem:[%s219 + $0x30] sm:$0xf] %vm1369, %v1317
      %1383 = vst.msk [vmem:[%s219 + $0x34] sm:$0xf] %vm1369, %v1318
      %1384 = vst.msk [vmem:[%s219 + $0x38] sm:$0xf] %vm1369, %v1319
      %1385 = vst.msk [vmem:[%s219 + $0x3c] sm:$0xf] %vm1369, %v1320
      %1386 = vst.msk [vmem:[%s219 + $0x40] sm:$0xf] %vm1369, %v1321
      %1387 = vst.msk [vmem:[%s219 + $0x44] sm:$0xf] %vm1369, %v1322
      %1388 = vst.msk [vmem:[%s219 + $0x48] sm:$0xf] %vm1369, %v1323
      %1389 = vst.msk [vmem:[%s219 + $0x4c] sm:$0xf] %vm1369, %v1324
      %1390 = vst.msk [vmem:[%s219 + $0x50] sm:$0xf] %vm1369, %v1325
      %1391 = vst.msk [vmem:[%s219 + $0x54] sm:$0xf] %vm1369, %v1326
      %1392 = vst.msk [vmem:[%s219 + $0x58] sm:$0xf] %vm1369, %v1327
      %1393 = vst.msk [vmem:[%s219 + $0x5c] sm:$0xf] %vm1369, %v1328
      %1394 = vst.msk [vmem:[%s219 + $0x60] sm:$0xf] %vm1369, %v1329
      %1395 = vst.msk [vmem:[%s219 + $0x64] sm:$0xf] %vm1369, %v1330
      %1396 = vst.msk [vmem:[%s219 + $0x68] sm:$0xf] %vm1369, %v1331
      %1397 = vst.msk [vmem:[%s219 + $0x6c] sm:$0xf] %vm1369, %v1332
      %1398 = vst.msk [vmem:[%s219 + $0x70] sm:$0xf] %vm1369, %v1333
      %1399 = vst.msk [vmem:[%s219 + $0x74] sm:$0xf] %vm1369, %v1334
      %1400 = vst.msk [vmem:[%s219 + $0x78] sm:$0xf] %vm1369, %v1335
      %1401 = vst.msk [vmem:[%s219 + $0x7c] sm:$0xf] %vm1369, %v1336
      %s1402 = smul.u32 32, %s20
      %p1403 = scmp.lt.s32.totalorder %s19, 1
      %s1404 = scalar_select %p1403, %s19, 1
      %p1405 = scmp.lt.s32.totalorder %s1402, 63
      %s1406 = scalar_select %p1405, %s1402, 63
      %s1407 = smul.addr %s1404, 64
      %s1408 = sadd.s32 %s1406, %s1407
      %s1409 = smul.addr %s1408, 4
      %s1410 = scalar_lea.vmem %s4, %s1409
      // Predicated region
      $region37: #{_lambda_.5} parent=35 // pred_check
        %p1411 = pneg %p136
      $region38: #{_lambda_.5} parent=35 // pred_check_branch
        %1413 = sbr.rel (%p1411) target = $region40
      $region39: #{_lambda_.5} parent=35 // pred_region
        %s1414 = smul.u32 32, %s20
      $region40: #{_lambda_.5} parent=35 // pred_fallthru
        _
    $region36: #{_lambda_.5} parent=5 // pred_fallthru
      _
    %p1415 = scmp.le.s32.totalorder 2, %s10
    // Predicated region
    $region41: #{_lambda_.5} parent=5 // pred_check
      %p1416 = pneg %p1415
    $region42: #{_lambda_.5} parent=5 // pred_check_branch
      %1418 = sbr.rel (%p1416) target = $region44
    $region43: #{_lambda_.5} parent=5 // pred_region
      %s1419 = ssub.s32 %s10, 2
      // Predicated region
      $region45: #{_lambda_.5} parent=43 // pred_check
        %p1420 = pneg %p142
      $region46: #{_lambda_.5} parent=43 // pred_check_branch
        %1422 = sbr.rel (%p1420) target = $region48
      $region47: #{_lambda_.5} parent=43 // pred_region
        %s1423 = smul.u32 32, %s22
        %p1424 = scmp.lt.s32.totalorder %s21, 1
        %s1425 = scalar_select %p1424, %s21, 1
        %p1426 = scmp.lt.s32.totalorder %s1423, 63
        %s1427 = scalar_select %p1426, %s1423, 63
        %s1428 = smul.addr %s1425, 64
        %s1429 = sadd.s32 %s1427, %s1428
        %s1430 = smul.addr %s1429, 4
        %s1431 = scalar_lea.vmem %s4, %s1430
      $region48: #{_lambda_.5} parent=43 // pred_fallthru
        _
    $region44: #{_lambda_.5} parent=5 // pred_fallthru
      _
  $region6: #{_lambda_.5} parent=0 // loop_footer
    %s14 = sadd.s32 1, %s10
  $region7: #{_lambda_.5} parent=0 // loop_footer_branch
    %9 = sbr.rel target = $region3
  $region8: #{_lambda_.5} parent=0 // loop_exit
    _

// kernel: _lambda_.6
$region0: #{_lambda_.6}
  #allocation0 [shape = 'u32[]', space=smem, size = 0x4, offset = 0x4, fixed_abs, tag = 'smem constant byte address 0x4 - core index']
  #allocation1 [shape = 'u32[144,128]{1,0:T(1,128)}', space=vmem, size = 0x12000, scoped, tag = 'internal scratch']
  #allocation2 [shape = 'f32[64,128]{1,0:T(8,128)}', space=vmem, size = 0x8000, scoped, tag = 'scratch operand']
  %s0 = inlined_call_operand.vmem [shape: bf16[2,144,128], index: 0, kind: input, shape index: {}]
  %s1 = inlined_call_operand.vmem [shape: bf16[2,128,128], index: 1, kind: input, shape index: {}]
  %s2 = inlined_call_operand.vmem [shape: f32[1,128], index: 2, kind: input, shape index: {}]
  %s3 = inlined_call_operand.vmem [shape: f32[1,128], index: 3, kind: input, shape index: {}]
  %s4 = inlined_call_operand.vmem [shape: bf16[2,128,16], index: 4, kind: output, shape index: {}]
  %s5 = sld [smem:[#allocation0]]
  $region49: #{_lambda_.6} parent=0
    _
  %s7 = ssub.s32 1, %s5
  %s8 = scalar_select 0, %s7, %s5
  loop: start=0, step=1, limit=6
  $region2: #{_lambda_.6} parent=0 // loop_pre_header
    _
  $region3: #{_lambda_.6} parent=0 // loop_header
    %s10 = sphi 0, %s14
    %p11 = scmp.ge.s32.totalorder %s10, 6
    %s17 = sphi 0, %s29
    %s18 = sphi 0, %s25
    %s19 = sphi 0, %s17
    %s20 = sphi 0, %s18
    %s21 = sphi 0, %s19
    %s22 = sphi 0, %s20
    %s32 = sphi 0, %s34
    %s35 = sphi 0, %s32
    %s36 = sphi 0, %s35
    %s52 = sphi 0, %s36
    %s56 = sphi 0, %s56
    %s58 = sphi 0, %s56
    %s59 = sphi 0, %s58
    %s73 = sphi 0, %s59
    %s77 = sphi 0, %s77
    %s79 = sphi 0, %s77
    %s80 = sphi 0, %s79
    %s94 = sphi 0, %s80
    %s98 = sphi 0, %s98
    %s100 = sphi 0, %s98
    %s101 = sphi 0, %s100
    %s115 = sphi 0, %s101
    %s123 = sphi 0, %s125
    %s126 = sphi 0, %s123
    %s127 = sphi 0, %s126
    %s143 = sphi 0, %s127
  $region4: #{_lambda_.6} parent=0 // loop_header_branch
    %13 = sbr.rel (%p11) target = $region8
  $region5: #{_lambda_.6} parent=0 // loop_body
    %s15 = ssub.s32 %s10, 1
    %s16 = ssub.s32 %s10, 2
    %s23 = sadd.s32 1, %s18
    %p24 = scmp.ge.s32.totalorder %s23, 2
    %s25 = scalar_select %p24, 0, %s23
    %s26 = sadd.s32 1, %s17
    %s27 = scalar_select %p24, %s26, %s17
    %p28 = scmp.ge.s32.totalorder %s27, 2
    %s29 = scalar_select %p28, 0, %s27
    %s30 = ssub.s32 %s17, %s29
    %p31 = scmp.eq.s32.totalorder %s30, 0
    %s33 = sadd.s32 %s32, 1
    %s34 = scalar_select %p31, %s32, %s33
    %p37 = pneg %p31
    %p38 = scmp.eq.s32.totalorder %s10, 3
    %p39 = por %p37, %p38
    %p40 = scmp.ne.s32.totalorder %s32, %s35
    %p41 = scmp.eq.s32.totalorder %s10, 0
    %p42 = por %p40, %p41
    %p43 = scmp.ne.s32.totalorder %s32, %s35
    %p44 = scmp.eq.s32.totalorder %s15, 3
    %p45 = por %p43, %p44
    %p46 = scmp.ne.s32.totalorder %s35, %s36
    %p47 = scmp.eq.s32.totalorder %s15, 0
    %p48 = por %p46, %p47
    %p49 = scmp.ne.s32.totalorder %s35, %s36
    %p50 = scmp.eq.s32.totalorder %s16, 3
    %p51 = por %p49, %p50
    %p53 = scmp.ne.s32.totalorder %s36, %s52
    %p54 = scmp.eq.s32.totalorder %s16, 0
    %p55 = por %p53, %p54
    %s57 = sadd.s32 %s56, 1
    %p60 = scmp.eq.s32.totalorder %s10, 3
    %p61 = scmp.ne.s32.totalorder %s56, %s58
    %p62 = scmp.eq.s32.totalorder %s10, 0
    %p63 = por %p61, %p62
    %p64 = scmp.ne.s32.totalorder %s56, %s58
    %p65 = scmp.eq.s32.totalorder %s15, 3
    %p66 = por %p64, %p65
    %p67 = scmp.ne.s32.totalorder %s58, %s59
    %p68 = scmp.eq.s32.totalorder %s15, 0
    %p69 = por %p67, %p68
    %p70 = scmp.ne.s32.totalorder %s58, %s59
    %p71 = scmp.eq.s32.totalorder %s16, 3
    %p72 = por %p70, %p71
    %p74 = scmp.ne.s32.totalorder %s59, %s73
    %p75 = scmp.eq.s32.totalorder %s16, 0
    %p76 = por %p74, %p75
    %s78 = sadd.s32 %s77, 1
    %p81 = scmp.eq.s32.totalorder %s10, 3
    %p82 = scmp.ne.s32.totalorder %s77, %s79
    %p83 = scmp.eq.s32.totalorder %s10, 0
    %p84 = por %p82, %p83
    %p85 = scmp.ne.s32.totalorder %s77, %s79
    %p86 = scmp.eq.s32.totalorder %s15, 3
    %p87 = por %p85, %p86
    %p88 = scmp.ne.s32.totalorder %s79, %s80
    %p89 = scmp.eq.s32.totalorder %s15, 0
    %p90 = por %p88, %p89
    %p91 = scmp.ne.s32.totalorder %s79, %s80
    %p92 = scmp.eq.s32.totalorder %s16, 3
    %p93 = por %p91, %p92
    %p95 = scmp.ne.s32.totalorder %s80, %s94
    %p96 = scmp.eq.s32.totalorder %s16, 0
    %p97 = por %p95, %p96
    %s99 = sadd.s32 %s98, 1
    %p102 = scmp.eq.s32.totalorder %s10, 3
    %p103 = scmp.ne.s32.totalorder %s98, %s100
    %p104 = scmp.eq.s32.totalorder %s10, 0
    %p105 = por %p103, %p104
    %p106 = scmp.ne.s32.totalorder %s98, %s100
    %p107 = scmp.eq.s32.totalorder %s15, 3
    %p108 = por %p106, %p107
    %p109 = scmp.ne.s32.totalorder %s100, %s101
    %p110 = scmp.eq.s32.totalorder %s15, 0
    %p111 = por %p109, %p110
    %p112 = scmp.ne.s32.totalorder %s100, %s101
    %p113 = scmp.eq.s32.totalorder %s16, 3
    %p114 = por %p112, %p113
    %p116 = scmp.ne.s32.totalorder %s101, %s115
    %p117 = scmp.eq.s32.totalorder %s16, 0
    %p118 = por %p116, %p117
    %s119 = ssub.s32 %s17, %s29
    %s120 = ssub.s32 %s18, %s25
    %s121 = sor.u32 %s119, %s120
    %p122 = scmp.eq.s32.totalorder %s121, 0
    %s124 = sadd.s32 %s123, 1
    %s125 = scalar_select %p122, %s123, %s124
    %p128 = pneg %p122
    %p129 = scmp.eq.s32.totalorder %s10, 3
    %p130 = por %p128, %p129
    %p131 = scmp.ne.s32.totalorder %s123, %s126
    %p132 = scmp.eq.s32.totalorder %s10, 0
    %p133 = por %p131, %p132
    %p134 = scmp.ne.s32.totalorder %s123, %s126
    %p135 = scmp.eq.s32.totalorder %s15, 3
    %p136 = por %p134, %p135
    %p137 = scmp.ne.s32.totalorder %s126, %s127
    %p138 = scmp.eq.s32.totalorder %s15, 0
    %p139 = por %p137, %p138
    %p140 = scmp.ne.s32.totalorder %s126, %s127
    %p141 = scmp.eq.s32.totalorder %s16, 3
    %p142 = por %p140, %p141
    %p144 = scmp.ne.s32.totalorder %s127, %s143
    %p145 = scmp.eq.s32.totalorder %s16, 0
    %p146 = por %p144, %p145
    %p147 = scmp.le.s32.totalorder 1, %s10
    %p148 = scmp.lt.s32.totalorder %s10, 5
    %p149 = pnand %p147, %p148
    %p150 = pneg %p149
    // Predicated region
    $region9: #{_lambda_.6} parent=5 // pred_check
      _
    $region10: #{_lambda_.6} parent=5 // pred_check_branch
      %152 = sbr.rel (%p149) target = $region12
    $region11: #{_lambda_.6} parent=5 // pred_region
      %s153 = ssub.s32 %s10, 1
      // Predicated region
      $region13: #{_lambda_.6} parent=11 // pred_check
        %p154 = pneg %p69
      $region14: #{_lambda_.6} parent=11 // pred_check_branch
        %156 = sbr.rel (%p154) target = $region16
      $region15: #{_lambda_.6} parent=11 // pred_region
        _
      $region16: #{_lambda_.6} parent=11 // pred_fallthru
        _
      // Predicated region
      $region17: #{_lambda_.6} parent=11 // pred_check
        %p157 = pneg %p90
      $region18: #{_lambda_.6} parent=11 // pred_check_branch
        %159 = sbr.rel (%p157) target = $region20
      $region19: #{_lambda_.6} parent=11 // pred_region
        _
      $region20: #{_lambda_.6} parent=11 // pred_fallthru
        _
      // Predicated region
      $region21: #{_lambda_.6} parent=11 // pred_check
        %p160 = pneg %p111
      $region22: #{_lambda_.6} parent=11 // pred_check_branch
        %162 = sbr.rel (%p160) target = $region24
      $region23: #{_lambda_.6} parent=11 // pred_region
        _
      $region24: #{_lambda_.6} parent=11 // pred_fallthru
        _
    $region12: #{_lambda_.6} parent=5 // pred_fallthru
      _
    %p163 = scmp.lt.s32.totalorder %s10, 4
    // Predicated region
    $region25: #{_lambda_.6} parent=5 // pred_check
      %p164 = pneg %p163
    $region26: #{_lambda_.6} parent=5 // pred_check_branch
      %166 = sbr.rel (%p164) target = $region28
    $region27: #{_lambda_.6} parent=5 // pred_region
      // Predicated region
      $region29: #{_lambda_.6} parent=27 // pred_check
        %p167 = pneg %p42
      $region30: #{_lambda_.6} parent=27 // pred_check_branch
        %169 = sbr.rel (%p167) target = $region32
      $region31: #{_lambda_.6} parent=27 // pred_region
        %p170 = scmp.lt.s32.totalorder %s17, 1
        %s171 = scalar_select %p170, %s17, 1
        %s172 = smul.addr %s171, 18
        %s173 = smul.addr %s172, 4
        %s174 = scalar_lea.vmem %s0, %s173
      $region32: #{_lambda_.6} parent=27 // pred_fallthru
        _
    $region28: #{_lambda_.6} parent=5 // pred_fallthru
      _
    %p175 = scmp.le.s32.totalorder 1, %s10
    %p176 = scmp.lt.s32.totalorder %s10, 5
    %p177 = pnand %p175, %p176
    %p178 = pneg %p177
    // Predicated region
    $region33: #{_lambda_.6} parent=5 // pred_check
      _
    $region34: #{_lambda_.6} parent=5 // pred_check_branch
      %180 = sbr.rel (%p177) target = $region36
    $region35: #{_lambda_.6} parent=5 // pred_region
      %s181 = ssub.s32 %s10, 1
      %p182 = scmp.lt.s32.totalorder %s19, 1
      %s183 = scalar_select %p182, %s19, 1
      %s184 = smul.addr %s183, 18
      %s185 = smul.addr %s184, 4
      %s186 = scalar_lea.vmem %s0, %s185
      %p187 = pneg %p48
      %p188 = pneg %p45
      %p189 = pneg %p69
      %p190 = pneg %p66
      %p191 = pneg %p90
      %p192 = pneg %p87
      %p193 = pneg %p111
      %p194 = pneg %p108
      %p195 = pneg %p139
      %p196 = pneg %p136
      %s197 = smul.u32 8, %s20
      %p198 = scmp.lt.s32.totalorder %s19, 1
      %s199 = scalar_select %p198, %s19, 1
      %p200 = scmp.lt.s32.totalorder %s197, 15
      %s201 = scalar_select %p200, %s197, 15
      %s202 = smul.addr %s199, 16
      %s203 = sadd.s32 %s201, %s202
      %s204 = smul.addr %s203, 4
      %s205 = scalar_lea.vmem %s4, %s204
      %p206 = scmp.lt.s32.totalorder %s19, 1
      %s207 = scalar_select %p206, %s19, 1
      %s208 = smul.addr %s207, 18
      %s209 = smul.addr %s208, 4
      %s210 = scalar_lea.vmem %s0, %s209
      %s211 = smul.u32 8, %s20
      %p212 = scmp.lt.s32.totalorder %s19, 1
      %s213 = scalar_select %p212, %s19, 1
      %p214 = scmp.lt.s32.totalorder %s211, 15
      %s215 = scalar_select %p214, %s211, 15
      %s216 = smul.addr %s213, 16
      %s217 = sadd.s32 %s215, %s216
      %s218 = smul.addr %s217, 4
      %s219 = scalar_lea.vmem %s4, %s218
      %s220 = smul.u32 8, %s20
      %s222 = smul.u32 %s20, 64
      %s223 = sshra.s32 %s222, 3
      %s224 = sand.u32 %s222, 7
      %s225 = smul.addr %s223, 4
      %s226 = scalar_lea.vmem %s210, %s225
      %v227 = vld [vmem:[%s226] sm:$0xf]
      %v228 = vld [vmem:[%s226 + $0x4] sm:$0xf]
      %v229 = vld [vmem:[%s226 + $0x8] sm:$0xf]
      %v230 = vld [vmem:[%s226 + $0xc] sm:$0xf]
      %v231 = vld [vmem:[%s226 + $0x10] sm:$0xf]
      %v232 = vld [vmem:[%s226 + $0x14] sm:$0xf]
      %v233 = vld [vmem:[%s226 + $0x18] sm:$0xf]
      %v234 = vld [vmem:[%s226 + $0x1c] sm:$0xf]
      %v235 = vld [vmem:[%s1] sm:$0xf]
      %v236 = vld [vmem:[%s1 + $0x4] sm:$0xf]
      %v237 = vld [vmem:[%s1 + $0x8] sm:$0xf]
      %v238 = vld [vmem:[%s1 + $0xc] sm:$0xf]
      %v239 = vld [vmem:[%s1 + $0x10] sm:$0xf]
      %v240 = vld [vmem:[%s1 + $0x14] sm:$0xf]
      %v241 = vld [vmem:[%s1 + $0x18] sm:$0xf]
      %v242 = vld [vmem:[%s1 + $0x1c] sm:$0xf]
      %v243 = vld [vmem:[%s1 + $0x20] sm:$0xf]
      %v244 = vld [vmem:[%s1 + $0x24] sm:$0xf]
      %v245 = vld [vmem:[%s1 + $0x28] sm:$0xf]
      %v246 = vld [vmem:[%s1 + $0x2c] sm:$0xf]
      %v247 = vld [vmem:[%s1 + $0x30] sm:$0xf]
      %v248 = vld [vmem:[%s1 + $0x34] sm:$0xf]
      %v249 = vld [vmem:[%s1 + $0x38] sm:$0xf]
      %v250 = vld [vmem:[%s1 + $0x3c] sm:$0xf]
      %v259 = vunpack.c.l.b16 %v227
      %v260 = vunpack.c.l.b16 %v228
      %v261 = vunpack.c.l.b16 %v229
      %v262 = vunpack.c.l.b16 %v230
      %v263 = vunpack.c.l.b16 %v231
      %v264 = vunpack.c.l.b16 %v232
      %v265 = vunpack.c.l.b16 %v233
      %v266 = vunpack.c.l.b16 %v234
      %v267 = vpack.c.b16 %v260, %v259
      %v268 = vpack.c.b16 %v262, %v261
      %v269 = vpack.c.b16 %v264, %v263
      %v270 = vpack.c.b16 %v266, %v265
      %v291 = vunpack.c.l.b16 %v235
      %v292 = vunpack.c.l.b16 %v236
      %v293 = vunpack.c.l.b16 %v237
      %v294 = vunpack.c.l.b16 %v238
      %v295 = vunpack.c.l.b16 %v239
      %v296 = vunpack.c.l.b16 %v240
      %v297 = vunpack.c.l.b16 %v241
      %v298 = vunpack.c.l.b16 %v242
      %v299 = vunpack.c.l.b16 %v243
      %v300 = vunpack.c.l.b16 %v244
      %v301 = vunpack.c.l.b16 %v245
      %v302 = vunpack.c.l.b16 %v246
      %v303 = vunpack.c.l.b16 %v247
      %v304 = vunpack.c.l.b16 %v248
      %v305 = vunpack.c.l.b16 %v249
      %v306 = vunpack.c.l.b16 %v250
      %v307 = vpack.c.b16 %v292, %v291
      %v308 = vpack.c.b16 %v294, %v293
      %v309 = vpack.c.b16 %v296, %v295
      %v310 = vpack.c.b16 %v298, %v297
      %v311 = vpack.c.b16 %v300, %v299
      %v312 = vpack.c.b16 %v302, %v301
      %v313 = vpack.c.b16 %v304, %v303
      %v314 = vpack.c.b16 %v306, %v305
      %323 = vmatprep.subr.bf16.mxu0 0
      %324 = vmatpush1.bf16.msra.mxu0 %v314
      %325 = vmatprep.subr.bf16.mxu0 0
      %326 = vmatpush1.bf16.msra.mxu0 %v313
      %327 = vmatprep.subr.bf16.mxu0 0
      %328 = vmatpush1.bf16.msra.mxu0 %v312
      %329 = vmatprep.subr.bf16.mxu0 0
      %330 = vmatpush1.bf16.msra.mxu0 %v311
      %331 = vmatprep.subr.bf16.mxu0 0
      %332 = vmatpush1.bf16.msra.mxu0 %v310
      %333 = vmatprep.subr.bf16.mxu0 0
      %334 = vmatpush1.bf16.msra.mxu0 %v309
      %335 = vmatprep.subr.bf16.mxu0 0
      %336 = vmatpush1.bf16.msra.mxu0 %v308
      %337 = vmatprep.subr.bf16.mxu0 0
      %338 = vmatpush1.bf16.msra.mxu0 %v307
      %339 = vmatprep.subr.bf16.mxu0 0
      %340 = vmatpush2.bf16.msra.mxu0 0
      %341 = vmatprep.subr.bf16.mxu0 0
      %342 = vmatpush2.bf16.msra.mxu0 0
      %343 = vmatprep.subr.bf16.mxu0 0
      %344 = vmatpush2.bf16.msra.mxu0 0
      %345 = vmatprep.subr.bf16.mxu0 0
      %346 = vmatpush2.bf16.msra.mxu0 0
      %347 = vmatprep.subr.bf16.mxu0 0
      %348 = vmatpush2.bf16.msra.mxu0 0
      %349 = vmatprep.subr.bf16.mxu0 0
      %350 = vmatpush2.bf16.msra.mxu0 0
      %351 = vmatprep.subr.bf16.mxu0 0
      %352 = vmatpush2.bf16.msra.mxu0 0
      %353 = vmatprep.subr.bf16.mxu0 0
      %354 = vmatpush2.bf16.msra.mxu0 0
      %355 = vmatprep.mubr.bf16.mxu0 0
      %356 = vmatmul.mubr.bf16.gmra.mxu0 %v267
      %v357 = vpop.f32.mrf.mxu0
      %v358 = vadd.f32 0.0, %v357
      %v359 = vpop.f32.mrf.mxu0
      %v360 = vpop.f32.mrf.mxu0
      %v361 = vadd.f32 0.0, %v360
      %v362 = vpop.f32.mrf.mxu0
      %363 = vmatprep.mubr.bf16.mxu0 0
      %364 = vmatmul.mubr.bf16.gmra.mxu0 %v268
      %v365 = vpop.f32.mrf.mxu0
      %v366 = vadd.f32 0.0, %v365
      %v367 = vpop.f32.mrf.mxu0
      %v368 = vpop.f32.mrf.mxu0
      %v369 = vadd.f32 0.0, %v368
      %v370 = vpop.f32.mrf.mxu0
      %371 = vmatprep.mubr.bf16.mxu0 0
      %372 = vmatmul.mubr.bf16.gmra.mxu0 %v269
      %v373 = vpop.f32.mrf.mxu0
      %v374 = vadd.f32 0.0, %v373
      %v375 = vpop.f32.mrf.mxu0
      %v376 = vpop.f32.mrf.mxu0
      %v377 = vadd.f32 0.0, %v376
      %v378 = vpop.f32.mrf.mxu0
      %379 = vmatprep.mubr.bf16.mxu0 0
      %380 = vmatmul.mubr.bf16.gmra.mxu0 %v270
      %v381 = vpop.f32.mrf.mxu0
      %v382 = vadd.f32 0.0, %v381
      %v383 = vpop.f32.mrf.mxu0
      %v384 = vpop.f32.mrf.mxu0
      %v385 = vadd.f32 0.0, %v384
      %v386 = vpop.f32.mrf.mxu0
      %387 = vdwg.mxu0
      %388 = vst [vmem:[#allocation2] sm:$0xff] %v358
      %389 = vst [vmem:[#allocation2 + $0x8] sm:$0xff] %v361
      %390 = vst [vmem:[#allocation2 + $0x10] sm:$0xff] %v366
      %391 = vst [vmem:[#allocation2 + $0x18] sm:$0xff] %v369
      %392 = vst [vmem:[#allocation2 + $0x20] sm:$0xff] %v374
      %393 = vst [vmem:[#allocation2 + $0x28] sm:$0xff] %v377
      %394 = vst [vmem:[#allocation2 + $0x30] sm:$0xff] %v382
      %395 = vst [vmem:[#allocation2 + $0x38] sm:$0xff] %v385
      %s396 = sadd.s32 %s222, 16
      %s397 = sshra.s32 %s396, 3
      %s398 = sand.u32 %s396, 7
      %s399 = smul.addr %s397, 4
      %s400 = scalar_lea.vmem %s210, %s399
      %v401 = vld [vmem:[%s400] sm:$0xf]
      %v402 = vld [vmem:[%s400 + $0x4] sm:$0xf]
      %v403 = vld [vmem:[%s400 + $0x8] sm:$0xf]
      %v404 = vld [vmem:[%s400 + $0xc] sm:$0xf]
      %v405 = vld [vmem:[%s400 + $0x10] sm:$0xf]
      %v406 = vld [vmem:[%s400 + $0x14] sm:$0xf]
      %v407 = vld [vmem:[%s400 + $0x18] sm:$0xf]
      %v408 = vld [vmem:[%s400 + $0x1c] sm:$0xf]
      %s409 = scalar_lea.vmem %s1, 64
      %v410 = vld [vmem:[%s409] sm:$0xf]
      %v411 = vld [vmem:[%s409 + $0x4] sm:$0xf]
      %v412 = vld [vmem:[%s409 + $0x8] sm:$0xf]
      %v413 = vld [vmem:[%s409 + $0xc] sm:$0xf]
      %v414 = vld [vmem:[%s409 + $0x10] sm:$0xf]
      %v415 = vld [vmem:[%s409 + $0x14] sm:$0xf]
      %v416 = vld [vmem:[%s409 + $0x18] sm:$0xf]
      %v417 = vld [vmem:[%s409 + $0x1c] sm:$0xf]
      %v418 = vld [vmem:[%s409 + $0x20] sm:$0xf]
      %v419 = vld [vmem:[%s409 + $0x24] sm:$0xf]
      %v420 = vld [vmem:[%s409 + $0x28] sm:$0xf]
      %v421 = vld [vmem:[%s409 + $0x2c] sm:$0xf]
      %v422 = vld [vmem:[%s409 + $0x30] sm:$0xf]
      %v423 = vld [vmem:[%s409 + $0x34] sm:$0xf]
      %v424 = vld [vmem:[%s409 + $0x38] sm:$0xf]
      %v425 = vld [vmem:[%s409 + $0x3c] sm:$0xf]
      %v434 = vunpack.c.l.b16 %v401
      %v435 = vunpack.c.l.b16 %v402
      %v436 = vunpack.c.l.b16 %v403
      %v437 = vunpack.c.l.b16 %v404
      %v438 = vunpack.c.l.b16 %v405
      %v439 = vunpack.c.l.b16 %v406
      %v440 = vunpack.c.l.b16 %v407
      %v441 = vunpack.c.l.b16 %v408
      %v442 = vpack.c.b16 %v435, %v434
      %v443 = vpack.c.b16 %v437, %v436
      %v444 = vpack.c.b16 %v439, %v438
      %v445 = vpack.c.b16 %v441, %v440
      %v466 = vunpack.c.l.b16 %v410
      %v467 = vunpack.c.l.b16 %v411
      %v468 = vunpack.c.l.b16 %v412
      %v469 = vunpack.c.l.b16 %v413
      %v470 = vunpack.c.l.b16 %v414
      %v471 = vunpack.c.l.b16 %v415
      %v472 = vunpack.c.l.b16 %v416
      %v473 = vunpack.c.l.b16 %v417
      %v474 = vunpack.c.l.b16 %v418
      %v475 = vunpack.c.l.b16 %v419
      %v476 = vunpack.c.l.b16 %v420
      %v477 = vunpack.c.l.b16 %v421
      %v478 = vunpack.c.l.b16 %v422
      %v479 = vunpack.c.l.b16 %v423
      %v480 = vunpack.c.l.b16 %v424
      %v481 = vunpack.c.l.b16 %v425
      %v482 = vpack.c.b16 %v467, %v466
      %v483 = vpack.c.b16 %v469, %v468
      %v484 = vpack.c.b16 %v471, %v470
      %v485 = vpack.c.b16 %v473, %v472
      %v486 = vpack.c.b16 %v475, %v474
      %v487 = vpack.c.b16 %v477, %v476
      %v488 = vpack.c.b16 %v479, %v478
      %v489 = vpack.c.b16 %v481, %v480
      %498 = vmatprep.subr.bf16.mxu0 0
      %499 = vmatpush1.bf16.msra.mxu0 %v489
      %500 = vmatprep.subr.bf16.mxu0 0
      %501 = vmatpush1.bf16.msra.mxu0 %v488
      %502 = vmatprep.subr.bf16.mxu0 0
      %503 = vmatpush1.bf16.msra.mxu0 %v487
      %504 = vmatprep.subr.bf16.mxu0 0
      %505 = vmatpush1.bf16.msra.mxu0 %v486
      %506 = vmatprep.subr.bf16.mxu0 0
      %507 = vmatpush1.bf16.msra.mxu0 %v485
      %508 = vmatprep.subr.bf16.mxu0 0
      %509 = vmatpush1.bf16.msra.mxu0 %v484
      %510 = vmatprep.subr.bf16.mxu0 0
      %511 = vmatpush1.bf16.msra.mxu0 %v483
      %512 = vmatprep.subr.bf16.mxu0 0
      %513 = vmatpush1.bf16.msra.mxu0 %v482
      %514 = vmatprep.subr.bf16.mxu0 0
      %515 = vmatpush2.bf16.msra.mxu0 0
      %516 = vmatprep.subr.bf16.mxu0 0
      %517 = vmatpush2.bf16.msra.mxu0 0
      %518 = vmatprep.subr.bf16.mxu0 0
      %519 = vmatpush2.bf16.msra.mxu0 0
      %520 = vmatprep.subr.bf16.mxu0 0
      %521 = vmatpush2.bf16.msra.mxu0 0
      %522 = vmatprep.subr.bf16.mxu0 0
      %523 = vmatpush2.bf16.msra.mxu0 0
      %524 = vmatprep.subr.bf16.mxu0 0
      %525 = vmatpush2.bf16.msra.mxu0 0
      %526 = vmatprep.subr.bf16.mxu0 0
      %527 = vmatpush2.bf16.msra.mxu0 0
      %528 = vmatprep.subr.bf16.mxu0 0
      %529 = vmatpush2.bf16.msra.mxu0 0
      %530 = vmatprep.mubr.bf16.mxu0 0
      %531 = vmatmul.mubr.bf16.gmra.mxu0 %v442
      %v532 = vpop.f32.mrf.mxu0
      %v533 = vadd.f32 0.0, %v532
      %v534 = vpop.f32.mrf.mxu0
      %v535 = vpop.f32.mrf.mxu0
      %v536 = vadd.f32 0.0, %v535
      %v537 = vpop.f32.mrf.mxu0
      %538 = vmatprep.mubr.bf16.mxu0 0
      %539 = vmatmul.mubr.bf16.gmra.mxu0 %v443
      %v540 = vpop.f32.mrf.mxu0
      %v541 = vadd.f32 0.0, %v540
      %v542 = vpop.f32.mrf.mxu0
      %v543 = vpop.f32.mrf.mxu0
      %v544 = vadd.f32 0.0, %v543
      %v545 = vpop.f32.mrf.mxu0
      %546 = vmatprep.mubr.bf16.mxu0 0
      %547 = vmatmul.mubr.bf16.gmra.mxu0 %v444
      %v548 = vpop.f32.mrf.mxu0
      %v549 = vadd.f32 0.0, %v548
      %v550 = vpop.f32.mrf.mxu0
      %v551 = vpop.f32.mrf.mxu0
      %v552 = vadd.f32 0.0, %v551
      %v553 = vpop.f32.mrf.mxu0
      %554 = vmatprep.mubr.bf16.mxu0 0
      %555 = vmatmul.mubr.bf16.gmra.mxu0 %v445
      %v556 = vpop.f32.mrf.mxu0
      %v557 = vadd.f32 0.0, %v556
      %v558 = vpop.f32.mrf.mxu0
      %v559 = vpop.f32.mrf.mxu0
      %v560 = vadd.f32 0.0, %v559
      %v561 = vpop.f32.mrf.mxu0
      %562 = vdwg.mxu0
      %v563 = vld [vmem:[#allocation2] sm:$0xff]
      %v564 = vld [vmem:[#allocation2 + $0x8] sm:$0xff]
      %v565 = vld [vmem:[#allocation2 + $0x10] sm:$0xff]
      %v566 = vld [vmem:[#allocation2 + $0x18] sm:$0xff]
      %v567 = vld [vmem:[#allocation2 + $0x20] sm:$0xff]
      %v568 = vld [vmem:[#allocation2 + $0x28] sm:$0xff]
      %v569 = vld [vmem:[#allocation2 + $0x30] sm:$0xff]
      %v570 = vld [vmem:[#allocation2 + $0x38] sm:$0xff]
      %v571 = vadd.f32 %v563, %v533
      %v572 = vadd.f32 %v564, %v536
      %v573 = vadd.f32 %v565, %v541
      %v574 = vadd.f32 %v566, %v544
      %v575 = vadd.f32 %v567, %v549
      %v576 = vadd.f32 %v568, %v552
      %v577 = vadd.f32 %v569, %v557
      %v578 = vadd.f32 %v570, %v560
      %579 = vst [vmem:[#allocation2] sm:$0xff] %v571
      %580 = vst [vmem:[#allocation2 + $0x8] sm:$0xff] %v572
      %581 = vst [vmem:[#allocation2 + $0x10] sm:$0xff] %v573
      %582 = vst [vmem:[#allocation2 + $0x18] sm:$0xff] %v574
      %583 = vst [vmem:[#allocation2 + $0x20] sm:$0xff] %v575
      %584 = vst [vmem:[#allocation2 + $0x28] sm:$0xff] %v576
      %585 = vst [vmem:[#allocation2 + $0x30] sm:$0xff] %v577
      %586 = vst [vmem:[#allocation2 + $0x38] sm:$0xff] %v578
      %v587 = vld [vmem:[#allocation2] sm:$0xff]
      %v588 = vld [vmem:[#allocation2 + $0x8] sm:$0xff]
      %v589 = vld [vmem:[#allocation2 + $0x10] sm:$0xff]
      %v590 = vld [vmem:[#allocation2 + $0x18] sm:$0xff]
      %v591 = vld [vmem:[#allocation2 + $0x20] sm:$0xff]
      %v592 = vld [vmem:[#allocation2 + $0x28] sm:$0xff]
      %v593 = vld [vmem:[#allocation2 + $0x30] sm:$0xff]
      %v594 = vld [vmem:[#allocation2 + $0x38] sm:$0xff]
      %v595 = vld [vmem:[%s2] sm:$0x1]
      %v597 = vlaneseq
      %v598 = vshrl.u32 %v597, 7
      %v599 = vsub.s32 0, %v598
      %v600 = vrot.slane %v595, %v599
      %v602 = vmul.f32 %v587, %v600
      %v603 = vmul.f32 %v588, %v600
      %v604 = vmul.f32 %v589, %v600
      %v605 = vmul.f32 %v590, %v600
      %v606 = vmul.f32 %v591, %v600
      %v607 = vmul.f32 %v592, %v600
      %v608 = vmul.f32 %v593, %v600
      %v609 = vmul.f32 %v594, %v600
      %v610 = vld [vmem:[%s3] sm:$0x1]
      %v612 = vlaneseq
      %v613 = vshrl.u32 %v612, 7
      %v614 = vsub.s32 0, %v613
      %v615 = vrot.slane %v610, %v614
      %v617 = vadd.f32 %v602, %v615
      %v618 = vadd.f32 %v603, %v615
      %v619 = vadd.f32 %v604, %v615
      %v620 = vadd.f32 %v605, %v615
      %v621 = vadd.f32 %v606, %v615
      %v622 = vadd.f32 %v607, %v615
      %v623 = vadd.f32 %v608, %v615
      %v624 = vadd.f32 %v609, %v615
      %v625 = vmul.f32 %v617, 0.2
      %v626 = vmul.f32 %v618, 0.2
      %v627 = vmul.f32 %v619, 0.2
      %v628 = vmul.f32 %v620, 0.2
      %v629 = vmul.f32 %v621, 0.2
      %v630 = vmul.f32 %v622, 0.2
      %v631 = vmul.f32 %v623, 0.2
      %v632 = vmul.f32 %v624, 0.2
      %v633 = vmax.f32 %v617, %v625
      %v634 = vmax.f32 %v618, %v626
      %v635 = vmax.f32 %v619, %v627
      %v636 = vmax.f32 %v620, %v628
      %v637 = vmax.f32 %v621, %v629
      %v638 = vmax.f32 %v622, %v630
      %v639 = vmax.f32 %v623, %v631
      %v640 = vmax.f32 %v624, %v632
      %v641 = vpack.c.bf16 %v634, %v633
      %v642 = vpack.c.bf16 %v636, %v635
      %v643 = vpack.c.bf16 %v638, %v637
      %v644 = vpack.c.bf16 %v640, %v639
      %v649 = vunpack.c.l.b16 %v641
      %v650 = vunpack.c.h.b16 %v641
      %v651 = vunpack.c.l.b16 %v642
      %v652 = vunpack.c.h.b16 %v642
      %v653 = vunpack.c.l.b16 %v643
      %v654 = vunpack.c.h.b16 %v643
      %v655 = vunpack.c.l.b16 %v644
      %v656 = vunpack.c.h.b16 %v644
      %v657 = vpack.c.b16 %v649, %v649
      %v658 = vpack.c.b16 %v650, %v650
      %v659 = vpack.c.b16 %v651, %v651
      %v660 = vpack.c.b16 %v652, %v652
      %v661 = vpack.c.b16 %v653, %v653
      %v662 = vpack.c.b16 %v654, %v654
      %v663 = vpack.c.b16 %v655, %v655
      %v664 = vpack.c.b16 %v656, %v656
      %vm673 = vcmask 125952
      %674 = vst.msk [vmem:[%s219] sm:$0xf] %vm673, %v657
      %675 = vst.msk [vmem:[%s219 + $0x4] sm:$0xf] %vm673, %v658
      %676 = vst.msk [vmem:[%s219 + $0x8] sm:$0xf] %vm673, %v659
      %677 = vst.msk [vmem:[%s219 + $0xc] sm:$0xf] %vm673, %v660
      %678 = vst.msk [vmem:[%s219 + $0x10] sm:$0xf] %vm673, %v661
      %679 = vst.msk [vmem:[%s219 + $0x14] sm:$0xf] %vm673, %v662
      %680 = vst.msk [vmem:[%s219 + $0x18] sm:$0xf] %vm673, %v663
      %681 = vst.msk [vmem:[%s219 + $0x1c] sm:$0xf] %vm673, %v664
      %s682 = smul.u32 8, %s20
      %p683 = scmp.lt.s32.totalorder %s19, 1
      %s684 = scalar_select %p683, %s19, 1
      %p685 = scmp.lt.s32.totalorder %s682, 15
      %s686 = scalar_select %p685, %s682, 15
      %s687 = smul.addr %s684, 16
      %s688 = sadd.s32 %s686, %s687
      %s689 = smul.addr %s688, 4
      %s690 = scalar_lea.vmem %s4, %s689
      // Predicated region
      $region37: #{_lambda_.6} parent=35 // pred_check
        %p691 = pneg %p136
      $region38: #{_lambda_.6} parent=35 // pred_check_branch
        %693 = sbr.rel (%p691) target = $region40
      $region39: #{_lambda_.6} parent=35 // pred_region
        %s694 = smul.u32 8, %s20
      $region40: #{_lambda_.6} parent=35 // pred_fallthru
        _
    $region36: #{_lambda_.6} parent=5 // pred_fallthru
      _
    %p695 = scmp.le.s32.totalorder 2, %s10
    // Predicated region
    $region41: #{_lambda_.6} parent=5 // pred_check
      %p696 = pneg %p695
    $region42: #{_lambda_.6} parent=5 // pred_check_branch
      %698 = sbr.rel (%p696) target = $region44
    $region43: #{_lambda_.6} parent=5 // pred_region
      %s699 = ssub.s32 %s10, 2
      // Predicated region
      $region45: #{_lambda_.6} parent=43 // pred_check
        %p700 = pneg %p142
      $region46: #{_lambda_.6} parent=43 // pred_check_branch
        %702 = sbr.rel (%p700) target = $region48
      $region47: #{_lambda_.6} parent=43 // pred_region
        %s703 = smul.u32 8, %s22
        %p704 = scmp.lt.s32.totalorder %s21, 1
        %s705 = scalar_select %p704, %s21, 1
        %p706 = scmp.lt.s32.totalorder %s703, 15
        %s707 = scalar_select %p706, %s703, 15
        %s708 = smul.addr %s705, 16
        %s709 = sadd.s32 %s707, %s708
        %s710 = smul.addr %s709, 4
        %s711 = scalar_lea.vmem %s4, %s710
      $region48: #{_lambda_.6} parent=43 // pred_fallthru
        _
    $region44: #{_lambda_.6} parent=5 // pred_fallthru
      _
  $region6: #{_lambda_.6} parent=0 // loop_footer
    %s14 = sadd.s32 1, %s10
  $region7: #{_lambda_.6} parent=0 // loop_footer_branch
    %9 = sbr.rel target = $region3
  $region8: #{_lambda_.6} parent=0 // loop_exit
    _

// kernel: _lambda_.7
$region0: #{_lambda_.7}
  #allocation0 [shape = 'u32[]', space=smem, size = 0x4, offset = 0x4, fixed_abs, tag = 'smem constant byte address 0x4 - core index']
  #allocation1 [shape = 'u32[144,128]{1,0:T(1,128)}', space=vmem, size = 0x12000, scoped, tag = 'internal scratch']
  #allocation2 [shape = 'f32[32,128]{1,0:T(8,128)}', space=vmem, size = 0x4000, scoped, tag = 'scratch operand']
  %s0 = inlined_call_operand.vmem [shape: bf16[2,80,128], index: 0, kind: input, shape index: {}]
  %s1 = inlined_call_operand.vmem [shape: bf16[2,128,128], index: 1, kind: input, shape index: {}]
  %s2 = inlined_call_operand.vmem [shape: f32[1,128], index: 2, kind: input, shape index: {}]
  %s3 = inlined_call_operand.vmem [shape: f32[1,128], index: 3, kind: input, shape index: {}]
  %s4 = inlined_call_operand.vmem [shape: bf16[2,64,32], index: 4, kind: output, shape index: {}]
  %s5 = sld [smem:[#allocation0]]
  $region49: #{_lambda_.7} parent=0
    _
  %s7 = ssub.s32 1, %s5
  %s8 = scalar_select 0, %s7, %s5
  loop: start=0, step=1, limit=6
  $region2: #{_lambda_.7} parent=0 // loop_pre_header
    _
  $region3: #{_lambda_.7} parent=0 // loop_header
    %s10 = sphi 0, %s14
    %p11 = scmp.ge.s32.totalorder %s10, 6
    %s17 = sphi 0, %s29
    %s18 = sphi 0, %s25
    %s19 = sphi 0, %s17
    %s20 = sphi 0, %s18
    %s21 = sphi 0, %s19
    %s22 = sphi 0, %s20
    %s32 = sphi 0, %s34
    %s35 = sphi 0, %s32
    %s36 = sphi 0, %s35
    %s52 = sphi 0, %s36
    %s56 = sphi 0, %s56
    %s58 = sphi 0, %s56
    %s59 = sphi 0, %s58
    %s73 = sphi 0, %s59
    %s77 = sphi 0, %s77
    %s79 = sphi 0, %s77
    %s80 = sphi 0, %s79
    %s94 = sphi 0, %s80
    %s98 = sphi 0, %s98
    %s100 = sphi 0, %s98
    %s101 = sphi 0, %s100
    %s115 = sphi 0, %s101
    %s123 = sphi 0, %s125
    %s126 = sphi 0, %s123
    %s127 = sphi 0, %s126
    %s143 = sphi 0, %s127
  $region4: #{_lambda_.7} parent=0 // loop_header_branch
    %13 = sbr.rel (%p11) target = $region8
  $region5: #{_lambda_.7} parent=0 // loop_body
    %s15 = ssub.s32 %s10, 1
    %s16 = ssub.s32 %s10, 2
    %s23 = sadd.s32 1, %s18
    %p24 = scmp.ge.s32.totalorder %s23, 2
    %s25 = scalar_select %p24, 0, %s23
    %s26 = sadd.s32 1, %s17
    %s27 = scalar_select %p24, %s26, %s17
    %p28 = scmp.ge.s32.totalorder %s27, 2
    %s29 = scalar_select %p28, 0, %s27
    %s30 = ssub.s32 %s17, %s29
    %p31 = scmp.eq.s32.totalorder %s30, 0
    %s33 = sadd.s32 %s32, 1
    %s34 = scalar_select %p31, %s32, %s33
    %p37 = pneg %p31
    %p38 = scmp.eq.s32.totalorder %s10, 3
    %p39 = por %p37, %p38
    %p40 = scmp.ne.s32.totalorder %s32, %s35
    %p41 = scmp.eq.s32.totalorder %s10, 0
    %p42 = por %p40, %p41
    %p43 = scmp.ne.s32.totalorder %s32, %s35
    %p44 = scmp.eq.s32.totalorder %s15, 3
    %p45 = por %p43, %p44
    %p46 = scmp.ne.s32.totalorder %s35, %s36
    %p47 = scmp.eq.s32.totalorder %s15, 0
    %p48 = por %p46, %p47
    %p49 = scmp.ne.s32.totalorder %s35, %s36
    %p50 = scmp.eq.s32.totalorder %s16, 3
    %p51 = por %p49, %p50
    %p53 = scmp.ne.s32.totalorder %s36, %s52
    %p54 = scmp.eq.s32.totalorder %s16, 0
    %p55 = por %p53, %p54
    %s57 = sadd.s32 %s56, 1
    %p60 = scmp.eq.s32.totalorder %s10, 3
    %p61 = scmp.ne.s32.totalorder %s56, %s58
    %p62 = scmp.eq.s32.totalorder %s10, 0
    %p63 = por %p61, %p62
    %p64 = scmp.ne.s32.totalorder %s56, %s58
    %p65 = scmp.eq.s32.totalorder %s15, 3
    %p66 = por %p64, %p65
    %p67 = scmp.ne.s32.totalorder %s58, %s59
    %p68 = scmp.eq.s32.totalorder %s15, 0
    %p69 = por %p67, %p68
    %p70 = scmp.ne.s32.totalorder %s58, %s59
    %p71 = scmp.eq.s32.totalorder %s16, 3
    %p72 = por %p70, %p71
    %p74 = scmp.ne.s32.totalorder %s59, %s73
    %p75 = scmp.eq.s32.totalorder %s16, 0
    %p76 = por %p74, %p75
    %s78 = sadd.s32 %s77, 1
    %p81 = scmp.eq.s32.totalorder %s10, 3
    %p82 = scmp.ne.s32.totalorder %s77, %s79
    %p83 = scmp.eq.s32.totalorder %s10, 0
    %p84 = por %p82, %p83
    %p85 = scmp.ne.s32.totalorder %s77, %s79
    %p86 = scmp.eq.s32.totalorder %s15, 3
    %p87 = por %p85, %p86
    %p88 = scmp.ne.s32.totalorder %s79, %s80
    %p89 = scmp.eq.s32.totalorder %s15, 0
    %p90 = por %p88, %p89
    %p91 = scmp.ne.s32.totalorder %s79, %s80
    %p92 = scmp.eq.s32.totalorder %s16, 3
    %p93 = por %p91, %p92
    %p95 = scmp.ne.s32.totalorder %s80, %s94
    %p96 = scmp.eq.s32.totalorder %s16, 0
    %p97 = por %p95, %p96
    %s99 = sadd.s32 %s98, 1
    %p102 = scmp.eq.s32.totalorder %s10, 3
    %p103 = scmp.ne.s32.totalorder %s98, %s100
    %p104 = scmp.eq.s32.totalorder %s10, 0
    %p105 = por %p103, %p104
    %p106 = scmp.ne.s32.totalorder %s98, %s100
    %p107 = scmp.eq.s32.totalorder %s15, 3
    %p108 = por %p106, %p107
    %p109 = scmp.ne.s32.totalorder %s100, %s101
    %p110 = scmp.eq.s32.totalorder %s15, 0
    %p111 = por %p109, %p110
    %p112 = scmp.ne.s32.totalorder %s100, %s101
    %p113 = scmp.eq.s32.totalorder %s16, 3
    %p114 = por %p112, %p113
    %p116 = scmp.ne.s32.totalorder %s101, %s115
    %p117 = scmp.eq.s32.totalorder %s16, 0
    %p118 = por %p116, %p117
    %s119 = ssub.s32 %s17, %s29
    %s120 = ssub.s32 %s18, %s25
    %s121 = sor.u32 %s119, %s120
    %p122 = scmp.eq.s32.totalorder %s121, 0
    %s124 = sadd.s32 %s123, 1
    %s125 = scalar_select %p122, %s123, %s124
    %p128 = pneg %p122
    %p129 = scmp.eq.s32.totalorder %s10, 3
    %p130 = por %p128, %p129
    %p131 = scmp.ne.s32.totalorder %s123, %s126
    %p132 = scmp.eq.s32.totalorder %s10, 0
    %p133 = por %p131, %p132
    %p134 = scmp.ne.s32.totalorder %s123, %s126
    %p135 = scmp.eq.s32.totalorder %s15, 3
    %p136 = por %p134, %p135
    %p137 = scmp.ne.s32.totalorder %s126, %s127
    %p138 = scmp.eq.s32.totalorder %s15, 0
    %p139 = por %p137, %p138
    %p140 = scmp.ne.s32.totalorder %s126, %s127
    %p141 = scmp.eq.s32.totalorder %s16, 3
    %p142 = por %p140, %p141
    %p144 = scmp.ne.s32.totalorder %s127, %s143
    %p145 = scmp.eq.s32.totalorder %s16, 0
    %p146 = por %p144, %p145
    %p147 = scmp.le.s32.totalorder 1, %s10
    %p148 = scmp.lt.s32.totalorder %s10, 5
    %p149 = pnand %p147, %p148
    %p150 = pneg %p149
    // Predicated region
    $region9: #{_lambda_.7} parent=5 // pred_check
      _
    $region10: #{_lambda_.7} parent=5 // pred_check_branch
      %152 = sbr.rel (%p149) target = $region12
    $region11: #{_lambda_.7} parent=5 // pred_region
      %s153 = ssub.s32 %s10, 1
      // Predicated region
      $region13: #{_lambda_.7} parent=11 // pred_check
        %p154 = pneg %p69
      $region14: #{_lambda_.7} parent=11 // pred_check_branch
        %156 = sbr.rel (%p154) target = $region16
      $region15: #{_lambda_.7} parent=11 // pred_region
        _
      $region16: #{_lambda_.7} parent=11 // pred_fallthru
        _
      // Predicated region
      $region17: #{_lambda_.7} parent=11 // pred_check
        %p157 = pneg %p90
      $region18: #{_lambda_.7} parent=11 // pred_check_branch
        %159 = sbr.rel (%p157) target = $region20
      $region19: #{_lambda_.7} parent=11 // pred_region
        _
      $region20: #{_lambda_.7} parent=11 // pred_fallthru
        _
      // Predicated region
      $region21: #{_lambda_.7} parent=11 // pred_check
        %p160 = pneg %p111
      $region22: #{_lambda_.7} parent=11 // pred_check_branch
        %162 = sbr.rel (%p160) target = $region24
      $region23: #{_lambda_.7} parent=11 // pred_region
        _
      $region24: #{_lambda_.7} parent=11 // pred_fallthru
        _
    $region12: #{_lambda_.7} parent=5 // pred_fallthru
      _
    %p163 = scmp.lt.s32.totalorder %s10, 4
    // Predicated region
    $region25: #{_lambda_.7} parent=5 // pred_check
      %p164 = pneg %p163
    $region26: #{_lambda_.7} parent=5 // pred_check_branch
      %166 = sbr.rel (%p164) target = $region28
    $region27: #{_lambda_.7} parent=5 // pred_region
      // Predicated region
      $region29: #{_lambda_.7} parent=27 // pred_check
        %p167 = pneg %p42
      $region30: #{_lambda_.7} parent=27 // pred_check_branch
        %169 = sbr.rel (%p167) target = $region32
      $region31: #{_lambda_.7} parent=27 // pred_region
        %p170 = scmp.lt.s32.totalorder %s17, 1
        %s171 = scalar_select %p170, %s17, 1
        %s172 = smul.addr %s171, 10
        %s173 = smul.addr %s172, 4
        %s174 = scalar_lea.vmem %s0, %s173
      $region32: #{_lambda_.7} parent=27 // pred_fallthru
        _
    $region28: #{_lambda_.7} parent=5 // pred_fallthru
      _
    %p175 = scmp.le.s32.totalorder 1, %s10
    %p176 = scmp.lt.s32.totalorder %s10, 5
    %p177 = pnand %p175, %p176
    %p178 = pneg %p177
    // Predicated region
    $region33: #{_lambda_.7} parent=5 // pred_check
      _
    $region34: #{_lambda_.7} parent=5 // pred_check_branch
      %180 = sbr.rel (%p177) target = $region36
    $region35: #{_lambda_.7} parent=5 // pred_region
      %s181 = ssub.s32 %s10, 1
      %p182 = scmp.lt.s32.totalorder %s19, 1
      %s183 = scalar_select %p182, %s19, 1
      %s184 = smul.addr %s183, 10
      %s185 = smul.addr %s184, 4
      %s186 = scalar_lea.vmem %s0, %s185
      %p187 = pneg %p48
      %p188 = pneg %p45
      %p189 = pneg %p69
      %p190 = pneg %p66
      %p191 = pneg %p90
      %p192 = pneg %p87
      %p193 = pneg %p111
      %p194 = pneg %p108
      %p195 = pneg %p139
      %p196 = pneg %p136
      %s197 = smul.u32 4, %s20
      %p198 = scmp.lt.s32.totalorder %s19, 1
      %s199 = scalar_select %p198, %s19, 1
      %p200 = scmp.lt.s32.totalorder %s197, 7
      %s201 = scalar_select %p200, %s197, 7
      %s202 = smul.addr %s199, 8
      %s203 = sadd.s32 %s201, %s202
      %s204 = smul.addr %s203, 4
      %s205 = scalar_lea.vmem %s4, %s204
      %p206 = scmp.lt.s32.totalorder %s19, 1
      %s207 = scalar_select %p206, %s19, 1
      %s208 = smul.addr %s207, 10
      %s209 = smul.addr %s208, 4
      %s210 = scalar_lea.vmem %s0, %s209
      %s211 = smul.u32 4, %s20
      %p212 = scmp.lt.s32.totalorder %s19, 1
      %s213 = scalar_select %p212, %s19, 1
      %p214 = scmp.lt.s32.totalorder %s211, 7
      %s215 = scalar_select %p214, %s211, 7
      %s216 = smul.addr %s213, 8
      %s217 = sadd.s32 %s215, %s216
      %s218 = smul.addr %s217, 4
      %s219 = scalar_lea.vmem %s4, %s218
      %s220 = smul.u32 4, %s20
      %s222 = smul.u32 %s20, 32
      %s223 = sshra.s32 %s222, 3
      %s224 = sand.u32 %s222, 7
      %s225 = smul.addr %s223, 4
      %s226 = scalar_lea.vmem %s210, %s225
      %v227 = vld [vmem:[%s226] sm:$0xf]
      %v228 = vld [vmem:[%s226 + $0x4] sm:$0xf]
      %v229 = vld [vmem:[%s226 + $0x8] sm:$0xf]
      %v230 = vld [vmem:[%s226 + $0xc] sm:$0xf]
      %v231 = vld [vmem:[%s1] sm:$0xf]
      %v232 = vld [vmem:[%s1 + $0x4] sm:$0xf]
      %v233 = vld [vmem:[%s1 + $0x8] sm:$0xf]
      %v234 = vld [vmem:[%s1 + $0xc] sm:$0xf]
      %v235 = vld [vmem:[%s1 + $0x10] sm:$0xf]
      %v236 = vld [vmem:[%s1 + $0x14] sm:$0xf]
      %v237 = vld [vmem:[%s1 + $0x18] sm:$0xf]
      %v238 = vld [vmem:[%s1 + $0x1c] sm:$0xf]
      %v239 = vld [vmem:[%s1 + $0x20] sm:$0xf]
      %v240 = vld [vmem:[%s1 + $0x24] sm:$0xf]
      %v241 = vld [vmem:[%s1 + $0x28] sm:$0xf]
      %v242 = vld [vmem:[%s1 + $0x2c] sm:$0xf]
      %v243 = vld [vmem:[%s1 + $0x30] sm:$0xf]
      %v244 = vld [vmem:[%s1 + $0x34] sm:$0xf]
      %v245 = vld [vmem:[%s1 + $0x38] sm:$0xf]
      %v246 = vld [vmem:[%s1 + $0x3c] sm:$0xf]
      %v251 = vunpack.c.l.b16 %v227
      %v252 = vunpack.c.l.b16 %v228
      %v253 = vunpack.c.l.b16 %v229
      %v254 = vunpack.c.l.b16 %v230
      %v255 = vpack.c.b16 %v252, %v251
      %v256 = vpack.c.b16 %v254, %v253
      %v275 = vunpack.c.l.b16 %v231
      %v276 = vunpack.c.l.b16 %v232
      %v277 = vunpack.c.l.b16 %v233
      %v278 = vunpack.c.l.b16 %v234
      %v279 = vunpack.c.l.b16 %v235
      %v280 = vunpack.c.l.b16 %v236
      %v281 = vunpack.c.l.b16 %v237
      %v282 = vunpack.c.l.b16 %v238
      %v283 = vunpack.c.l.b16 %v239
      %v284 = vunpack.c.l.b16 %v240
      %v285 = vunpack.c.l.b16 %v241
      %v286 = vunpack.c.l.b16 %v242
      %v287 = vunpack.c.l.b16 %v243
      %v288 = vunpack.c.l.b16 %v244
      %v289 = vunpack.c.l.b16 %v245
      %v290 = vunpack.c.l.b16 %v246
      %v291 = vpack.c.b16 %v276, %v275
      %v292 = vpack.c.b16 %v278, %v277
      %v293 = vpack.c.b16 %v280, %v279
      %v294 = vpack.c.b16 %v282, %v281
      %v295 = vpack.c.b16 %v284, %v283
      %v296 = vpack.c.b16 %v286, %v285
      %v297 = vpack.c.b16 %v288, %v287
      %v298 = vpack.c.b16 %v290, %v289
      %307 = vmatprep.subr.bf16.mxu0 0
      %308 = vmatpush1.bf16.msra.mxu0 %v298
      %309 = vmatprep.subr.bf16.mxu0 0
      %310 = vmatpush1.bf16.msra.mxu0 %v297
      %311 = vmatprep.subr.bf16.mxu0 0
      %312 = vmatpush1.bf16.msra.mxu0 %v296
      %313 = vmatprep.subr.bf16.mxu0 0
      %314 = vmatpush1.bf16.msra.mxu0 %v295
      %315 = vmatprep.subr.bf16.mxu0 0
      %316 = vmatpush1.bf16.msra.mxu0 %v294
      %317 = vmatprep.subr.bf16.mxu0 0
      %318 = vmatpush1.bf16.msra.mxu0 %v293
      %319 = vmatprep.subr.bf16.mxu0 0
      %320 = vmatpush1.bf16.msra.mxu0 %v292
      %321 = vmatprep.subr.bf16.mxu0 0
      %322 = vmatpush1.bf16.msra.mxu0 %v291
      %323 = vmatprep.subr.bf16.mxu0 0
      %324 = vmatpush2.bf16.msra.mxu0 0
      %325 = vmatprep.subr.bf16.mxu0 0
      %326 = vmatpush2.bf16.msra.mxu0 0
      %327 = vmatprep.subr.bf16.mxu0 0
      %328 = vmatpush2.bf16.msra.mxu0 0
      %329 = vmatprep.subr.bf16.mxu0 0
      %330 = vmatpush2.bf16.msra.mxu0 0
      %331 = vmatprep.subr.bf16.mxu0 0
      %332 = vmatpush2.bf16.msra.mxu0 0
      %333 = vmatprep.subr.bf16.mxu0 0
      %334 = vmatpush2.bf16.msra.mxu0 0
      %335 = vmatprep.subr.bf16.mxu0 0
      %336 = vmatpush2.bf16.msra.mxu0 0
      %337 = vmatprep.subr.bf16.mxu0 0
      %338 = vmatpush2.bf16.msra.mxu0 0
      %339 = vmatprep.mubr.bf16.mxu0 0
      %340 = vmatmul.mubr.bf16.gmra.mxu0 %v255
      %v341 = vpop.f32.mrf.mxu0
      %v342 = vadd.f32 0.0, %v341
      %v343 = vpop.f32.mrf.mxu0
      %v344 = vpop.f32.mrf.mxu0
      %v345 = vadd.f32 0.0, %v344
      %v346 = vpop.f32.mrf.mxu0
      %347 = vmatprep.mubr.bf16.mxu0 0
      %348 = vmatmul.mubr.bf16.gmra.mxu0 %v256
      %v349 = vpop.f32.mrf.mxu0
      %v350 = vadd.f32 0.0, %v349
      %v351 = vpop.f32.mrf.mxu0
      %v352 = vpop.f32.mrf.mxu0
      %v353 = vadd.f32 0.0, %v352
      %v354 = vpop.f32.mrf.mxu0
      %355 = vdwg.mxu0
      %356 = vst [vmem:[#allocation2] sm:$0xff] %v342
      %357 = vst [vmem:[#allocation2 + $0x8] sm:$0xff] %v345
      %358 = vst [vmem:[#allocation2 + $0x10] sm:$0xff] %v350
      %359 = vst [vmem:[#allocation2 + $0x18] sm:$0xff] %v353
      %s360 = sadd.s32 %s222, 16
      %s361 = sshra.s32 %s360, 3
      %s362 = sand.u32 %s360, 7
      %s363 = smul.addr %s361, 4
      %s364 = scalar_lea.vmem %s210, %s363
      %v365 = vld [vmem:[%s364] sm:$0xf]
      %v366 = vld [vmem:[%s364 + $0x4] sm:$0xf]
      %v367 = vld [vmem:[%s364 + $0x8] sm:$0xf]
      %v368 = vld [vmem:[%s364 + $0xc] sm:$0xf]
      %s369 = scalar_lea.vmem %s1, 64
      %v370 = vld [vmem:[%s369] sm:$0xf]
      %v371 = vld [vmem:[%s369 + $0x4] sm:$0xf]
      %v372 = vld [vmem:[%s369 + $0x8] sm:$0xf]
      %v373 = vld [vmem:[%s369 + $0xc] sm:$0xf]
      %v374 = vld [vmem:[%s369 + $0x10] sm:$0xf]
      %v375 = vld [vmem:[%s369 + $0x14] sm:$0xf]
      %v376 = vld [vmem:[%s369 + $0x18] sm:$0xf]
      %v377 = vld [vmem:[%s369 + $0x1c] sm:$0xf]
      %v378 = vld [vmem:[%s369 + $0x20] sm:$0xf]
      %v379 = vld [vmem:[%s369 + $0x24] sm:$0xf]
      %v380 = vld [vmem:[%s369 + $0x28] sm:$0xf]
      %v381 = vld [vmem:[%s369 + $0x2c] sm:$0xf]
      %v382 = vld [vmem:[%s369 + $0x30] sm:$0xf]
      %v383 = vld [vmem:[%s369 + $0x34] sm:$0xf]
      %v384 = vld [vmem:[%s369 + $0x38] sm:$0xf]
      %v385 = vld [vmem:[%s369 + $0x3c] sm:$0xf]
      %v390 = vunpack.c.l.b16 %v365
      %v391 = vunpack.c.l.b16 %v366
      %v392 = vunpack.c.l.b16 %v367
      %v393 = vunpack.c.l.b16 %v368
      %v394 = vpack.c.b16 %v391, %v390
      %v395 = vpack.c.b16 %v393, %v392
      %v414 = vunpack.c.l.b16 %v370
      %v415 = vunpack.c.l.b16 %v371
      %v416 = vunpack.c.l.b16 %v372
      %v417 = vunpack.c.l.b16 %v373
      %v418 = vunpack.c.l.b16 %v374
      %v419 = vunpack.c.l.b16 %v375
      %v420 = vunpack.c.l.b16 %v376
      %v421 = vunpack.c.l.b16 %v377
      %v422 = vunpack.c.l.b16 %v378
      %v423 = vunpack.c.l.b16 %v379
      %v424 = vunpack.c.l.b16 %v380
      %v425 = vunpack.c.l.b16 %v381
      %v426 = vunpack.c.l.b16 %v382
      %v427 = vunpack.c.l.b16 %v383
      %v428 = vunpack.c.l.b16 %v384
      %v429 = vunpack.c.l.b16 %v385
      %v430 = vpack.c.b16 %v415, %v414
      %v431 = vpack.c.b16 %v417, %v416
      %v432 = vpack.c.b16 %v419, %v418
      %v433 = vpack.c.b16 %v421, %v420
      %v434 = vpack.c.b16 %v423, %v422
      %v435 = vpack.c.b16 %v425, %v424
      %v436 = vpack.c.b16 %v427, %v426
      %v437 = vpack.c.b16 %v429, %v428
      %446 = vmatprep.subr.bf16.mxu0 0
      %447 = vmatpush1.bf16.msra.mxu0 %v437
      %448 = vmatprep.subr.bf16.mxu0 0
      %449 = vmatpush1.bf16.msra.mxu0 %v436
      %450 = vmatprep.subr.bf16.mxu0 0
      %451 = vmatpush1.bf16.msra.mxu0 %v435
      %452 = vmatprep.subr.bf16.mxu0 0
      %453 = vmatpush1.bf16.msra.mxu0 %v434
      %454 = vmatprep.subr.bf16.mxu0 0
      %455 = vmatpush1.bf16.msra.mxu0 %v433
      %456 = vmatprep.subr.bf16.mxu0 0
      %457 = vmatpush1.bf16.msra.mxu0 %v432
      %458 = vmatprep.subr.bf16.mxu0 0
      %459 = vmatpush1.bf16.msra.mxu0 %v431
      %460 = vmatprep.subr.bf16.mxu0 0
      %461 = vmatpush1.bf16.msra.mxu0 %v430
      %462 = vmatprep.subr.bf16.mxu0 0
      %463 = vmatpush2.bf16.msra.mxu0 0
      %464 = vmatprep.subr.bf16.mxu0 0
      %465 = vmatpush2.bf16.msra.mxu0 0
      %466 = vmatprep.subr.bf16.mxu0 0
      %467 = vmatpush2.bf16.msra.mxu0 0
      %468 = vmatprep.subr.bf16.mxu0 0
      %469 = vmatpush2.bf16.msra.mxu0 0
      %470 = vmatprep.subr.bf16.mxu0 0
      %471 = vmatpush2.bf16.msra.mxu0 0
      %472 = vmatprep.subr.bf16.mxu0 0
      %473 = vmatpush2.bf16.msra.mxu0 0
      %474 = vmatprep.subr.bf16.mxu0 0
      %475 = vmatpush2.bf16.msra.mxu0 0
      %476 = vmatprep.subr.bf16.mxu0 0
      %477 = vmatpush2.bf16.msra.mxu0 0
      %478 = vmatprep.mubr.bf16.mxu0 0
      %479 = vmatmul.mubr.bf16.gmra.mxu0 %v394
      %v480 = vpop.f32.mrf.mxu0
      %v481 = vadd.f32 0.0, %v480
      %v482 = vpop.f32.mrf.mxu0
      %v483 = vpop.f32.mrf.mxu0
      %v484 = vadd.f32 0.0, %v483
      %v485 = vpop.f32.mrf.mxu0
      %486 = vmatprep.mubr.bf16.mxu0 0
      %487 = vmatmul.mubr.bf16.gmra.mxu0 %v395
      %v488 = vpop.f32.mrf.mxu0
      %v489 = vadd.f32 0.0, %v488
      %v490 = vpop.f32.mrf.mxu0
      %v491 = vpop.f32.mrf.mxu0
      %v492 = vadd.f32 0.0, %v491
      %v493 = vpop.f32.mrf.mxu0
      %494 = vdwg.mxu0
      %v495 = vld [vmem:[#allocation2] sm:$0xff]
      %v496 = vld [vmem:[#allocation2 + $0x8] sm:$0xff]
      %v497 = vld [vmem:[#allocation2 + $0x10] sm:$0xff]
      %v498 = vld [vmem:[#allocation2 + $0x18] sm:$0xff]
      %v499 = vadd.f32 %v495, %v481
      %v500 = vadd.f32 %v496, %v484
      %v501 = vadd.f32 %v497, %v489
      %v502 = vadd.f32 %v498, %v492
      %503 = vst [vmem:[#allocation2] sm:$0xff] %v499
      %504 = vst [vmem:[#allocation2 + $0x8] sm:$0xff] %v500
      %505 = vst [vmem:[#allocation2 + $0x10] sm:$0xff] %v501
      %506 = vst [vmem:[#allocation2 + $0x18] sm:$0xff] %v502
      %v507 = vld [vmem:[#allocation2] sm:$0xff]
      %v508 = vld [vmem:[#allocation2 + $0x8] sm:$0xff]
      %v509 = vld [vmem:[#allocation2 + $0x10] sm:$0xff]
      %v510 = vld [vmem:[#allocation2 + $0x18] sm:$0xff]
      %v511 = vld [vmem:[%s2] sm:$0x1]
      %v513 = vlaneseq
      %v514 = vshrl.u32 %v513, 7
      %v515 = vsub.s32 0, %v514
      %v516 = vrot.slane %v511, %v515
      %v518 = vmul.f32 %v507, %v516
      %v519 = vmul.f32 %v508, %v516
      %v520 = vmul.f32 %v509, %v516
      %v521 = vmul.f32 %v510, %v516
      %v522 = vld [vmem:[%s3] sm:$0x1]
      %v524 = vlaneseq
      %v525 = vshrl.u32 %v524, 7
      %v526 = vsub.s32 0, %v525
      %v527 = vrot.slane %v522, %v526
      %v529 = vadd.f32 %v518, %v527
      %v530 = vadd.f32 %v519, %v527
      %v531 = vadd.f32 %v520, %v527
      %v532 = vadd.f32 %v521, %v527
      %v533 = vmul.f32 %v529, 0.2
      %v534 = vmul.f32 %v530, 0.2
      %v535 = vmul.f32 %v531, 0.2
      %v536 = vmul.f32 %v532, 0.2
      %v537 = vmax.f32 %v529, %v533
      %v538 = vmax.f32 %v530, %v534
      %v539 = vmax.f32 %v531, %v535
      %v540 = vmax.f32 %v532, %v536
      %v541 = vpack.c.bf16 %v538, %v537
      %v542 = vpack.c.bf16 %v540, %v539
      %v545 = vunpack.c.l.b16 %v541
      %v546 = vunpack.c.h.b16 %v541
      %v547 = vunpack.c.l.b16 %v542
      %v548 = vunpack.c.h.b16 %v542
      %v549 = vpack.c.b16 %v545, %v545
      %v550 = vpack.c.b16 %v546, %v546
      %v551 = vpack.c.b16 %v547, %v547
      %v552 = vpack.c.b16 %v548, %v548
      %vm557 = vcmask 257024
      %558 = vst.msk [vmem:[%s219] sm:$0xf] %vm557, %v549
      %559 = vst.msk [vmem:[%s219 + $0x4] sm:$0xf] %vm557, %v550
      %560 = vst.msk [vmem:[%s219 + $0x8] sm:$0xf] %vm557, %v551
      %561 = vst.msk [vmem:[%s219 + $0xc] sm:$0xf] %vm557, %v552
      %s562 = smul.u32 4, %s20
      %p563 = scmp.lt.s32.totalorder %s19, 1
      %s564 = scalar_select %p563, %s19, 1
      %p565 = scmp.lt.s32.totalorder %s562, 7
      %s566 = scalar_select %p565, %s562, 7
      %s567 = smul.addr %s564, 8
      %s568 = sadd.s32 %s566, %s567
      %s569 = smul.addr %s568, 4
      %s570 = scalar_lea.vmem %s4, %s569
      // Predicated region
      $region37: #{_lambda_.7} parent=35 // pred_check
        %p571 = pneg %p136
      $region38: #{_lambda_.7} parent=35 // pred_check_branch
        %573 = sbr.rel (%p571) target = $region40
      $region39: #{_lambda_.7} parent=35 // pred_region
        %s574 = smul.u32 4, %s20
      $region40: #{_lambda_.7} parent=35 // pred_fallthru
        _
    $region36: #{_lambda_.7} parent=5 // pred_fallthru
      _
    %p575 = scmp.le.s32.totalorder 2, %s10
    // Predicated region
    $region41: #{_lambda_.7} parent=5 // pred_check
      %p576 = pneg %p575
    $region42: #{_lambda_.7} parent=5 // pred_check_branch
      %578 = sbr.rel (%p576) target = $region44
    $region43: #{_lambda_.7} parent=5 // pred_region
      %s579 = ssub.s32 %s10, 2
      // Predicated region
      $region45: #{_lambda_.7} parent=43 // pred_check
        %p580 = pneg %p142
      $region46: #{_lambda_.7} parent=43 // pred_check_branch
        %582 = sbr.rel (%p580) target = $region48
      $region47: #{_lambda_.7} parent=43 // pred_region
        %s583 = smul.u32 4, %s22
        %p584 = scmp.lt.s32.totalorder %s21, 1
        %s585 = scalar_select %p584, %s21, 1
        %p586 = scmp.lt.s32.totalorder %s583, 7
        %s587 = scalar_select %p586, %s583, 7
        %s588 = smul.addr %s585, 8
        %s589 = sadd.s32 %s587, %s588
        %s590 = smul.addr %s589, 4
        %s591 = scalar_lea.vmem %s4, %s590
      $region48: #{_lambda_.7} parent=43 // pred_fallthru
        _
    $region44: #{_lambda_.7} parent=5 // pred_fallthru
      _
  $region6: #{_lambda_.7} parent=0 // loop_footer
    %s14 = sadd.s32 1, %s10
  $region7: #{_lambda_.7} parent=0 // loop_footer_branch
    %9 = sbr.rel target = $region3
  $region8: #{_lambda_.7} parent=0 // loop_exit
    _

// kernel: _lambda_.8
$region0: #{_lambda_.8}
  #allocation0 [shape = 'u32[]', space=smem, size = 0x4, offset = 0x4, fixed_abs, tag = 'smem constant byte address 0x4 - core index']
  #allocation1 [shape = 'u32[144,128]{1,0:T(1,128)}', space=vmem, size = 0x12000, scoped, tag = 'internal scratch']
  #allocation2 [shape = 'f32[32,128]{1,0:T(8,128)}', space=vmem, size = 0x4000, scoped, tag = 'scratch operand']
  %s0 = inlined_call_operand.vmem [shape: bf16[2,112,128], index: 0, kind: input, shape index: {}]
  %s1 = inlined_call_operand.vmem [shape: bf16[4,128,128], index: 1, kind: input, shape index: {}]
  %s2 = inlined_call_operand.vmem [shape: f32[1,128], index: 2, kind: input, shape index: {}]
  %s3 = inlined_call_operand.vmem [shape: f32[1,128], index: 3, kind: input, shape index: {}]
  %s4 = inlined_call_operand.vmem [shape: bf16[2,64,128], index: 4, kind: output, shape index: {}]
  %s5 = sld [smem:[#allocation0]]
  $region49: #{_lambda_.8} parent=0
    _
  %s7 = ssub.s32 1, %s5
  %s8 = scalar_select 0, %s7, %s5
  loop: start=0, step=1, limit=6
  $region2: #{_lambda_.8} parent=0 // loop_pre_header
    _
  $region3: #{_lambda_.8} parent=0 // loop_header
    %s10 = sphi 0, %s14
    %p11 = scmp.ge.s32.totalorder %s10, 6
    %s17 = sphi 0, %s29
    %s18 = sphi 0, %s25
    %s19 = sphi 0, %s17
    %s20 = sphi 0, %s18
    %s21 = sphi 0, %s19
    %s22 = sphi 0, %s20
    %s32 = sphi 0, %s34
    %s35 = sphi 0, %s32
    %s36 = sphi 0, %s35
    %s52 = sphi 0, %s36
    %s56 = sphi 0, %s56
    %s58 = sphi 0, %s56
    %s59 = sphi 0, %s58
    %s73 = sphi 0, %s59
    %s77 = sphi 0, %s77
    %s79 = sphi 0, %s77
    %s80 = sphi 0, %s79
    %s94 = sphi 0, %s80
    %s98 = sphi 0, %s98
    %s100 = sphi 0, %s98
    %s101 = sphi 0, %s100
    %s115 = sphi 0, %s101
    %s123 = sphi 0, %s125
    %s126 = sphi 0, %s123
    %s127 = sphi 0, %s126
    %s143 = sphi 0, %s127
  $region4: #{_lambda_.8} parent=0 // loop_header_branch
    %13 = sbr.rel (%p11) target = $region8
  $region5: #{_lambda_.8} parent=0 // loop_body
    %s15 = ssub.s32 %s10, 1
    %s16 = ssub.s32 %s10, 2
    %s23 = sadd.s32 1, %s18
    %p24 = scmp.ge.s32.totalorder %s23, 2
    %s25 = scalar_select %p24, 0, %s23
    %s26 = sadd.s32 1, %s17
    %s27 = scalar_select %p24, %s26, %s17
    %p28 = scmp.ge.s32.totalorder %s27, 2
    %s29 = scalar_select %p28, 0, %s27
    %s30 = ssub.s32 %s17, %s29
    %p31 = scmp.eq.s32.totalorder %s30, 0
    %s33 = sadd.s32 %s32, 1
    %s34 = scalar_select %p31, %s32, %s33
    %p37 = pneg %p31
    %p38 = scmp.eq.s32.totalorder %s10, 3
    %p39 = por %p37, %p38
    %p40 = scmp.ne.s32.totalorder %s32, %s35
    %p41 = scmp.eq.s32.totalorder %s10, 0
    %p42 = por %p40, %p41
    %p43 = scmp.ne.s32.totalorder %s32, %s35
    %p44 = scmp.eq.s32.totalorder %s15, 3
    %p45 = por %p43, %p44
    %p46 = scmp.ne.s32.totalorder %s35, %s36
    %p47 = scmp.eq.s32.totalorder %s15, 0
    %p48 = por %p46, %p47
    %p49 = scmp.ne.s32.totalorder %s35, %s36
    %p50 = scmp.eq.s32.totalorder %s16, 3
    %p51 = por %p49, %p50
    %p53 = scmp.ne.s32.totalorder %s36, %s52
    %p54 = scmp.eq.s32.totalorder %s16, 0
    %p55 = por %p53, %p54
    %s57 = sadd.s32 %s56, 1
    %p60 = scmp.eq.s32.totalorder %s10, 3
    %p61 = scmp.ne.s32.totalorder %s56, %s58
    %p62 = scmp.eq.s32.totalorder %s10, 0
    %p63 = por %p61, %p62
    %p64 = scmp.ne.s32.totalorder %s56, %s58
    %p65 = scmp.eq.s32.totalorder %s15, 3
    %p66 = por %p64, %p65
    %p67 = scmp.ne.s32.totalorder %s58, %s59
    %p68 = scmp.eq.s32.totalorder %s15, 0
    %p69 = por %p67, %p68
    %p70 = scmp.ne.s32.totalorder %s58, %s59
    %p71 = scmp.eq.s32.totalorder %s16, 3
    %p72 = por %p70, %p71
    %p74 = scmp.ne.s32.totalorder %s59, %s73
    %p75 = scmp.eq.s32.totalorder %s16, 0
    %p76 = por %p74, %p75
    %s78 = sadd.s32 %s77, 1
    %p81 = scmp.eq.s32.totalorder %s10, 3
    %p82 = scmp.ne.s32.totalorder %s77, %s79
    %p83 = scmp.eq.s32.totalorder %s10, 0
    %p84 = por %p82, %p83
    %p85 = scmp.ne.s32.totalorder %s77, %s79
    %p86 = scmp.eq.s32.totalorder %s15, 3
    %p87 = por %p85, %p86
    %p88 = scmp.ne.s32.totalorder %s79, %s80
    %p89 = scmp.eq.s32.totalorder %s15, 0
    %p90 = por %p88, %p89
    %p91 = scmp.ne.s32.totalorder %s79, %s80
    %p92 = scmp.eq.s32.totalorder %s16, 3
    %p93 = por %p91, %p92
    %p95 = scmp.ne.s32.totalorder %s80, %s94
    %p96 = scmp.eq.s32.totalorder %s16, 0
    %p97 = por %p95, %p96
    %s99 = sadd.s32 %s98, 1
    %p102 = scmp.eq.s32.totalorder %s10, 3
    %p103 = scmp.ne.s32.totalorder %s98, %s100
    %p104 = scmp.eq.s32.totalorder %s10, 0
    %p105 = por %p103, %p104
    %p106 = scmp.ne.s32.totalorder %s98, %s100
    %p107 = scmp.eq.s32.totalorder %s15, 3
    %p108 = por %p106, %p107
    %p109 = scmp.ne.s32.totalorder %s100, %s101
    %p110 = scmp.eq.s32.totalorder %s15, 0
    %p111 = por %p109, %p110
    %p112 = scmp.ne.s32.totalorder %s100, %s101
    %p113 = scmp.eq.s32.totalorder %s16, 3
    %p114 = por %p112, %p113
    %p116 = scmp.ne.s32.totalorder %s101, %s115
    %p117 = scmp.eq.s32.totalorder %s16, 0
    %p118 = por %p116, %p117
    %s119 = ssub.s32 %s17, %s29
    %s120 = ssub.s32 %s18, %s25
    %s121 = sor.u32 %s119, %s120
    %p122 = scmp.eq.s32.totalorder %s121, 0
    %s124 = sadd.s32 %s123, 1
    %s125 = scalar_select %p122, %s123, %s124
    %p128 = pneg %p122
    %p129 = scmp.eq.s32.totalorder %s10, 3
    %p130 = por %p128, %p129
    %p131 = scmp.ne.s32.totalorder %s123, %s126
    %p132 = scmp.eq.s32.totalorder %s10, 0
    %p133 = por %p131, %p132
    %p134 = scmp.ne.s32.totalorder %s123, %s126
    %p135 = scmp.eq.s32.totalorder %s15, 3
    %p136 = por %p134, %p135
    %p137 = scmp.ne.s32.totalorder %s126, %s127
    %p138 = scmp.eq.s32.totalorder %s15, 0
    %p139 = por %p137, %p138
    %p140 = scmp.ne.s32.totalorder %s126, %s127
    %p141 = scmp.eq.s32.totalorder %s16, 3
    %p142 = por %p140, %p141
    %p144 = scmp.ne.s32.totalorder %s127, %s143
    %p145 = scmp.eq.s32.totalorder %s16, 0
    %p146 = por %p144, %p145
    %p147 = scmp.le.s32.totalorder 1, %s10
    %p148 = scmp.lt.s32.totalorder %s10, 5
    %p149 = pnand %p147, %p148
    %p150 = pneg %p149
    // Predicated region
    $region9: #{_lambda_.8} parent=5 // pred_check
      _
    $region10: #{_lambda_.8} parent=5 // pred_check_branch
      %152 = sbr.rel (%p149) target = $region12
    $region11: #{_lambda_.8} parent=5 // pred_region
      %s153 = ssub.s32 %s10, 1
      // Predicated region
      $region13: #{_lambda_.8} parent=11 // pred_check
        %p154 = pneg %p69
      $region14: #{_lambda_.8} parent=11 // pred_check_branch
        %156 = sbr.rel (%p154) target = $region16
      $region15: #{_lambda_.8} parent=11 // pred_region
        _
      $region16: #{_lambda_.8} parent=11 // pred_fallthru
        _
      // Predicated region
      $region17: #{_lambda_.8} parent=11 // pred_check
        %p157 = pneg %p90
      $region18: #{_lambda_.8} parent=11 // pred_check_branch
        %159 = sbr.rel (%p157) target = $region20
      $region19: #{_lambda_.8} parent=11 // pred_region
        _
      $region20: #{_lambda_.8} parent=11 // pred_fallthru
        _
      // Predicated region
      $region21: #{_lambda_.8} parent=11 // pred_check
        %p160 = pneg %p111
      $region22: #{_lambda_.8} parent=11 // pred_check_branch
        %162 = sbr.rel (%p160) target = $region24
      $region23: #{_lambda_.8} parent=11 // pred_region
        _
      $region24: #{_lambda_.8} parent=11 // pred_fallthru
        _
    $region12: #{_lambda_.8} parent=5 // pred_fallthru
      _
    %p163 = scmp.lt.s32.totalorder %s10, 4
    // Predicated region
    $region25: #{_lambda_.8} parent=5 // pred_check
      %p164 = pneg %p163
    $region26: #{_lambda_.8} parent=5 // pred_check_branch
      %166 = sbr.rel (%p164) target = $region28
    $region27: #{_lambda_.8} parent=5 // pred_region
      // Predicated region
      $region29: #{_lambda_.8} parent=27 // pred_check
        %p167 = pneg %p42
      $region30: #{_lambda_.8} parent=27 // pred_check_branch
        %169 = sbr.rel (%p167) target = $region32
      $region31: #{_lambda_.8} parent=27 // pred_region
        %p170 = scmp.lt.s32.totalorder %s17, 1
        %s171 = scalar_select %p170, %s17, 1
        %s172 = smul.addr %s171, 14
        %s173 = smul.addr %s172, 4
        %s174 = scalar_lea.vmem %s0, %s173
      $region32: #{_lambda_.8} parent=27 // pred_fallthru
        _
    $region28: #{_lambda_.8} parent=5 // pred_fallthru
      _
    %p175 = scmp.le.s32.totalorder 1, %s10
    %p176 = scmp.lt.s32.totalorder %s10, 5
    %p177 = pnand %p175, %p176
    %p178 = pneg %p177
    // Predicated region
    $region33: #{_lambda_.8} parent=5 // pred_check
      _
    $region34: #{_lambda_.8} parent=5 // pred_check_branch
      %180 = sbr.rel (%p177) target = $region36
    $region35: #{_lambda_.8} parent=5 // pred_region
      %s181 = ssub.s32 %s10, 1
      %p182 = scmp.lt.s32.totalorder %s19, 1
      %s183 = scalar_select %p182, %s19, 1
      %s184 = smul.addr %s183, 14
      %s185 = smul.addr %s184, 4
      %s186 = scalar_lea.vmem %s0, %s185
      %p187 = pneg %p48
      %p188 = pneg %p45
      %p189 = pneg %p69
      %p190 = pneg %p66
      %p191 = pneg %p90
      %p192 = pneg %p87
      %p193 = pneg %p111
      %p194 = pneg %p108
      %p195 = pneg %p139
      %p196 = pneg %p136
      %s197 = smul.u32 4, %s20
      %p198 = scmp.lt.s32.totalorder %s19, 1
      %s199 = scalar_select %p198, %s19, 1
      %p200 = scmp.lt.s32.totalorder %s197, 7
      %s201 = scalar_select %p200, %s197, 7
      %s202 = smul.addr %s199, 8
      %s203 = sadd.s32 %s201, %s202
      %s204 = smul.addr %s203, 4
      %s205 = scalar_lea.vmem %s4, %s204
      %p206 = scmp.lt.s32.totalorder %s19, 1
      %s207 = scalar_select %p206, %s19, 1
      %s208 = smul.addr %s207, 14
      %s209 = smul.addr %s208, 4
      %s210 = scalar_lea.vmem %s0, %s209
      %s211 = smul.u32 4, %s20
      %p212 = scmp.lt.s32.totalorder %s19, 1
      %s213 = scalar_select %p212, %s19, 1
      %p214 = scmp.lt.s32.totalorder %s211, 7
      %s215 = scalar_select %p214, %s211, 7
      %s216 = smul.addr %s213, 8
      %s217 = sadd.s32 %s215, %s216
      %s218 = smul.addr %s217, 4
      %s219 = scalar_lea.vmem %s4, %s218
      %s220 = smul.u32 4, %s20
      %s222 = smul.u32 %s20, 32
      %s223 = sshra.s32 %s222, 3
      %s224 = sand.u32 %s222, 7
      %s225 = smul.addr %s223, 4
      %s226 = scalar_lea.vmem %s210, %s225
      %v227 = vld [vmem:[%s226] sm:$0xf]
      %v228 = vld [vmem:[%s226 + $0x4] sm:$0xf]
      %v229 = vld [vmem:[%s226 + $0x8] sm:$0xf]
      %v230 = vld [vmem:[%s226 + $0xc] sm:$0xf]
      %v231 = vld [vmem:[%s1] sm:$0xf]
      %v232 = vld [vmem:[%s1 + $0x4] sm:$0xf]
      %v233 = vld [vmem:[%s1 + $0x8] sm:$0xf]
      %v234 = vld [vmem:[%s1 + $0xc] sm:$0xf]
      %v235 = vld [vmem:[%s1 + $0x10] sm:$0xf]
      %v236 = vld [vmem:[%s1 + $0x14] sm:$0xf]
      %v237 = vld [vmem:[%s1 + $0x18] sm:$0xf]
      %v238 = vld [vmem:[%s1 + $0x1c] sm:$0xf]
      %v239 = vld [vmem:[%s1 + $0x20] sm:$0xf]
      %v240 = vld [vmem:[%s1 + $0x24] sm:$0xf]
      %v241 = vld [vmem:[%s1 + $0x28] sm:$0xf]
      %v242 = vld [vmem:[%s1 + $0x2c] sm:$0xf]
      %v243 = vld [vmem:[%s1 + $0x30] sm:$0xf]
      %v244 = vld [vmem:[%s1 + $0x34] sm:$0xf]
      %v245 = vld [vmem:[%s1 + $0x38] sm:$0xf]
      %v246 = vld [vmem:[%s1 + $0x3c] sm:$0xf]
      %v251 = vunpack.c.l.b16 %v227
      %v252 = vunpack.c.l.b16 %v228
      %v253 = vunpack.c.l.b16 %v229
      %v254 = vunpack.c.l.b16 %v230
      %v255 = vpack.c.b16 %v252, %v251
      %v256 = vpack.c.b16 %v254, %v253
      %v275 = vunpack.c.l.b16 %v231
      %v276 = vunpack.c.l.b16 %v232
      %v277 = vunpack.c.l.b16 %v233
      %v278 = vunpack.c.l.b16 %v234
      %v279 = vunpack.c.l.b16 %v235
      %v280 = vunpack.c.l.b16 %v236
      %v281 = vunpack.c.l.b16 %v237
      %v282 = vunpack.c.l.b16 %v238
      %v283 = vunpack.c.l.b16 %v239
      %v284 = vunpack.c.l.b16 %v240
      %v285 = vunpack.c.l.b16 %v241
      %v286 = vunpack.c.l.b16 %v242
      %v287 = vunpack.c.l.b16 %v243
      %v288 = vunpack.c.l.b16 %v244
      %v289 = vunpack.c.l.b16 %v245
      %v290 = vunpack.c.l.b16 %v246
      %v291 = vpack.c.b16 %v276, %v275
      %v292 = vpack.c.b16 %v278, %v277
      %v293 = vpack.c.b16 %v280, %v279
      %v294 = vpack.c.b16 %v282, %v281
      %v295 = vpack.c.b16 %v284, %v283
      %v296 = vpack.c.b16 %v286, %v285
      %v297 = vpack.c.b16 %v288, %v287
      %v298 = vpack.c.b16 %v290, %v289
      %307 = vmatprep.subr.bf16.mxu0 0
      %308 = vmatpush1.bf16.msra.mxu0 %v298
      %309 = vmatprep.subr.bf16.mxu0 0
      %310 = vmatpush1.bf16.msra.mxu0 %v297
      %311 = vmatprep.subr.bf16.mxu0 0
      %312 = vmatpush1.bf16.msra.mxu0 %v296
      %313 = vmatprep.subr.bf16.mxu0 0
      %314 = vmatpush1.bf16.msra.mxu0 %v295
      %315 = vmatprep.subr.bf16.mxu0 0
      %316 = vmatpush1.bf16.msra.mxu0 %v294
      %317 = vmatprep.subr.bf16.mxu0 0
      %318 = vmatpush1.bf16.msra.mxu0 %v293
      %319 = vmatprep.subr.bf16.mxu0 0
      %320 = vmatpush1.bf16.msra.mxu0 %v292
      %321 = vmatprep.subr.bf16.mxu0 0
      %322 = vmatpush1.bf16.msra.mxu0 %v291
      %323 = vmatprep.subr.bf16.mxu0 0
      %324 = vmatpush2.bf16.msra.mxu0 0
      %325 = vmatprep.subr.bf16.mxu0 0
      %326 = vmatpush2.bf16.msra.mxu0 0
      %327 = vmatprep.subr.bf16.mxu0 0
      %328 = vmatpush2.bf16.msra.mxu0 0
      %329 = vmatprep.subr.bf16.mxu0 0
      %330 = vmatpush2.bf16.msra.mxu0 0
      %331 = vmatprep.subr.bf16.mxu0 0
      %332 = vmatpush2.bf16.msra.mxu0 0
      %333 = vmatprep.subr.bf16.mxu0 0
      %334 = vmatpush2.bf16.msra.mxu0 0
      %335 = vmatprep.subr.bf16.mxu0 0
      %336 = vmatpush2.bf16.msra.mxu0 0
      %337 = vmatprep.subr.bf16.mxu0 0
      %338 = vmatpush2.bf16.msra.mxu0 0
      %339 = vmatprep.mubr.bf16.mxu0 0
      %340 = vmatmul.mubr.bf16.gmra.mxu0 %v255
      %v341 = vpop.f32.mrf.mxu0
      %v342 = vadd.f32 0.0, %v341
      %v343 = vpop.f32.mrf.mxu0
      %v344 = vpop.f32.mrf.mxu0
      %v345 = vadd.f32 0.0, %v344
      %v346 = vpop.f32.mrf.mxu0
      %347 = vmatprep.mubr.bf16.mxu0 0
      %348 = vmatmul.mubr.bf16.gmra.mxu0 %v256
      %v349 = vpop.f32.mrf.mxu0
      %v350 = vadd.f32 0.0, %v349
      %v351 = vpop.f32.mrf.mxu0
      %v352 = vpop.f32.mrf.mxu0
      %v353 = vadd.f32 0.0, %v352
      %v354 = vpop.f32.mrf.mxu0
      %355 = vdwg.mxu0
      %356 = vst [vmem:[#allocation2] sm:$0xff] %v342
      %357 = vst [vmem:[#allocation2 + $0x8] sm:$0xff] %v345
      %358 = vst [vmem:[#allocation2 + $0x10] sm:$0xff] %v350
      %359 = vst [vmem:[#allocation2 + $0x18] sm:$0xff] %v353
      %s360 = sadd.s32 %s222, 16
      %s361 = sshra.s32 %s360, 3
      %s362 = sand.u32 %s360, 7
      %s363 = smul.addr %s361, 4
      %s364 = scalar_lea.vmem %s210, %s363
      %v365 = vld [vmem:[%s364] sm:$0xf]
      %v366 = vld [vmem:[%s364 + $0x4] sm:$0xf]
      %v367 = vld [vmem:[%s364 + $0x8] sm:$0xf]
      %v368 = vld [vmem:[%s364 + $0xc] sm:$0xf]
      %s369 = scalar_lea.vmem %s1, 64
      %v370 = vld [vmem:[%s369] sm:$0xf]
      %v371 = vld [vmem:[%s369 + $0x4] sm:$0xf]
      %v372 = vld [vmem:[%s369 + $0x8] sm:$0xf]
      %v373 = vld [vmem:[%s369 + $0xc] sm:$0xf]
      %v374 = vld [vmem:[%s369 + $0x10] sm:$0xf]
      %v375 = vld [vmem:[%s369 + $0x14] sm:$0xf]
      %v376 = vld [vmem:[%s369 + $0x18] sm:$0xf]
      %v377 = vld [vmem:[%s369 + $0x1c] sm:$0xf]
      %v378 = vld [vmem:[%s369 + $0x20] sm:$0xf]
      %v379 = vld [vmem:[%s369 + $0x24] sm:$0xf]
      %v380 = vld [vmem:[%s369 + $0x28] sm:$0xf]
      %v381 = vld [vmem:[%s369 + $0x2c] sm:$0xf]
      %v382 = vld [vmem:[%s369 + $0x30] sm:$0xf]
      %v383 = vld [vmem:[%s369 + $0x34] sm:$0xf]
      %v384 = vld [vmem:[%s369 + $0x38] sm:$0xf]
      %v385 = vld [vmem:[%s369 + $0x3c] sm:$0xf]
      %v390 = vunpack.c.l.b16 %v365
      %v391 = vunpack.c.l.b16 %v366
      %v392 = vunpack.c.l.b16 %v367
      %v393 = vunpack.c.l.b16 %v368
      %v394 = vpack.c.b16 %v391, %v390
      %v395 = vpack.c.b16 %v393, %v392
      %v414 = vunpack.c.l.b16 %v370
      %v415 = vunpack.c.l.b16 %v371
      %v416 = vunpack.c.l.b16 %v372
      %v417 = vunpack.c.l.b16 %v373
      %v418 = vunpack.c.l.b16 %v374
      %v419 = vunpack.c.l.b16 %v375
      %v420 = vunpack.c.l.b16 %v376
      %v421 = vunpack.c.l.b16 %v377
      %v422 = vunpack.c.l.b16 %v378
      %v423 = vunpack.c.l.b16 %v379
      %v424 = vunpack.c.l.b16 %v380
      %v425 = vunpack.c.l.b16 %v381
      %v426 = vunpack.c.l.b16 %v382
      %v427 = vunpack.c.l.b16 %v383
      %v428 = vunpack.c.l.b16 %v384
      %v429 = vunpack.c.l.b16 %v385
      %v430 = vpack.c.b16 %v415, %v414
      %v431 = vpack.c.b16 %v417, %v416
      %v432 = vpack.c.b16 %v419, %v418
      %v433 = vpack.c.b16 %v421, %v420
      %v434 = vpack.c.b16 %v423, %v422
      %v435 = vpack.c.b16 %v425, %v424
      %v436 = vpack.c.b16 %v427, %v426
      %v437 = vpack.c.b16 %v429, %v428
      %446 = vmatprep.subr.bf16.mxu0 0
      %447 = vmatpush1.bf16.msra.mxu0 %v437
      %448 = vmatprep.subr.bf16.mxu0 0
      %449 = vmatpush1.bf16.msra.mxu0 %v436
      %450 = vmatprep.subr.bf16.mxu0 0
      %451 = vmatpush1.bf16.msra.mxu0 %v435
      %452 = vmatprep.subr.bf16.mxu0 0
      %453 = vmatpush1.bf16.msra.mxu0 %v434
      %454 = vmatprep.subr.bf16.mxu0 0
      %455 = vmatpush1.bf16.msra.mxu0 %v433
      %456 = vmatprep.subr.bf16.mxu0 0
      %457 = vmatpush1.bf16.msra.mxu0 %v432
      %458 = vmatprep.subr.bf16.mxu0 0
      %459 = vmatpush1.bf16.msra.mxu0 %v431
      %460 = vmatprep.subr.bf16.mxu0 0
      %461 = vmatpush1.bf16.msra.mxu0 %v430
      %462 = vmatprep.subr.bf16.mxu0 0
      %463 = vmatpush2.bf16.msra.mxu0 0
      %464 = vmatprep.subr.bf16.mxu0 0
      %465 = vmatpush2.bf16.msra.mxu0 0
      %466 = vmatprep.subr.bf16.mxu0 0
      %467 = vmatpush2.bf16.msra.mxu0 0
      %468 = vmatprep.subr.bf16.mxu0 0
      %469 = vmatpush2.bf16.msra.mxu0 0
      %470 = vmatprep.subr.bf16.mxu0 0
      %471 = vmatpush2.bf16.msra.mxu0 0
      %472 = vmatprep.subr.bf16.mxu0 0
      %473 = vmatpush2.bf16.msra.mxu0 0
      %474 = vmatprep.subr.bf16.mxu0 0
      %475 = vmatpush2.bf16.msra.mxu0 0
      %476 = vmatprep.subr.bf16.mxu0 0
      %477 = vmatpush2.bf16.msra.mxu0 0
      %478 = vmatprep.mubr.bf16.mxu0 0
      %479 = vmatmul.mubr.bf16.gmra.mxu0 %v394
      %v480 = vpop.f32.mrf.mxu0
      %v481 = vadd.f32 0.0, %v480
      %v482 = vpop.f32.mrf.mxu0
      %v483 = vpop.f32.mrf.mxu0
      %v484 = vadd.f32 0.0, %v483
      %v485 = vpop.f32.mrf.mxu0
      %486 = vmatprep.mubr.bf16.mxu0 0
      %487 = vmatmul.mubr.bf16.gmra.mxu0 %v395
      %v488 = vpop.f32.mrf.mxu0
      %v489 = vadd.f32 0.0, %v488
      %v490 = vpop.f32.mrf.mxu0
      %v491 = vpop.f32.mrf.mxu0
      %v492 = vadd.f32 0.0, %v491
      %v493 = vpop.f32.mrf.mxu0
      %494 = vdwg.mxu0
      %v495 = vld [vmem:[#allocation2] sm:$0xff]
      %v496 = vld [vmem:[#allocation2 + $0x8] sm:$0xff]
      %v497 = vld [vmem:[#allocation2 + $0x10] sm:$0xff]
      %v498 = vld [vmem:[#allocation2 + $0x18] sm:$0xff]
      %v499 = vadd.f32 %v495, %v481
      %v500 = vadd.f32 %v496, %v484
      %v501 = vadd.f32 %v497, %v489
      %v502 = vadd.f32 %v498, %v492
      %503 = vst [vmem:[#allocation2] sm:$0xff] %v499
      %504 = vst [vmem:[#allocation2 + $0x8] sm:$0xff] %v500
      %505 = vst [vmem:[#allocation2 + $0x10] sm:$0xff] %v501
      %506 = vst [vmem:[#allocation2 + $0x18] sm:$0xff] %v502
      %s507 = sadd.s32 %s222, 32
      %s508 = sshra.s32 %s507, 3
      %s509 = sand.u32 %s507, 7
      %s510 = smul.addr %s508, 4
      %s511 = scalar_lea.vmem %s210, %s510
      %v512 = vld [vmem:[%s511] sm:$0xf]
      %v513 = vld [vmem:[%s511 + $0x4] sm:$0xf]
      %v514 = vld [vmem:[%s511 + $0x8] sm:$0xf]
      %v515 = vld [vmem:[%s511 + $0xc] sm:$0xf]
      %s516 = scalar_lea.vmem %s1, 128
      %v517 = vld [vmem:[%s516] sm:$0xf]
      %v518 = vld [vmem:[%s516 + $0x4] sm:$0xf]
      %v519 = vld [vmem:[%s516 + $0x8] sm:$0xf]
      %v520 = vld [vmem:[%s516 + $0xc] sm:$0xf]
      %v521 = vld [vmem:[%s516 + $0x10] sm:$0xf]
      %v522 = vld [vmem:[%s516 + $0x14] sm:$0xf]
      %v523 = vld [vmem:[%s516 + $0x18] sm:$0xf]
      %v524 = vld [vmem:[%s516 + $0x1c] sm:$0xf]
      %v525 = vld [vmem:[%s516 + $0x20] sm:$0xf]
      %v526 = vld [vmem:[%s516 + $0x24] sm:$0xf]
      %v527 = vld [vmem:[%s516 + $0x28] sm:$0xf]
      %v528 = vld [vmem:[%s516 + $0x2c] sm:$0xf]
      %v529 = vld [vmem:[%s516 + $0x30] sm:$0xf]
      %v530 = vld [vmem:[%s516 + $0x34] sm:$0xf]
      %v531 = vld [vmem:[%s516 + $0x38] sm:$0xf]
      %v532 = vld [vmem:[%s516 + $0x3c] sm:$0xf]
      %v537 = vunpack.c.l.b16 %v512
      %v538 = vunpack.c.l.b16 %v513
      %v539 = vunpack.c.l.b16 %v514
      %v540 = vunpack.c.l.b16 %v515
      %v541 = vpack.c.b16 %v538, %v537
      %v542 = vpack.c.b16 %v540, %v539
      %v561 = vunpack.c.l.b16 %v517
      %v562 = vunpack.c.l.b16 %v518
      %v563 = vunpack.c.l.b16 %v519
      %v564 = vunpack.c.l.b16 %v520
      %v565 = vunpack.c.l.b16 %v521
      %v566 = vunpack.c.l.b16 %v522
      %v567 = vunpack.c.l.b16 %v523
      %v568 = vunpack.c.l.b16 %v524
      %v569 = vunpack.c.l.b16 %v525
      %v570 = vunpack.c.l.b16 %v526
      %v571 = vunpack.c.l.b16 %v527
      %v572 = vunpack.c.l.b16 %v528
      %v573 = vunpack.c.l.b16 %v529
      %v574 = vunpack.c.l.b16 %v530
      %v575 = vunpack.c.l.b16 %v531
      %v576 = vunpack.c.l.b16 %v532
      %v577 = vpack.c.b16 %v562, %v561
      %v578 = vpack.c.b16 %v564, %v563
      %v579 = vpack.c.b16 %v566, %v565
      %v580 = vpack.c.b16 %v568, %v567
      %v581 = vpack.c.b16 %v570, %v569
      %v582 = vpack.c.b16 %v572, %v571
      %v583 = vpack.c.b16 %v574, %v573
      %v584 = vpack.c.b16 %v576, %v575
      %593 = vmatprep.subr.bf16.mxu0 0
      %594 = vmatpush1.bf16.msra.mxu0 %v584
      %595 = vmatprep.subr.bf16.mxu0 0
      %596 = vmatpush1.bf16.msra.mxu0 %v583
      %597 = vmatprep.subr.bf16.mxu0 0
      %598 = vmatpush1.bf16.msra.mxu0 %v582
      %599 = vmatprep.subr.bf16.mxu0 0
      %600 = vmatpush1.bf16.msra.mxu0 %v581
      %601 = vmatprep.subr.bf16.mxu0 0
      %602 = vmatpush1.bf16.msra.mxu0 %v580
      %603 = vmatprep.subr.bf16.mxu0 0
      %604 = vmatpush1.bf16.msra.mxu0 %v579
      %605 = vmatprep.subr.bf16.mxu0 0
      %606 = vmatpush1.bf16.msra.mxu0 %v578
      %607 = vmatprep.subr.bf16.mxu0 0
      %608 = vmatpush1.bf16.msra.mxu0 %v577
      %609 = vmatprep.subr.bf16.mxu0 0
      %610 = vmatpush2.bf16.msra.mxu0 0
      %611 = vmatprep.subr.bf16.mxu0 0
      %612 = vmatpush2.bf16.msra.mxu0 0
      %613 = vmatprep.subr.bf16.mxu0 0
      %614 = vmatpush2.bf16.msra.mxu0 0
      %615 = vmatprep.subr.bf16.mxu0 0
      %616 = vmatpush2.bf16.msra.mxu0 0
      %617 = vmatprep.subr.bf16.mxu0 0
      %618 = vmatpush2.bf16.msra.mxu0 0
      %619 = vmatprep.subr.bf16.mxu0 0
      %620 = vmatpush2.bf16.msra.mxu0 0
      %621 = vmatprep.subr.bf16.mxu0 0
      %622 = vmatpush2.bf16.msra.mxu0 0
      %623 = vmatprep.subr.bf16.mxu0 0
      %624 = vmatpush2.bf16.msra.mxu0 0
      %625 = vmatprep.mubr.bf16.mxu0 0
      %626 = vmatmul.mubr.bf16.gmra.mxu0 %v541
      %v627 = vpop.f32.mrf.mxu0
      %v628 = vadd.f32 0.0, %v627
      %v629 = vpop.f32.mrf.mxu0
      %v630 = vpop.f32.mrf.mxu0
      %v631 = vadd.f32 0.0, %v630
      %v632 = vpop.f32.mrf.mxu0
      %633 = vmatprep.mubr.bf16.mxu0 0
      %634 = vmatmul.mubr.bf16.gmra.mxu0 %v542
      %v635 = vpop.f32.mrf.mxu0
      %v636 = vadd.f32 0.0, %v635
      %v637 = vpop.f32.mrf.mxu0
      %v638 = vpop.f32.mrf.mxu0
      %v639 = vadd.f32 0.0, %v638
      %v640 = vpop.f32.mrf.mxu0
      %641 = vdwg.mxu0
      %v642 = vld [vmem:[#allocation2] sm:$0xff]
      %v643 = vld [vmem:[#allocation2 + $0x8] sm:$0xff]
      %v644 = vld [vmem:[#allocation2 + $0x10] sm:$0xff]
      %v645 = vld [vmem:[#allocation2 + $0x18] sm:$0xff]
      %v646 = vadd.f32 %v642, %v628
      %v647 = vadd.f32 %v643, %v631
      %v648 = vadd.f32 %v644, %v636
      %v649 = vadd.f32 %v645, %v639
      %650 = vst [vmem:[#allocation2] sm:$0xff] %v646
      %651 = vst [vmem:[#allocation2 + $0x8] sm:$0xff] %v647
      %652 = vst [vmem:[#allocation2 + $0x10] sm:$0xff] %v648
      %653 = vst [vmem:[#allocation2 + $0x18] sm:$0xff] %v649
      %s654 = sadd.s32 %s222, 48
      %s655 = sshra.s32 %s654, 3
      %s656 = sand.u32 %s654, 7
      %s657 = smul.addr %s655, 4
      %s658 = scalar_lea.vmem %s210, %s657
      %v659 = vld [vmem:[%s658] sm:$0xf]
      %v660 = vld [vmem:[%s658 + $0x4] sm:$0xf]
      %v661 = vld [vmem:[%s658 + $0x8] sm:$0xf]
      %v662 = vld [vmem:[%s658 + $0xc] sm:$0xf]
      %s663 = scalar_lea.vmem %s1, 192
      %v664 = vld [vmem:[%s663] sm:$0xf]
      %v665 = vld [vmem:[%s663 + $0x4] sm:$0xf]
      %v666 = vld [vmem:[%s663 + $0x8] sm:$0xf]
      %v667 = vld [vmem:[%s663 + $0xc] sm:$0xf]
      %v668 = vld [vmem:[%s663 + $0x10] sm:$0xf]
      %v669 = vld [vmem:[%s663 + $0x14] sm:$0xf]
      %v670 = vld [vmem:[%s663 + $0x18] sm:$0xf]
      %v671 = vld [vmem:[%s663 + $0x1c] sm:$0xf]
      %v672 = vld [vmem:[%s663 + $0x20] sm:$0xf]
      %v673 = vld [vmem:[%s663 + $0x24] sm:$0xf]
      %v674 = vld [vmem:[%s663 + $0x28] sm:$0xf]
      %v675 = vld [vmem:[%s663 + $0x2c] sm:$0xf]
      %v676 = vld [vmem:[%s663 + $0x30] sm:$0xf]
      %v677 = vld [vmem:[%s663 + $0x34] sm:$0xf]
      %v678 = vld [vmem:[%s663 + $0x38] sm:$0xf]
      %v679 = vld [vmem:[%s663 + $0x3c] sm:$0xf]
      %v684 = vunpack.c.l.b16 %v659
      %v685 = vunpack.c.l.b16 %v660
      %v686 = vunpack.c.l.b16 %v661
      %v687 = vunpack.c.l.b16 %v662
      %v688 = vpack.c.b16 %v685, %v684
      %v689 = vpack.c.b16 %v687, %v686
      %v708 = vunpack.c.l.b16 %v664
      %v709 = vunpack.c.l.b16 %v665
      %v710 = vunpack.c.l.b16 %v666
      %v711 = vunpack.c.l.b16 %v667
      %v712 = vunpack.c.l.b16 %v668
      %v713 = vunpack.c.l.b16 %v669
      %v714 = vunpack.c.l.b16 %v670
      %v715 = vunpack.c.l.b16 %v671
      %v716 = vunpack.c.l.b16 %v672
      %v717 = vunpack.c.l.b16 %v673
      %v718 = vunpack.c.l.b16 %v674
      %v719 = vunpack.c.l.b16 %v675
      %v720 = vunpack.c.l.b16 %v676
      %v721 = vunpack.c.l.b16 %v677
      %v722 = vunpack.c.l.b16 %v678
      %v723 = vunpack.c.l.b16 %v679
      %v724 = vpack.c.b16 %v709, %v708
      %v725 = vpack.c.b16 %v711, %v710
      %v726 = vpack.c.b16 %v713, %v712
      %v727 = vpack.c.b16 %v715, %v714
      %v728 = vpack.c.b16 %v717, %v716
      %v729 = vpack.c.b16 %v719, %v718
      %v730 = vpack.c.b16 %v721, %v720
      %v731 = vpack.c.b16 %v723, %v722
      %740 = vmatprep.subr.bf16.mxu0 0
      %741 = vmatpush1.bf16.msra.mxu0 %v731
      %742 = vmatprep.subr.bf16.mxu0 0
      %743 = vmatpush1.bf16.msra.mxu0 %v730
      %744 = vmatprep.subr.bf16.mxu0 0
      %745 = vmatpush1.bf16.msra.mxu0 %v729
      %746 = vmatprep.subr.bf16.mxu0 0
      %747 = vmatpush1.bf16.msra.mxu0 %v728
      %748 = vmatprep.subr.bf16.mxu0 0
      %749 = vmatpush1.bf16.msra.mxu0 %v727
      %750 = vmatprep.subr.bf16.mxu0 0
      %751 = vmatpush1.bf16.msra.mxu0 %v726
      %752 = vmatprep.subr.bf16.mxu0 0
      %753 = vmatpush1.bf16.msra.mxu0 %v725
      %754 = vmatprep.subr.bf16.mxu0 0
      %755 = vmatpush1.bf16.msra.mxu0 %v724
      %756 = vmatprep.subr.bf16.mxu0 0
      %757 = vmatpush2.bf16.msra.mxu0 0
      %758 = vmatprep.subr.bf16.mxu0 0
      %759 = vmatpush2.bf16.msra.mxu0 0
      %760 = vmatprep.subr.bf16.mxu0 0
      %761 = vmatpush2.bf16.msra.mxu0 0
      %762 = vmatprep.subr.bf16.mxu0 0
      %763 = vmatpush2.bf16.msra.mxu0 0
      %764 = vmatprep.subr.bf16.mxu0 0
      %765 = vmatpush2.bf16.msra.mxu0 0
      %766 = vmatprep.subr.bf16.mxu0 0
      %767 = vmatpush2.bf16.msra.mxu0 0
      %768 = vmatprep.subr.bf16.mxu0 0
      %769 = vmatpush2.bf16.msra.mxu0 0
      %770 = vmatprep.subr.bf16.mxu0 0
      %771 = vmatpush2.bf16.msra.mxu0 0
      %772 = vmatprep.mubr.bf16.mxu0 0
      %773 = vmatmul.mubr.bf16.gmra.mxu0 %v688
      %v774 = vpop.f32.mrf.mxu0
      %v775 = vadd.f32 0.0, %v774
      %v776 = vpop.f32.mrf.mxu0
      %v777 = vpop.f32.mrf.mxu0
      %v778 = vadd.f32 0.0, %v777
      %v779 = vpop.f32.mrf.mxu0
      %780 = vmatprep.mubr.bf16.mxu0 0
      %781 = vmatmul.mubr.bf16.gmra.mxu0 %v689
      %v782 = vpop.f32.mrf.mxu0
      %v783 = vadd.f32 0.0, %v782
      %v784 = vpop.f32.mrf.mxu0
      %v785 = vpop.f32.mrf.mxu0
      %v786 = vadd.f32 0.0, %v785
      %v787 = vpop.f32.mrf.mxu0
      %788 = vdwg.mxu0
      %v789 = vld [vmem:[#allocation2] sm:$0xff]
      %v790 = vld [vmem:[#allocation2 + $0x8] sm:$0xff]
      %v791 = vld [vmem:[#allocation2 + $0x10] sm:$0xff]
      %v792 = vld [vmem:[#allocation2 + $0x18] sm:$0xff]
      %v793 = vadd.f32 %v789, %v775
      %v794 = vadd.f32 %v790, %v778
      %v795 = vadd.f32 %v791, %v783
      %v796 = vadd.f32 %v792, %v786
      %797 = vst [vmem:[#allocation2] sm:$0xff] %v793
      %798 = vst [vmem:[#allocation2 + $0x8] sm:$0xff] %v794
      %799 = vst [vmem:[#allocation2 + $0x10] sm:$0xff] %v795
      %800 = vst [vmem:[#allocation2 + $0x18] sm:$0xff] %v796
      %v801 = vld [vmem:[#allocation2] sm:$0xff]
      %v802 = vld [vmem:[#allocation2 + $0x8] sm:$0xff]
      %v803 = vld [vmem:[#allocation2 + $0x10] sm:$0xff]
      %v804 = vld [vmem:[#allocation2 + $0x18] sm:$0xff]
      %v805 = vld [vmem:[%s2] sm:$0x1]
      %v807 = vlaneseq
      %v808 = vshrl.u32 %v807, 7
      %v809 = vsub.s32 0, %v808
      %v810 = vrot.slane %v805, %v809
      %v812 = vmul.f32 %v801, %v810
      %v813 = vmul.f32 %v802, %v810
      %v814 = vmul.f32 %v803, %v810
      %v815 = vmul.f32 %v804, %v810
      %v816 = vld [vmem:[%s3] sm:$0x1]
      %v818 = vlaneseq
      %v819 = vshrl.u32 %v818, 7
      %v820 = vsub.s32 0, %v819
      %v821 = vrot.slane %v816, %v820
      %v823 = vadd.f32 %v812, %v821
      %v824 = vadd.f32 %v813, %v821
      %v825 = vadd.f32 %v814, %v821
      %v826 = vadd.f32 %v815, %v821
      %v827 = vmul.f32 %v823, 0.2
      %v828 = vmul.f32 %v824, 0.2
      %v829 = vmul.f32 %v825, 0.2
      %v830 = vmul.f32 %v826, 0.2
      %v831 = vmax.f32 %v823, %v827
      %v832 = vmax.f32 %v824, %v828
      %v833 = vmax.f32 %v825, %v829
      %v834 = vmax.f32 %v826, %v830
      %v835 = vpack.c.bf16 %v832, %v831
      %v836 = vpack.c.bf16 %v834, %v833
      %v839 = vunpack.c.l.b16 %v835
      %v840 = vunpack.c.h.b16 %v835
      %v841 = vunpack.c.l.b16 %v836
      %v842 = vunpack.c.h.b16 %v836
      %v843 = vpack.c.b16 %v839, %v839
      %v844 = vpack.c.b16 %v840, %v840
      %v845 = vpack.c.b16 %v841, %v841
      %v846 = vpack.c.b16 %v842, %v842
      %851 = vst [vmem:[%s219] sm:$0xf] %v843
      %852 = vst [vmem:[%s219 + $0x4] sm:$0xf] %v844
      %853 = vst [vmem:[%s219 + $0x8] sm:$0xf] %v845
      %854 = vst [vmem:[%s219 + $0xc] sm:$0xf] %v846
      %s855 = smul.u32 4, %s20
      %p856 = scmp.lt.s32.totalorder %s19, 1
      %s857 = scalar_select %p856, %s19, 1
      %p858 = scmp.lt.s32.totalorder %s855, 7
      %s859 = scalar_select %p858, %s855, 7
      %s860 = smul.addr %s857, 8
      %s861 = sadd.s32 %s859, %s860
      %s862 = smul.addr %s861, 4
      %s863 = scalar_lea.vmem %s4, %s862
      // Predicated region
      $region37: #{_lambda_.8} parent=35 // pred_check
        %p864 = pneg %p136
      $region38: #{_lambda_.8} parent=35 // pred_check_branch
        %866 = sbr.rel (%p864) target = $region40
      $region39: #{_lambda_.8} parent=35 // pred_region
        %s867 = smul.u32 4, %s20
      $region40: #{_lambda_.8} parent=35 // pred_fallthru
        _
    $region36: #{_lambda_.8} parent=5 // pred_fallthru
      _
    %p868 = scmp.le.s32.totalorder 2, %s10
    // Predicated region
    $region41: #{_lambda_.8} parent=5 // pred_check
      %p869 = pneg %p868
    $region42: #{_lambda_.8} parent=5 // pred_check_branch
      %871 = sbr.rel (%p869) target = $region44
    $region43: #{_lambda_.8} parent=5 // pred_region
      %s872 = ssub.s32 %s10, 2
      // Predicated region
      $region45: #{_lambda_.8} parent=43 // pred_check
        %p873 = pneg %p142
      $region46: #{_lambda_.8} parent=43 // pred_check_branch
        %875 = sbr.rel (%p873) target = $region48
      $region47: #{_lambda_.8} parent=43 // pred_region
        %s876 = smul.u32 4, %s22
        %p877 = scmp.lt.s32.totalorder %s21, 1
        %s878 = scalar_select %p877, %s21, 1
        %p879 = scmp.lt.s32.totalorder %s876, 7
        %s880 = scalar_select %p879, %s876, 7
        %s881 = smul.addr %s878, 8
        %s882 = sadd.s32 %s880, %s881
        %s883 = smul.addr %s882, 4
        %s884 = scalar_lea.vmem %s4, %s883
      $region48: #{_lambda_.8} parent=43 // pred_fallthru
        _
    $region44: #{_lambda_.8} parent=5 // pred_fallthru
      _
  $region6: #{_lambda_.8} parent=0 // loop_footer
    %s14 = sadd.s32 1, %s10
  $region7: #{_lambda_.8} parent=0 // loop_footer_branch
    %9 = sbr.rel target = $region3
  $region8: #{_lambda_.8} parent=0 // loop_exit
    _

// kernel: _lambda_.9
$region0: #{_lambda_.9}
  #allocation0 [shape = 'u32[]', space=smem, size = 0x4, offset = 0x4, fixed_abs, tag = 'smem constant byte address 0x4 - core index']
  #allocation1 [shape = 'u32[144,128]{1,0:T(1,128)}', space=vmem, size = 0x12000, scoped, tag = 'internal scratch']
  #allocation2 [shape = 'f32[16,128]{1,0:T(8,128)}', space=vmem, size = 0x2000, scoped, tag = 'scratch operand']
  %s0 = inlined_call_operand.vmem [shape: bf16[2,80,256], index: 0, kind: input, shape index: {}]
  %s1 = inlined_call_operand.vmem [shape: bf16[4,256,128], index: 1, kind: input, shape index: {}]
  %s2 = inlined_call_operand.vmem [shape: f32[1,128], index: 2, kind: input, shape index: {}]
  %s3 = inlined_call_operand.vmem [shape: f32[1,128], index: 3, kind: input, shape index: {}]
  %s4 = inlined_call_operand.vmem [shape: f32[2,32,8], index: 4, kind: output, shape index: {}]
  %s5 = sld [smem:[#allocation0]]
  $region49: #{_lambda_.9} parent=0
    _
  %s7 = ssub.s32 1, %s5
  %s8 = scalar_select 0, %s7, %s5
  loop: start=0, step=1, limit=6
  $region2: #{_lambda_.9} parent=0 // loop_pre_header
    _
  $region3: #{_lambda_.9} parent=0 // loop_header
    %s10 = sphi 0, %s14
    %p11 = scmp.ge.s32.totalorder %s10, 6
    %s17 = sphi 0, %s29
    %s18 = sphi 0, %s25
    %s19 = sphi 0, %s17
    %s20 = sphi 0, %s18
    %s21 = sphi 0, %s19
    %s22 = sphi 0, %s20
    %s32 = sphi 0, %s34
    %s35 = sphi 0, %s32
    %s36 = sphi 0, %s35
    %s52 = sphi 0, %s36
    %s56 = sphi 0, %s56
    %s58 = sphi 0, %s56
    %s59 = sphi 0, %s58
    %s73 = sphi 0, %s59
    %s77 = sphi 0, %s77
    %s79 = sphi 0, %s77
    %s80 = sphi 0, %s79
    %s94 = sphi 0, %s80
    %s98 = sphi 0, %s98
    %s100 = sphi 0, %s98
    %s101 = sphi 0, %s100
    %s115 = sphi 0, %s101
    %s123 = sphi 0, %s125
    %s126 = sphi 0, %s123
    %s127 = sphi 0, %s126
    %s143 = sphi 0, %s127
  $region4: #{_lambda_.9} parent=0 // loop_header_branch
    %13 = sbr.rel (%p11) target = $region8
  $region5: #{_lambda_.9} parent=0 // loop_body
    %s15 = ssub.s32 %s10, 1
    %s16 = ssub.s32 %s10, 2
    %s23 = sadd.s32 1, %s18
    %p24 = scmp.ge.s32.totalorder %s23, 2
    %s25 = scalar_select %p24, 0, %s23
    %s26 = sadd.s32 1, %s17
    %s27 = scalar_select %p24, %s26, %s17
    %p28 = scmp.ge.s32.totalorder %s27, 2
    %s29 = scalar_select %p28, 0, %s27
    %s30 = ssub.s32 %s17, %s29
    %p31 = scmp.eq.s32.totalorder %s30, 0
    %s33 = sadd.s32 %s32, 1
    %s34 = scalar_select %p31, %s32, %s33
    %p37 = pneg %p31
    %p38 = scmp.eq.s32.totalorder %s10, 3
    %p39 = por %p37, %p38
    %p40 = scmp.ne.s32.totalorder %s32, %s35
    %p41 = scmp.eq.s32.totalorder %s10, 0
    %p42 = por %p40, %p41
    %p43 = scmp.ne.s32.totalorder %s32, %s35
    %p44 = scmp.eq.s32.totalorder %s15, 3
    %p45 = por %p43, %p44
    %p46 = scmp.ne.s32.totalorder %s35, %s36
    %p47 = scmp.eq.s32.totalorder %s15, 0
    %p48 = por %p46, %p47
    %p49 = scmp.ne.s32.totalorder %s35, %s36
    %p50 = scmp.eq.s32.totalorder %s16, 3
    %p51 = por %p49, %p50
    %p53 = scmp.ne.s32.totalorder %s36, %s52
    %p54 = scmp.eq.s32.totalorder %s16, 0
    %p55 = por %p53, %p54
    %s57 = sadd.s32 %s56, 1
    %p60 = scmp.eq.s32.totalorder %s10, 3
    %p61 = scmp.ne.s32.totalorder %s56, %s58
    %p62 = scmp.eq.s32.totalorder %s10, 0
    %p63 = por %p61, %p62
    %p64 = scmp.ne.s32.totalorder %s56, %s58
    %p65 = scmp.eq.s32.totalorder %s15, 3
    %p66 = por %p64, %p65
    %p67 = scmp.ne.s32.totalorder %s58, %s59
    %p68 = scmp.eq.s32.totalorder %s15, 0
    %p69 = por %p67, %p68
    %p70 = scmp.ne.s32.totalorder %s58, %s59
    %p71 = scmp.eq.s32.totalorder %s16, 3
    %p72 = por %p70, %p71
    %p74 = scmp.ne.s32.totalorder %s59, %s73
    %p75 = scmp.eq.s32.totalorder %s16, 0
    %p76 = por %p74, %p75
    %s78 = sadd.s32 %s77, 1
    %p81 = scmp.eq.s32.totalorder %s10, 3
    %p82 = scmp.ne.s32.totalorder %s77, %s79
    %p83 = scmp.eq.s32.totalorder %s10, 0
    %p84 = por %p82, %p83
    %p85 = scmp.ne.s32.totalorder %s77, %s79
    %p86 = scmp.eq.s32.totalorder %s15, 3
    %p87 = por %p85, %p86
    %p88 = scmp.ne.s32.totalorder %s79, %s80
    %p89 = scmp.eq.s32.totalorder %s15, 0
    %p90 = por %p88, %p89
    %p91 = scmp.ne.s32.totalorder %s79, %s80
    %p92 = scmp.eq.s32.totalorder %s16, 3
    %p93 = por %p91, %p92
    %p95 = scmp.ne.s32.totalorder %s80, %s94
    %p96 = scmp.eq.s32.totalorder %s16, 0
    %p97 = por %p95, %p96
    %s99 = sadd.s32 %s98, 1
    %p102 = scmp.eq.s32.totalorder %s10, 3
    %p103 = scmp.ne.s32.totalorder %s98, %s100
    %p104 = scmp.eq.s32.totalorder %s10, 0
    %p105 = por %p103, %p104
    %p106 = scmp.ne.s32.totalorder %s98, %s100
    %p107 = scmp.eq.s32.totalorder %s15, 3
    %p108 = por %p106, %p107
    %p109 = scmp.ne.s32.totalorder %s100, %s101
    %p110 = scmp.eq.s32.totalorder %s15, 0
    %p111 = por %p109, %p110
    %p112 = scmp.ne.s32.totalorder %s100, %s101
    %p113 = scmp.eq.s32.totalorder %s16, 3
    %p114 = por %p112, %p113
    %p116 = scmp.ne.s32.totalorder %s101, %s115
    %p117 = scmp.eq.s32.totalorder %s16, 0
    %p118 = por %p116, %p117
    %s119 = ssub.s32 %s17, %s29
    %s120 = ssub.s32 %s18, %s25
    %s121 = sor.u32 %s119, %s120
    %p122 = scmp.eq.s32.totalorder %s121, 0
    %s124 = sadd.s32 %s123, 1
    %s125 = scalar_select %p122, %s123, %s124
    %p128 = pneg %p122
    %p129 = scmp.eq.s32.totalorder %s10, 3
    %p130 = por %p128, %p129
    %p131 = scmp.ne.s32.totalorder %s123, %s126
    %p132 = scmp.eq.s32.totalorder %s10, 0
    %p133 = por %p131, %p132
    %p134 = scmp.ne.s32.totalorder %s123, %s126
    %p135 = scmp.eq.s32.totalorder %s15, 3
    %p136 = por %p134, %p135
    %p137 = scmp.ne.s32.totalorder %s126, %s127
    %p138 = scmp.eq.s32.totalorder %s15, 0
    %p139 = por %p137, %p138
    %p140 = scmp.ne.s32.totalorder %s126, %s127
    %p141 = scmp.eq.s32.totalorder %s16, 3
    %p142 = por %p140, %p141
    %p144 = scmp.ne.s32.totalorder %s127, %s143
    %p145 = scmp.eq.s32.totalorder %s16, 0
    %p146 = por %p144, %p145
    %p147 = scmp.le.s32.totalorder 1, %s10
    %p148 = scmp.lt.s32.totalorder %s10, 5
    %p149 = pnand %p147, %p148
    %p150 = pneg %p149
    // Predicated region
    $region9: #{_lambda_.9} parent=5 // pred_check
      _
    $region10: #{_lambda_.9} parent=5 // pred_check_branch
      %152 = sbr.rel (%p149) target = $region12
    $region11: #{_lambda_.9} parent=5 // pred_region
      %s153 = ssub.s32 %s10, 1
      // Predicated region
      $region13: #{_lambda_.9} parent=11 // pred_check
        %p154 = pneg %p69
      $region14: #{_lambda_.9} parent=11 // pred_check_branch
        %156 = sbr.rel (%p154) target = $region16
      $region15: #{_lambda_.9} parent=11 // pred_region
        _
      $region16: #{_lambda_.9} parent=11 // pred_fallthru
        _
      // Predicated region
      $region17: #{_lambda_.9} parent=11 // pred_check
        %p157 = pneg %p90
      $region18: #{_lambda_.9} parent=11 // pred_check_branch
        %159 = sbr.rel (%p157) target = $region20
      $region19: #{_lambda_.9} parent=11 // pred_region
        _
      $region20: #{_lambda_.9} parent=11 // pred_fallthru
        _
      // Predicated region
      $region21: #{_lambda_.9} parent=11 // pred_check
        %p160 = pneg %p111
      $region22: #{_lambda_.9} parent=11 // pred_check_branch
        %162 = sbr.rel (%p160) target = $region24
      $region23: #{_lambda_.9} parent=11 // pred_region
        _
      $region24: #{_lambda_.9} parent=11 // pred_fallthru
        _
    $region12: #{_lambda_.9} parent=5 // pred_fallthru
      _
    %p163 = scmp.lt.s32.totalorder %s10, 4
    // Predicated region
    $region25: #{_lambda_.9} parent=5 // pred_check
      %p164 = pneg %p163
    $region26: #{_lambda_.9} parent=5 // pred_check_branch
      %166 = sbr.rel (%p164) target = $region28
    $region27: #{_lambda_.9} parent=5 // pred_region
      // Predicated region
      $region29: #{_lambda_.9} parent=27 // pred_check
        %p167 = pneg %p42
      $region30: #{_lambda_.9} parent=27 // pred_check_branch
        %169 = sbr.rel (%p167) target = $region32
      $region31: #{_lambda_.9} parent=27 // pred_region
        %p170 = scmp.lt.s32.totalorder %s17, 1
        %s171 = scalar_select %p170, %s17, 1
        %s172 = smul.addr %s171, 20
        %s173 = smul.addr %s172, 4
        %s174 = scalar_lea.vmem %s0, %s173
      $region32: #{_lambda_.9} parent=27 // pred_fallthru
        _
    $region28: #{_lambda_.9} parent=5 // pred_fallthru
      _
    %p175 = scmp.le.s32.totalorder 1, %s10
    %p176 = scmp.lt.s32.totalorder %s10, 5
    %p177 = pnand %p175, %p176
    %p178 = pneg %p177
    // Predicated region
    $region33: #{_lambda_.9} parent=5 // pred_check
      _
    $region34: #{_lambda_.9} parent=5 // pred_check_branch
      %180 = sbr.rel (%p177) target = $region36
    $region35: #{_lambda_.9} parent=5 // pred_region
      %s181 = ssub.s32 %s10, 1
      %p182 = scmp.lt.s32.totalorder %s19, 1
      %s183 = scalar_select %p182, %s19, 1
      %s184 = smul.addr %s183, 20
      %s185 = smul.addr %s184, 4
      %s186 = scalar_lea.vmem %s0, %s185
      %p187 = pneg %p48
      %p188 = pneg %p45
      %p189 = pneg %p69
      %p190 = pneg %p66
      %p191 = pneg %p90
      %p192 = pneg %p87
      %p193 = pneg %p111
      %p194 = pneg %p108
      %p195 = pneg %p139
      %p196 = pneg %p136
      %s197 = smul.u32 2, %s20
      %p198 = scmp.lt.s32.totalorder %s19, 1
      %s199 = scalar_select %p198, %s19, 1
      %p200 = scmp.lt.s32.totalorder %s197, 3
      %s201 = scalar_select %p200, %s197, 3
      %s202 = smul.addr %s199, 4
      %s203 = sadd.s32 %s201, %s202
      %s204 = smul.addr %s203, 8
      %s205 = scalar_lea.vmem %s4, %s204
      %p206 = scmp.lt.s32.totalorder %s19, 1
      %s207 = scalar_select %p206, %s19, 1
      %s208 = smul.addr %s207, 20
      %s209 = smul.addr %s208, 4
      %s210 = scalar_lea.vmem %s0, %s209
      %s211 = smul.u32 2, %s20
      %p212 = scmp.lt.s32.totalorder %s19, 1
      %s213 = scalar_select %p212, %s19, 1
      %p214 = scmp.lt.s32.totalorder %s211, 3
      %s215 = scalar_select %p214, %s211, 3
      %s216 = smul.addr %s213, 4
      %s217 = sadd.s32 %s215, %s216
      %s218 = smul.addr %s217, 8
      %s219 = scalar_lea.vmem %s4, %s218
      %s220 = smul.u32 2, %s20
      %s222 = smul.u32 %s20, 16
      %s223 = sshra.s32 %s222, 3
      %s224 = sand.u32 %s222, 7
      %s225 = smul.u32 %s223, 2
      %s226 = smul.addr %s225, 4
      %s227 = scalar_lea.vmem %s210, %s226
      %v228 = vld [vmem:[%s227] sm:$0xff]
      %v229 = vld [vmem:[%s227 + $0x8] sm:$0xff]
      %v230 = vld [vmem:[%s1] sm:$0xf]
      %v231 = vld [vmem:[%s1 + $0x4] sm:$0xf]
      %v232 = vld [vmem:[%s1 + $0x8] sm:$0xf]
      %v233 = vld [vmem:[%s1 + $0xc] sm:$0xf]
      %v234 = vld [vmem:[%s1 + $0x10] sm:$0xf]
      %v235 = vld [vmem:[%s1 + $0x14] sm:$0xf]
      %v236 = vld [vmem:[%s1 + $0x18] sm:$0xf]
      %v237 = vld [vmem:[%s1 + $0x1c] sm:$0xf]
      %v238 = vld [vmem:[%s1 + $0x20] sm:$0xf]
      %v239 = vld [vmem:[%s1 + $0x24] sm:$0xf]
      %v240 = vld [vmem:[%s1 + $0x28] sm:$0xf]
      %v241 = vld [vmem:[%s1 + $0x2c] sm:$0xf]
      %v242 = vld [vmem:[%s1 + $0x30] sm:$0xf]
      %v243 = vld [vmem:[%s1 + $0x34] sm:$0xf]
      %v244 = vld [vmem:[%s1 + $0x38] sm:$0xf]
      %v245 = vld [vmem:[%s1 + $0x3c] sm:$0xf]
      %v246 = vld [vmem:[%s1 + $0x40] sm:$0xf]
      %v247 = vld [vmem:[%s1 + $0x44] sm:$0xf]
      %v248 = vld [vmem:[%s1 + $0x48] sm:$0xf]
      %v249 = vld [vmem:[%s1 + $0x4c] sm:$0xf]
      %v250 = vld [vmem:[%s1 + $0x50] sm:$0xf]
      %v251 = vld [vmem:[%s1 + $0x54] sm:$0xf]
      %v252 = vld [vmem:[%s1 + $0x58] sm:$0xf]
      %v253 = vld [vmem:[%s1 + $0x5c] sm:$0xf]
      %v254 = vld [vmem:[%s1 + $0x60] sm:$0xf]
      %v255 = vld [vmem:[%s1 + $0x64] sm:$0xf]
      %v256 = vld [vmem:[%s1 + $0x68] sm:$0xf]
      %v257 = vld [vmem:[%s1 + $0x6c] sm:$0xf]
      %v258 = vld [vmem:[%s1 + $0x70] sm:$0xf]
      %v259 = vld [vmem:[%s1 + $0x74] sm:$0xf]
      %v260 = vld [vmem:[%s1 + $0x78] sm:$0xf]
      %v261 = vld [vmem:[%s1 + $0x7c] sm:$0xf]
      %v264 = vunpack.c.l.b16 %v228
      %v265 = vunpack.c.h.b16 %v228
      %v266 = vunpack.c.l.b16 %v229
      %v267 = vunpack.c.h.b16 %v229
      %v268 = vpack.c.b16 %v266, %v264
      %v269 = vpack.c.b16 %v267, %v265
      %v304 = vunpack.c.l.b16 %v230
      %v305 = vunpack.c.l.b16 %v231
      %v306 = vunpack.c.l.b16 %v232
      %v307 = vunpack.c.l.b16 %v233
      %v308 = vunpack.c.l.b16 %v234
      %v309 = vunpack.c.l.b16 %v235
      %v310 = vunpack.c.l.b16 %v236
      %v311 = vunpack.c.l.b16 %v237
      %v312 = vunpack.c.l.b16 %v238
      %v313 = vunpack.c.l.b16 %v239
      %v314 = vunpack.c.l.b16 %v240
      %v315 = vunpack.c.l.b16 %v241
      %v316 = vunpack.c.l.b16 %v242
      %v317 = vunpack.c.l.b16 %v243
      %v318 = vunpack.c.l.b16 %v244
      %v319 = vunpack.c.l.b16 %v245
      %v320 = vunpack.c.l.b16 %v246
      %v321 = vunpack.c.l.b16 %v247
      %v322 = vunpack.c.l.b16 %v248
      %v323 = vunpack.c.l.b16 %v249
      %v324 = vunpack.c.l.b16 %v250
      %v325 = vunpack.c.l.b16 %v251
      %v326 = vunpack.c.l.b16 %v252
      %v327 = vunpack.c.l.b16 %v253
      %v328 = vunpack.c.l.b16 %v254
      %v329 = vunpack.c.l.b16 %v255
      %v330 = vunpack.c.l.b16 %v256
      %v331 = vunpack.c.l.b16 %v257
      %v332 = vunpack.c.l.b16 %v258
      %v333 = vunpack.c.l.b16 %v259
      %v334 = vunpack.c.l.b16 %v260
      %v335 = vunpack.c.l.b16 %v261
      %v336 = vpack.c.b16 %v305, %v304
      %v337 = vpack.c.b16 %v307, %v306
      %v338 = vpack.c.b16 %v309, %v308
      %v339 = vpack.c.b16 %v311, %v310
      %v340 = vpack.c.b16 %v313, %v312
      %v341 = vpack.c.b16 %v315, %v314
      %v342 = vpack.c.b16 %v317, %v316
      %v343 = vpack.c.b16 %v319, %v318
      %v344 = vpack.c.b16 %v321, %v320
      %v345 = vpack.c.b16 %v323, %v322
      %v346 = vpack.c.b16 %v325, %v324
      %v347 = vpack.c.b16 %v327, %v326
      %v348 = vpack.c.b16 %v329, %v328
      %v349 = vpack.c.b16 %v331, %v330
      %v350 = vpack.c.b16 %v333, %v332
      %v351 = vpack.c.b16 %v335, %v334
      %368 = vmatprep.subr.bf16.mxu0 0
      %369 = vmatpush1.bf16.msra.mxu0 %v343
      %370 = vmatprep.subr.bf16.mxu0 0
      %371 = vmatpush1.bf16.msra.mxu0 %v342
      %372 = vmatprep.subr.bf16.mxu0 0
      %373 = vmatpush1.bf16.msra.mxu0 %v341
      %374 = vmatprep.subr.bf16.mxu0 0
      %375 = vmatpush1.bf16.msra.mxu0 %v340
      %376 = vmatprep.subr.bf16.mxu0 0
      %377 = vmatpush1.bf16.msra.mxu0 %v339
      %378 = vmatprep.subr.bf16.mxu0 0
      %379 = vmatpush1.bf16.msra.mxu0 %v338
      %380 = vmatprep.subr.bf16.mxu0 0
      %381 = vmatpush1.bf16.msra.mxu0 %v337
      %382 = vmatprep.subr.bf16.mxu0 0
      %383 = vmatpush1.bf16.msra.mxu0 %v336
      %384 = vmatprep.subr.bf16.mxu0 0
      %385 = vmatpush2.bf16.msra.mxu0 %v351
      %386 = vmatprep.subr.bf16.mxu0 0
      %387 = vmatpush2.bf16.msra.mxu0 %v350
      %388 = vmatprep.subr.bf16.mxu0 0
      %389 = vmatpush2.bf16.msra.mxu0 %v349
      %390 = vmatprep.subr.bf16.mxu0 0
      %391 = vmatpush2.bf16.msra.mxu0 %v348
      %392 = vmatprep.subr.bf16.mxu0 0
      %393 = vmatpush2.bf16.msra.mxu0 %v347
      %394 = vmatprep.subr.bf16.mxu0 0
      %395 = vmatpush2.bf16.msra.mxu0 %v346
      %396 = vmatprep.subr.bf16.mxu0 0
      %397 = vmatpush2.bf16.msra.mxu0 %v345
      %398 = vmatprep.subr.bf16.mxu0 0
      %399 = vmatpush2.bf16.msra.mxu0 %v344
      %400 = vmatprep.mubr.bf16.mxu0 %v269
      %401 = vmatmul.mubr.bf16.gmra.mxu0 %v268
      %v402 = vpop.f32.mrf.mxu0
      %v403 = vadd.f32 0.0, %v402
      %v404 = vpop.f32.mrf.mxu0
      %v405 = vpop.f32.mrf.mxu0
      %v406 = vadd.f32 0.0, %v405
      %v407 = vpop.f32.mrf.mxu0
      %408 = vdwg.mxu0
      %409 = vst [vmem:[#allocation2] sm:$0xff] %v403
      %410 = vst [vmem:[#allocation2 + $0x8] sm:$0xff] %v406
      %s411 = sadd.s32 %s222, 16
      %s412 = sshra.s32 %s411, 3
      %s413 = sand.u32 %s411, 7
      %s414 = smul.u32 %s412, 2
      %s415 = smul.addr %s414, 4
      %s416 = scalar_lea.vmem %s210, %s415
      %v417 = vld [vmem:[%s416] sm:$0xff]
      %v418 = vld [vmem:[%s416 + $0x8] sm:$0xff]
      %s419 = scalar_lea.vmem %s1, 128
      %v420 = vld [vmem:[%s419] sm:$0xf]
      %v421 = vld [vmem:[%s419 + $0x4] sm:$0xf]
      %v422 = vld [vmem:[%s419 + $0x8] sm:$0xf]
      %v423 = vld [vmem:[%s419 + $0xc] sm:$0xf]
      %v424 = vld [vmem:[%s419 + $0x10] sm:$0xf]
      %v425 = vld [vmem:[%s419 + $0x14] sm:$0xf]
      %v426 = vld [vmem:[%s419 + $0x18] sm:$0xf]
      %v427 = vld [vmem:[%s419 + $0x1c] sm:$0xf]
      %v428 = vld [vmem:[%s419 + $0x20] sm:$0xf]
      %v429 = vld [vmem:[%s419 + $0x24] sm:$0xf]
      %v430 = vld [vmem:[%s419 + $0x28] sm:$0xf]
      %v431 = vld [vmem:[%s419 + $0x2c] sm:$0xf]
      %v432 = vld [vmem:[%s419 + $0x30] sm:$0xf]
      %v433 = vld [vmem:[%s419 + $0x34] sm:$0xf]
      %v434 = vld [vmem:[%s419 + $0x38] sm:$0xf]
      %v435 = vld [vmem:[%s419 + $0x3c] sm:$0xf]
      %v436 = vld [vmem:[%s419 + $0x40] sm:$0xf]
      %v437 = vld [vmem:[%s419 + $0x44] sm:$0xf]
      %v438 = vld [vmem:[%s419 + $0x48] sm:$0xf]
      %v439 = vld [vmem:[%s419 + $0x4c] sm:$0xf]
      %v440 = vld [vmem:[%s419 + $0x50] sm:$0xf]
      %v441 = vld [vmem:[%s419 + $0x54] sm:$0xf]
      %v442 = vld [vmem:[%s419 + $0x58] sm:$0xf]
      %v443 = vld [vmem:[%s419 + $0x5c] sm:$0xf]
      %v444 = vld [vmem:[%s419 + $0x60] sm:$0xf]
      %v445 = vld [vmem:[%s419 + $0x64] sm:$0xf]
      %v446 = vld [vmem:[%s419 + $0x68] sm:$0xf]
      %v447 = vld [vmem:[%s419 + $0x6c] sm:$0xf]
      %v448 = vld [vmem:[%s419 + $0x70] sm:$0xf]
      %v449 = vld [vmem:[%s419 + $0x74] sm:$0xf]
      %v450 = vld [vmem:[%s419 + $0x78] sm:$0xf]
      %v451 = vld [vmem:[%s419 + $0x7c] sm:$0xf]
      %v454 = vunpack.c.l.b16 %v417
      %v455 = vunpack.c.h.b16 %v417
      %v456 = vunpack.c.l.b16 %v418
      %v457 = vunpack.c.h.b16 %v418
      %v458 = vpack.c.b16 %v456, %v454
      %v459 = vpack.c.b16 %v457, %v455
      %v494 = vunpack.c.l.b16 %v420
      %v495 = vunpack.c.l.b16 %v421
      %v496 = vunpack.c.l.b16 %v422
      %v497 = vunpack.c.l.b16 %v423
      %v498 = vunpack.c.l.b16 %v424
      %v499 = vunpack.c.l.b16 %v425
      %v500 = vunpack.c.l.b16 %v426
      %v501 = vunpack.c.l.b16 %v427
      %v502 = vunpack.c.l.b16 %v428
      %v503 = vunpack.c.l.b16 %v429
      %v504 = vunpack.c.l.b16 %v430
      %v505 = vunpack.c.l.b16 %v431
      %v506 = vunpack.c.l.b16 %v432
      %v507 = vunpack.c.l.b16 %v433
      %v508 = vunpack.c.l.b16 %v434
      %v509 = vunpack.c.l.b16 %v435
      %v510 = vunpack.c.l.b16 %v436
      %v511 = vunpack.c.l.b16 %v437
      %v512 = vunpack.c.l.b16 %v438
      %v513 = vunpack.c.l.b16 %v439
      %v514 = vunpack.c.l.b16 %v440
      %v515 = vunpack.c.l.b16 %v441
      %v516 = vunpack.c.l.b16 %v442
      %v517 = vunpack.c.l.b16 %v443
      %v518 = vunpack.c.l.b16 %v444
      %v519 = vunpack.c.l.b16 %v445
      %v520 = vunpack.c.l.b16 %v446
      %v521 = vunpack.c.l.b16 %v447
      %v522 = vunpack.c.l.b16 %v448
      %v523 = vunpack.c.l.b16 %v449
      %v524 = vunpack.c.l.b16 %v450
      %v525 = vunpack.c.l.b16 %v451
      %v526 = vpack.c.b16 %v495, %v494
      %v527 = vpack.c.b16 %v497, %v496
      %v528 = vpack.c.b16 %v499, %v498
      %v529 = vpack.c.b16 %v501, %v500
      %v530 = vpack.c.b16 %v503, %v502
      %v531 = vpack.c.b16 %v505, %v504
      %v532 = vpack.c.b16 %v507, %v506
      %v533 = vpack.c.b16 %v509, %v508
      %v534 = vpack.c.b16 %v511, %v510
      %v535 = vpack.c.b16 %v513, %v512
      %v536 = vpack.c.b16 %v515, %v514
      %v537 = vpack.c.b16 %v517, %v516
      %v538 = vpack.c.b16 %v519, %v518
      %v539 = vpack.c.b16 %v521, %v520
      %v540 = vpack.c.b16 %v523, %v522
      %v541 = vpack.c.b16 %v525, %v524
      %558 = vmatprep.subr.bf16.mxu0 0
      %559 = vmatpush1.bf16.msra.mxu0 %v533
      %560 = vmatprep.subr.bf16.mxu0 0
      %561 = vmatpush1.bf16.msra.mxu0 %v532
      %562 = vmatprep.subr.bf16.mxu0 0
      %563 = vmatpush1.bf16.msra.mxu0 %v531
      %564 = vmatprep.subr.bf16.mxu0 0
      %565 = vmatpush1.bf16.msra.mxu0 %v530
      %566 = vmatprep.subr.bf16.mxu0 0
      %567 = vmatpush1.bf16.msra.mxu0 %v529
      %568 = vmatprep.subr.bf16.mxu0 0
      %569 = vmatpush1.bf16.msra.mxu0 %v528
      %570 = vmatprep.subr.bf16.mxu0 0
      %571 = vmatpush1.bf16.msra.mxu0 %v527
      %572 = vmatprep.subr.bf16.mxu0 0
      %573 = vmatpush1.bf16.msra.mxu0 %v526
      %574 = vmatprep.subr.bf16.mxu0 0
      %575 = vmatpush2.bf16.msra.mxu0 %v541
      %576 = vmatprep.subr.bf16.mxu0 0
      %577 = vmatpush2.bf16.msra.mxu0 %v540
      %578 = vmatprep.subr.bf16.mxu0 0
      %579 = vmatpush2.bf16.msra.mxu0 %v539
      %580 = vmatprep.subr.bf16.mxu0 0
      %581 = vmatpush2.bf16.msra.mxu0 %v538
      %582 = vmatprep.subr.bf16.mxu0 0
      %583 = vmatpush2.bf16.msra.mxu0 %v537
      %584 = vmatprep.subr.bf16.mxu0 0
      %585 = vmatpush2.bf16.msra.mxu0 %v536
      %586 = vmatprep.subr.bf16.mxu0 0
      %587 = vmatpush2.bf16.msra.mxu0 %v535
      %588 = vmatprep.subr.bf16.mxu0 0
      %589 = vmatpush2.bf16.msra.mxu0 %v534
      %590 = vmatprep.mubr.bf16.mxu0 %v459
      %591 = vmatmul.mubr.bf16.gmra.mxu0 %v458
      %v592 = vpop.f32.mrf.mxu0
      %v593 = vadd.f32 0.0, %v592
      %v594 = vpop.f32.mrf.mxu0
      %v595 = vpop.f32.mrf.mxu0
      %v596 = vadd.f32 0.0, %v595
      %v597 = vpop.f32.mrf.mxu0
      %598 = vdwg.mxu0
      %v599 = vld [vmem:[#allocation2] sm:$0xff]
      %v600 = vld [vmem:[#allocation2 + $0x8] sm:$0xff]
      %v601 = vadd.f32 %v599, %v593
      %v602 = vadd.f32 %v600, %v596
      %603 = vst [vmem:[#allocation2] sm:$0xff] %v601
      %604 = vst [vmem:[#allocation2 + $0x8] sm:$0xff] %v602
      %s605 = sadd.s32 %s222, 32
      %s606 = sshra.s32 %s605, 3
      %s607 = sand.u32 %s605, 7
      %s608 = smul.u32 %s606, 2
      %s609 = smul.addr %s608, 4
      %s610 = scalar_lea.vmem %s210, %s609
      %v611 = vld [vmem:[%s610] sm:$0xff]
      %v612 = vld [vmem:[%s610 + $0x8] sm:$0xff]
      %s613 = scalar_lea.vmem %s1, 256
      %v614 = vld [vmem:[%s613] sm:$0xf]
      %v615 = vld [vmem:[%s613 + $0x4] sm:$0xf]
      %v616 = vld [vmem:[%s613 + $0x8] sm:$0xf]
      %v617 = vld [vmem:[%s613 + $0xc] sm:$0xf]
      %v618 = vld [vmem:[%s613 + $0x10] sm:$0xf]
      %v619 = vld [vmem:[%s613 + $0x14] sm:$0xf]
      %v620 = vld [vmem:[%s613 + $0x18] sm:$0xf]
      %v621 = vld [vmem:[%s613 + $0x1c] sm:$0xf]
      %v622 = vld [vmem:[%s613 + $0x20] sm:$0xf]
      %v623 = vld [vmem:[%s613 + $0x24] sm:$0xf]
      %v624 = vld [vmem:[%s613 + $0x28] sm:$0xf]
      %v625 = vld [vmem:[%s613 + $0x2c] sm:$0xf]
      %v626 = vld [vmem:[%s613 + $0x30] sm:$0xf]
      %v627 = vld [vmem:[%s613 + $0x34] sm:$0xf]
      %v628 = vld [vmem:[%s613 + $0x38] sm:$0xf]
      %v629 = vld [vmem:[%s613 + $0x3c] sm:$0xf]
      %v630 = vld [vmem:[%s613 + $0x40] sm:$0xf]
      %v631 = vld [vmem:[%s613 + $0x44] sm:$0xf]
      %v632 = vld [vmem:[%s613 + $0x48] sm:$0xf]
      %v633 = vld [vmem:[%s613 + $0x4c] sm:$0xf]
      %v634 = vld [vmem:[%s613 + $0x50] sm:$0xf]
      %v635 = vld [vmem:[%s613 + $0x54] sm:$0xf]
      %v636 = vld [vmem:[%s613 + $0x58] sm:$0xf]
      %v637 = vld [vmem:[%s613 + $0x5c] sm:$0xf]
      %v638 = vld [vmem:[%s613 + $0x60] sm:$0xf]
      %v639 = vld [vmem:[%s613 + $0x64] sm:$0xf]
      %v640 = vld [vmem:[%s613 + $0x68] sm:$0xf]
      %v641 = vld [vmem:[%s613 + $0x6c] sm:$0xf]
      %v642 = vld [vmem:[%s613 + $0x70] sm:$0xf]
      %v643 = vld [vmem:[%s613 + $0x74] sm:$0xf]
      %v644 = vld [vmem:[%s613 + $0x78] sm:$0xf]
      %v645 = vld [vmem:[%s613 + $0x7c] sm:$0xf]
      %v648 = vunpack.c.l.b16 %v611
      %v649 = vunpack.c.h.b16 %v611
      %v650 = vunpack.c.l.b16 %v612
      %v651 = vunpack.c.h.b16 %v612
      %v652 = vpack.c.b16 %v650, %v648
      %v653 = vpack.c.b16 %v651, %v649
      %v688 = vunpack.c.l.b16 %v614
      %v689 = vunpack.c.l.b16 %v615
      %v690 = vunpack.c.l.b16 %v616
      %v691 = vunpack.c.l.b16 %v617
      %v692 = vunpack.c.l.b16 %v618
      %v693 = vunpack.c.l.b16 %v619
      %v694 = vunpack.c.l.b16 %v620
      %v695 = vunpack.c.l.b16 %v621
      %v696 = vunpack.c.l.b16 %v622
      %v697 = vunpack.c.l.b16 %v623
      %v698 = vunpack.c.l.b16 %v624
      %v699 = vunpack.c.l.b16 %v625
      %v700 = vunpack.c.l.b16 %v626
      %v701 = vunpack.c.l.b16 %v627
      %v702 = vunpack.c.l.b16 %v628
      %v703 = vunpack.c.l.b16 %v629
      %v704 = vunpack.c.l.b16 %v630
      %v705 = vunpack.c.l.b16 %v631
      %v706 = vunpack.c.l.b16 %v632
      %v707 = vunpack.c.l.b16 %v633
      %v708 = vunpack.c.l.b16 %v634
      %v709 = vunpack.c.l.b16 %v635
      %v710 = vunpack.c.l.b16 %v636
      %v711 = vunpack.c.l.b16 %v637
      %v712 = vunpack.c.l.b16 %v638
      %v713 = vunpack.c.l.b16 %v639
      %v714 = vunpack.c.l.b16 %v640
      %v715 = vunpack.c.l.b16 %v641
      %v716 = vunpack.c.l.b16 %v642
      %v717 = vunpack.c.l.b16 %v643
      %v718 = vunpack.c.l.b16 %v644
      %v719 = vunpack.c.l.b16 %v645
      %v720 = vpack.c.b16 %v689, %v688
      %v721 = vpack.c.b16 %v691, %v690
      %v722 = vpack.c.b16 %v693, %v692
      %v723 = vpack.c.b16 %v695, %v694
      %v724 = vpack.c.b16 %v697, %v696
      %v725 = vpack.c.b16 %v699, %v698
      %v726 = vpack.c.b16 %v701, %v700
      %v727 = vpack.c.b16 %v703, %v702
      %v728 = vpack.c.b16 %v705, %v704
      %v729 = vpack.c.b16 %v707, %v706
      %v730 = vpack.c.b16 %v709, %v708
      %v731 = vpack.c.b16 %v711, %v710
      %v732 = vpack.c.b16 %v713, %v712
      %v733 = vpack.c.b16 %v715, %v714
      %v734 = vpack.c.b16 %v717, %v716
      %v735 = vpack.c.b16 %v719, %v718
      %752 = vmatprep.subr.bf16.mxu0 0
      %753 = vmatpush1.bf16.msra.mxu0 %v727
      %754 = vmatprep.subr.bf16.mxu0 0
      %755 = vmatpush1.bf16.msra.mxu0 %v726
      %756 = vmatprep.subr.bf16.mxu0 0
      %757 = vmatpush1.bf16.msra.mxu0 %v725
      %758 = vmatprep.subr.bf16.mxu0 0
      %759 = vmatpush1.bf16.msra.mxu0 %v724
      %760 = vmatprep.subr.bf16.mxu0 0
      %761 = vmatpush1.bf16.msra.mxu0 %v723
      %762 = vmatprep.subr.bf16.mxu0 0
      %763 = vmatpush1.bf16.msra.mxu0 %v722
      %764 = vmatprep.subr.bf16.mxu0 0
      %765 = vmatpush1.bf16.msra.mxu0 %v721
      %766 = vmatprep.subr.bf16.mxu0 0
      %767 = vmatpush1.bf16.msra.mxu0 %v720
      %768 = vmatprep.subr.bf16.mxu0 0
      %769 = vmatpush2.bf16.msra.mxu0 %v735
      %770 = vmatprep.subr.bf16.mxu0 0
      %771 = vmatpush2.bf16.msra.mxu0 %v734
      %772 = vmatprep.subr.bf16.mxu0 0
      %773 = vmatpush2.bf16.msra.mxu0 %v733
      %774 = vmatprep.subr.bf16.mxu0 0
      %775 = vmatpush2.bf16.msra.mxu0 %v732
      %776 = vmatprep.subr.bf16.mxu0 0
      %777 = vmatpush2.bf16.msra.mxu0 %v731
      %778 = vmatprep.subr.bf16.mxu0 0
      %779 = vmatpush2.bf16.msra.mxu0 %v730
      %780 = vmatprep.subr.bf16.mxu0 0
      %781 = vmatpush2.bf16.msra.mxu0 %v729
      %782 = vmatprep.subr.bf16.mxu0 0
      %783 = vmatpush2.bf16.msra.mxu0 %v728
      %784 = vmatprep.mubr.bf16.mxu0 %v653
      %785 = vmatmul.mubr.bf16.gmra.mxu0 %v652
      %v786 = vpop.f32.mrf.mxu0
      %v787 = vadd.f32 0.0, %v786
      %v788 = vpop.f32.mrf.mxu0
      %v789 = vpop.f32.mrf.mxu0
      %v790 = vadd.f32 0.0, %v789
      %v791 = vpop.f32.mrf.mxu0
      %792 = vdwg.mxu0
      %v793 = vld [vmem:[#allocation2] sm:$0xff]
      %v794 = vld [vmem:[#allocation2 + $0x8] sm:$0xff]
      %v795 = vadd.f32 %v793, %v787
      %v796 = vadd.f32 %v794, %v790
      %797 = vst [vmem:[#allocation2] sm:$0xff] %v795
      %798 = vst [vmem:[#allocation2 + $0x8] sm:$0xff] %v796
      %s799 = sadd.s32 %s222, 48
      %s800 = sshra.s32 %s799, 3
      %s801 = sand.u32 %s799, 7
      %s802 = smul.u32 %s800, 2
      %s803 = smul.addr %s802, 4
      %s804 = scalar_lea.vmem %s210, %s803
      %v805 = vld [vmem:[%s804] sm:$0xff]
      %v806 = vld [vmem:[%s804 + $0x8] sm:$0xff]
      %s807 = scalar_lea.vmem %s1, 384
      %v808 = vld [vmem:[%s807] sm:$0xf]
      %v809 = vld [vmem:[%s807 + $0x4] sm:$0xf]
      %v810 = vld [vmem:[%s807 + $0x8] sm:$0xf]
      %v811 = vld [vmem:[%s807 + $0xc] sm:$0xf]
      %v812 = vld [vmem:[%s807 + $0x10] sm:$0xf]
      %v813 = vld [vmem:[%s807 + $0x14] sm:$0xf]
      %v814 = vld [vmem:[%s807 + $0x18] sm:$0xf]
      %v815 = vld [vmem:[%s807 + $0x1c] sm:$0xf]
      %v816 = vld [vmem:[%s807 + $0x20] sm:$0xf]
      %v817 = vld [vmem:[%s807 + $0x24] sm:$0xf]
      %v818 = vld [vmem:[%s807 + $0x28] sm:$0xf]
      %v819 = vld [vmem:[%s807 + $0x2c] sm:$0xf]
      %v820 = vld [vmem:[%s807 + $0x30] sm:$0xf]
      %v821 = vld [vmem:[%s807 + $0x34] sm:$0xf]
      %v822 = vld [vmem:[%s807 + $0x38] sm:$0xf]
      %v823 = vld [vmem:[%s807 + $0x3c] sm:$0xf]
      %v824 = vld [vmem:[%s807 + $0x40] sm:$0xf]
      %v825 = vld [vmem:[%s807 + $0x44] sm:$0xf]
      %v826 = vld [vmem:[%s807 + $0x48] sm:$0xf]
      %v827 = vld [vmem:[%s807 + $0x4c] sm:$0xf]
      %v828 = vld [vmem:[%s807 + $0x50] sm:$0xf]
      %v829 = vld [vmem:[%s807 + $0x54] sm:$0xf]
      %v830 = vld [vmem:[%s807 + $0x58] sm:$0xf]
      %v831 = vld [vmem:[%s807 + $0x5c] sm:$0xf]
      %v832 = vld [vmem:[%s807 + $0x60] sm:$0xf]
      %v833 = vld [vmem:[%s807 + $0x64] sm:$0xf]
      %v834 = vld [vmem:[%s807 + $0x68] sm:$0xf]
      %v835 = vld [vmem:[%s807 + $0x6c] sm:$0xf]
      %v836 = vld [vmem:[%s807 + $0x70] sm:$0xf]
      %v837 = vld [vmem:[%s807 + $0x74] sm:$0xf]
      %v838 = vld [vmem:[%s807 + $0x78] sm:$0xf]
      %v839 = vld [vmem:[%s807 + $0x7c] sm:$0xf]
      %v842 = vunpack.c.l.b16 %v805
      %v843 = vunpack.c.h.b16 %v805
      %v844 = vunpack.c.l.b16 %v806
      %v845 = vunpack.c.h.b16 %v806
      %v846 = vpack.c.b16 %v844, %v842
      %v847 = vpack.c.b16 %v845, %v843
      %v882 = vunpack.c.l.b16 %v808
      %v883 = vunpack.c.l.b16 %v809
      %v884 = vunpack.c.l.b16 %v810
      %v885 = vunpack.c.l.b16 %v811
      %v886 = vunpack.c.l.b16 %v812
      %v887 = vunpack.c.l.b16 %v813
      %v888 = vunpack.c.l.b16 %v814
      %v889 = vunpack.c.l.b16 %v815
      %v890 = vunpack.c.l.b16 %v816
      %v891 = vunpack.c.l.b16 %v817
      %v892 = vunpack.c.l.b16 %v818
      %v893 = vunpack.c.l.b16 %v819
      %v894 = vunpack.c.l.b16 %v820
      %v895 = vunpack.c.l.b16 %v821
      %v896 = vunpack.c.l.b16 %v822
      %v897 = vunpack.c.l.b16 %v823
      %v898 = vunpack.c.l.b16 %v824
      %v899 = vunpack.c.l.b16 %v825
      %v900 = vunpack.c.l.b16 %v826
      %v901 = vunpack.c.l.b16 %v827
      %v902 = vunpack.c.l.b16 %v828
      %v903 = vunpack.c.l.b16 %v829
      %v904 = vunpack.c.l.b16 %v830
      %v905 = vunpack.c.l.b16 %v831
      %v906 = vunpack.c.l.b16 %v832
      %v907 = vunpack.c.l.b16 %v833
      %v908 = vunpack.c.l.b16 %v834
      %v909 = vunpack.c.l.b16 %v835
      %v910 = vunpack.c.l.b16 %v836
      %v911 = vunpack.c.l.b16 %v837
      %v912 = vunpack.c.l.b16 %v838
      %v913 = vunpack.c.l.b16 %v839
      %v914 = vpack.c.b16 %v883, %v882
      %v915 = vpack.c.b16 %v885, %v884
      %v916 = vpack.c.b16 %v887, %v886
      %v917 = vpack.c.b16 %v889, %v888
      %v918 = vpack.c.b16 %v891, %v890
      %v919 = vpack.c.b16 %v893, %v892
      %v920 = vpack.c.b16 %v895, %v894
      %v921 = vpack.c.b16 %v897, %v896
      %v922 = vpack.c.b16 %v899, %v898
      %v923 = vpack.c.b16 %v901, %v900
      %v924 = vpack.c.b16 %v903, %v902
      %v925 = vpack.c.b16 %v905, %v904
      %v926 = vpack.c.b16 %v907, %v906
      %v927 = vpack.c.b16 %v909, %v908
      %v928 = vpack.c.b16 %v911, %v910
      %v929 = vpack.c.b16 %v913, %v912
      %946 = vmatprep.subr.bf16.mxu0 0
      %947 = vmatpush1.bf16.msra.mxu0 %v921
      %948 = vmatprep.subr.bf16.mxu0 0
      %949 = vmatpush1.bf16.msra.mxu0 %v920
      %950 = vmatprep.subr.bf16.mxu0 0
      %951 = vmatpush1.bf16.msra.mxu0 %v919
      %952 = vmatprep.subr.bf16.mxu0 0
      %953 = vmatpush1.bf16.msra.mxu0 %v918
      %954 = vmatprep.subr.bf16.mxu0 0
      %955 = vmatpush1.bf16.msra.mxu0 %v917
      %956 = vmatprep.subr.bf16.mxu0 0
      %957 = vmatpush1.bf16.msra.mxu0 %v916
      %958 = vmatprep.subr.bf16.mxu0 0
      %959 = vmatpush1.bf16.msra.mxu0 %v915
      %960 = vmatprep.subr.bf16.mxu0 0
      %961 = vmatpush1.bf16.msra.mxu0 %v914
      %962 = vmatprep.subr.bf16.mxu0 0
      %963 = vmatpush2.bf16.msra.mxu0 %v929
      %964 = vmatprep.subr.bf16.mxu0 0
      %965 = vmatpush2.bf16.msra.mxu0 %v928
      %966 = vmatprep.subr.bf16.mxu0 0
      %967 = vmatpush2.bf16.msra.mxu0 %v927
      %968 = vmatprep.subr.bf16.mxu0 0
      %969 = vmatpush2.bf16.msra.mxu0 %v926
      %970 = vmatprep.subr.bf16.mxu0 0
      %971 = vmatpush2.bf16.msra.mxu0 %v925
      %972 = vmatprep.subr.bf16.mxu0 0
      %973 = vmatpush2.bf16.msra.mxu0 %v924
      %974 = vmatprep.subr.bf16.mxu0 0
      %975 = vmatpush2.bf16.msra.mxu0 %v923
      %976 = vmatprep.subr.bf16.mxu0 0
      %977 = vmatpush2.bf16.msra.mxu0 %v922
      %978 = vmatprep.mubr.bf16.mxu0 %v847
      %979 = vmatmul.mubr.bf16.gmra.mxu0 %v846
      %v980 = vpop.f32.mrf.mxu0
      %v981 = vadd.f32 0.0, %v980
      %v982 = vpop.f32.mrf.mxu0
      %v983 = vpop.f32.mrf.mxu0
      %v984 = vadd.f32 0.0, %v983
      %v985 = vpop.f32.mrf.mxu0
      %986 = vdwg.mxu0
      %v987 = vld [vmem:[#allocation2] sm:$0xff]
      %v988 = vld [vmem:[#allocation2 + $0x8] sm:$0xff]
      %v989 = vadd.f32 %v987, %v981
      %v990 = vadd.f32 %v988, %v984
      %991 = vst [vmem:[#allocation2] sm:$0xff] %v989
      %992 = vst [vmem:[#allocation2 + $0x8] sm:$0xff] %v990
      %v993 = vld [vmem:[#allocation2] sm:$0xff]
      %v994 = vld [vmem:[#allocation2 + $0x8] sm:$0xff]
      %v995 = vld [vmem:[%s2] sm:$0x1]
      %v997 = vlaneseq
      %v998 = vshrl.u32 %v997, 7
      %v999 = vsub.s32 0, %v998
      %v1000 = vrot.slane %v995, %v999
      %v1002 = vmul.f32 %v993, %v1000
      %v1003 = vmul.f32 %v994, %v1000
      %v1004 = vld [vmem:[%s3] sm:$0x1]
      %v1006 = vlaneseq
      %v1007 = vshrl.u32 %v1006, 7
      %v1008 = vsub.s32 0, %v1007
      %v1009 = vrot.slane %v1004, %v1008
      %v1011 = vadd.f32 %v1002, %v1009
      %v1012 = vadd.f32 %v1003, %v1009
      %vm1013 = vcmask 64512
      %1014 = vst.msk [vmem:[%s219] sm:$0xff] %vm1013, %v1011
      %1015 = vst.msk [vmem:[%s219 + $0x8] sm:$0xff] %vm1013, %v1012
      %s1016 = smul.u32 2, %s20
      %p1017 = scmp.lt.s32.totalorder %s19, 1
      %s1018 = scalar_select %p1017, %s19, 1
      %p1019 = scmp.lt.s32.totalorder %s1016, 3
      %s1020 = scalar_select %p1019, %s1016, 3
      %s1021 = smul.addr %s1018, 4
      %s1022 = sadd.s32 %s1020, %s1021
      %s1023 = smul.addr %s1022, 8
      %s1024 = scalar_lea.vmem %s4, %s1023
      // Predicated region
      $region37: #{_lambda_.9} parent=35 // pred_check
        %p1025 = pneg %p136
      $region38: #{_lambda_.9} parent=35 // pred_check_branch
        %1027 = sbr.rel (%p1025) target = $region40
      $region39: #{_lambda_.9} parent=35 // pred_region
        %s1028 = smul.u32 2, %s20
      $region40: #{_lambda_.9} parent=35 // pred_fallthru
        _
    $region36: #{_lambda_.9} parent=5 // pred_fallthru
      _
    %p1029 = scmp.le.s32.totalorder 2, %s10
    // Predicated region
    $region41: #{_lambda_.9} parent=5 // pred_check
      %p1030 = pneg %p1029
    $region42: #{_lambda_.9} parent=5 // pred_check_branch
      %1032 = sbr.rel (%p1030) target = $region44
    $region43: #{_lambda_.9} parent=5 // pred_region
      %s1033 = ssub.s32 %s10, 2
      // Predicated region
      $region45: #{_lambda_.9} parent=43 // pred_check
        %p1034 = pneg %p142
      $region46: #{_lambda_.9} parent=43 // pred_check_branch
        %1036 = sbr.rel (%p1034) target = $region48
      $region47: #{_lambda_.9} parent=43 // pred_region
        %s1037 = smul.u32 2, %s22
        %p1038 = scmp.lt.s32.totalorder %s21, 1
        %s1039 = scalar_select %p1038, %s21, 1
        %p1040 = scmp.lt.s32.totalorder %s1037, 3
        %s1041 = scalar_select %p1040, %s1037, 3
        %s1042 = smul.addr %s1039, 4
        %s1043 = sadd.s32 %s1041, %s1042
        %s1044 = smul.addr %s1043, 8
        %s1045 = scalar_lea.vmem %s4, %s1044
      $region48: #{_lambda_.9} parent=43 // pred_fallthru
        _
    $region44: #{_lambda_.9} parent=5 // pred_fallthru
      _
  $region6: #{_lambda_.9} parent=0 // loop_footer
    %s14 = sadd.s32 1, %s10
  $region7: #{_lambda_.9} parent=0 // loop_footer_branch
    %9 = sbr.rel target = $region3
  $region8: #{_lambda_.9} parent=0 // loop_exit
    _

</llo_original>
